<compile_context>
chip_gen: v7x
topology: tpu7x:2x2x1
jax: 0.10.0
libtpu: 0.0.40
codegen_flags: <defaults>
</compile_context>

<pallas_src>
import functools

import jax
import jax.numpy as jnp
from jax.experimental import pallas as pl
from jax.experimental.pallas import tpu as pltpu

EPS = 1e-5
LANE = 128
MXU_DTYPE = jnp.bfloat16            # MXU input dtype (accumulation stays f32)
VMEM_LIMIT = 48 * 1024 * 1024       # explicit scoped-VMEM limit, v5e/v6e/v7x safe
TM = 1024                           # preferred M tile (rows)
TK = 2048                           # preferred K tile (contraction)

# centre tap FIRST so the fused 1x1-shortcut matmul can read columns [0, Cin_p)
TAP_ORDER = ((1, 1), (0, 0), (0, 1), (0, 2), (1, 0), (1, 2), (2, 0), (2, 1), (2, 2))
assert TAP_ORDER[0] == (1, 1)


# ------------------------------- small helpers ------------------------------ #

def _round_up(x, m):
    return ((x + m - 1) // m) * m


def _pick_m_tile(M, pref=TM):
    """M tile aligned to 16 (bf16 sublane packing); >=2 blocks when possible."""
    m16 = _round_up(M, 16)
    tm = min(pref, m16)
    Mp = _round_up(m16, tm)
    # give the parallel M axis at least two blocks (megacore / v7x's 2 TCs)
    if Mp == tm and tm >= 32 and (tm // 2) % 16 == 0:
        tm //= 2
    return tm, Mp


def _pick_k_tile(K, pref=TK):
    """Largest tap-aligned divisor of K (= 9*Cin_p) not exceeding `pref`."""
    cands = [K] + ([K // 3, K // 9] if K % 9 == 0 else [])
    for c in cands:
        if c <= pref:
            return c
    return cands[-1]


# ------------------------------ Pallas kernels ------------------------------ #

def _conv1_kernel(a_ref, w_ref, scale_ref, bias_ref, o_ref, acc_ref):
    """Tiled matmul with fused BN2(scale/bias)+ReLU epilogue."""
    k = pl.program_id(1)

    @pl.when(k == 0)
    def _():
        acc_ref[...] = jnp.zeros_like(acc_ref)

    acc_ref[...] += jnp.dot(a_ref[...], w_ref[...],
                            preferred_element_type=jnp.float32)

    @pl.when(k == pl.num_programs(1) - 1)
    def _():
        y = jnp.maximum(acc_ref[...] * scale_ref[...] + bias_ref[...], 0.0)
        o_ref[...] = y.astype(o_ref.dtype)


def _conv1_sc_kernel(cin_p, a_ref, w_ref, scale_ref, bias_ref, wsc_ref,
                     o_ref, osc_ref, acc_ref):
    """Conv1 matmul + BN2/ReLU epilogue, plus a fused 1x1-shortcut output
    computed from the centre-tap K slice (columns [0, cin_p)) of the A tile."""
    k = pl.program_id(1)

    @pl.when(k == 0)
    def _():
        acc_ref[...] = jnp.zeros_like(acc_ref)
        osc_ref[...] = jnp.dot(a_ref[:, :cin_p], wsc_ref[...],
                               preferred_element_type=jnp.float32
                               ).astype(osc_ref.dtype)

    acc_ref[...] += jnp.dot(a_ref[...], w_ref[...],
                            preferred_element_type=jnp.float32)

    @pl.when(k == pl.num_programs(1) - 1)
    def _():
        y = jnp.maximum(acc_ref[...] * scale_ref[...] + bias_ref[...], 0.0)
        o_ref[...] = y.astype(o_ref.dtype)


def _conv2_kernel(a_ref, w_ref, r_ref, o_ref, acc_ref):
    """Tiled matmul with fused residual-add epilogue."""
    k = pl.program_id(1)

    @pl.when(k == 0)
    def _():
        acc_ref[...] = jnp.zeros_like(acc_ref)

    acc_ref[...] += jnp.dot(a_ref[...], w_ref[...],
                            preferred_element_type=jnp.float32)

    @pl.when(k == pl.num_programs(1) - 1)
    def _():
        o_ref[...] = (acc_ref[...] + r_ref[...].astype(jnp.float32)
                      ).astype(o_ref.dtype)


def conv_matmul(a, w, *, scale=None, bias=None, residual=None,
                w_sc=None, cin_p=None, out_dtype=MXU_DTYPE):
    """A (M,K) @ W (K,Np) on the MXU with a fused epilogue.

    Variants:
      * scale/bias          -> relu(acc*scale + bias) epilogue        (conv1)
      * scale/bias + w_sc   -> additionally a 2nd output A[:, :cin_p] @ w_sc
                               (fused 1x1 shortcut from the centre tap)
      * residual            -> acc + residual epilogue                (conv2)

    K and Np must already be lane-padded (multiples of 128).  The weight is
    kept fully N-resident (tn = Np, no j grid axis); grid = (M tiles, K tiles).
    """
    M, K = a.shape
    K2, Np = w.shape
    assert K == K2 and K % LANE == 0 and Np % LANE == 0

    tm, Mp = _pick_m_tile(M)
    tk = _pick_k_tile(K)
    if w_sc is not None:
        assert cin_p is not None and tk >= cin_p   # centre tap lives in K tile 0

    a_p = a if Mp == M else jnp.pad(a, ((0, Mp - M), (0, 0)))

    in_specs = [pl.BlockSpec((tm, tk), lambda i, k: (i, k)),
                pl.BlockSpec((tk, Np), lambda i, k: (k, 0))]
    args = [a_p, w]
    out_spec = pl.BlockSpec((tm, Np), lambda i, k: (i, 0))

    if scale is not None:
        in_specs += [pl.BlockSpec((1, Np), lambda i, k: (0, 0)),
                     pl.BlockSpec((1, Np), lambda i, k: (0, 0))]
        args += [scale.reshape(1, Np).astype(jnp.float32),
                 bias.reshape(1, Np).astype(jnp.float32)]
        if w_sc is not None:
            in_specs += [pl.BlockSpec((cin_p, Np), lambda i, k: (0, 0))]
            args += [w_sc]
            kernel = functools.partial(_conv1_sc_kernel, cin_p)
            out_shape = (jax.ShapeDtypeStruct((Mp, Np), out_dtype),
                         jax.ShapeDtypeStruct((Mp, Np), out_dtype))
            out_specs = (out_spec, pl.BlockSpec((tm, Np), lambda i, k: (i, 0)))
        else:
            kernel = _conv1_kernel
            out_shape = jax.ShapeDtypeStruct((Mp, Np), out_dtype)
            out_specs = out_spec
    else:
        assert residual is not None
        rM = residual.shape[0]
        r_p = residual if Mp == rM else jnp.pad(residual, ((0, Mp - rM), (0, 0)))
        in_specs += [pl.BlockSpec((tm, Np), lambda i, k: (i, 0))]
        args += [r_p]
        kernel = _conv2_kernel
        out_shape = jax.ShapeDtypeStruct((Mp, Np), out_dtype)
        out_specs = out_spec

    return pl.pallas_call(
        kernel,
        out_shape=out_shape,
        grid_spec=pltpu.PrefetchScalarGridSpec(
            num_scalar_prefetch=0,
            grid=(Mp // tm, K // tk),
            in_specs=in_specs,
            out_specs=out_specs,
            scratch_shapes=[pltpu.VMEM((tm, Np), jnp.float32)]),
        compiler_params=pltpu.CompilerParams(
            dimension_semantics=("parallel", "arbitrary"),
            vmem_limit_bytes=VMEM_LIMIT),
    )(*args)


# ------------------------------ conv plumbing ------------------------------- #

def build_patches(act, stride, pad, *, scale=None, bias=None):
    """3x3 im2col produced directly in bf16, centre-tap-first column order.

    BN+ReLU (per input channel) is folded into the producer (XLA fuses it with
    the pad/slice/concat/cast), so the post-BN activation never hits HBM as a
    separate tensor and the spatial halo is exactly zero *after* the ReLU.
    `act` carries lane-padded channels (Cp multiple of 128), so K = 9*Cp needs
    no further padding.  Returns (patches (M, 9*Cp) bf16, (N, Ho, Wo)).
    """
    N, H, W, Cp = act.shape
    if scale is not None:
        act = jnp.maximum(act * scale + bias, 0.0)
    act = act.astype(MXU_DTYPE)
    xp = jnp.pad(act, ((0, 0), (pad, pad), (pad, pad), (0, 0)))
    Ho = (H + 2 * pad - 3) // stride + 1
    Wo = (W + 2 * pad - 3) // stride + 1
    cols = [xp[:, ky:ky + (Ho - 1) * stride + 1:stride,
               kx:kx + (Wo - 1) * stride + 1:stride, :]
            for (ky, kx) in TAP_ORDER]
    patches = jnp.concatenate(cols, axis=-1)          # (N, Ho, Wo, 9*Cp) bf16
    return patches.reshape(N * Ho * Wo, 9 * Cp), (N, Ho, Wo)


def flatten_conv3x3_weight(w_oihw, cin_p, cout_p):
    """OIHW 3x3 weight -> (9*cin_p, cout_p) bf16 matrix in TAP_ORDER."""
    cout, cin, kh, kw = w_oihw.shape
    assert (kh, kw) == (3, 3)
    w = jnp.transpose(w_oihw, (2, 3, 1, 0))                       # (3,3,Cin,Cout)
    w = jnp.pad(w, ((0, 0), (0, 0), (0, cin_p - cin), (0, cout_p - cout)))
    w = jnp.stack([w[ky, kx] for ky, kx in TAP_ORDER], axis=0)    # (9,cin_p,cout_p)
    return w.reshape(9 * cin_p, cout_p).astype(MXU_DTYPE)


# --------------------------- BasicBlock / NetworkBlock ----------------------- #

def basic_block_forward(x_pad, p, equal_in_out, stride):
    """WideResNet BasicBlock forward (drop_rate == 0), channel-padded layout."""
    N, H, W, cin_p = x_pad.shape
    cout_p = p["conv1_wm"].shape[1]

    # conv1 (3x3, stride): bn1+relu folded into the bf16 patch producer,
    # bn2+relu fused into the matmul epilogue; the 1x1 shortcut conv is fused
    # as a second output from the centre-tap K slice when in/out planes differ.
    patches1, (Nb, Ho, Wo) = build_patches(
        x_pad, stride, 1, scale=p["bn1_scale"], bias=p["bn1_bias"])
    M = Nb * Ho * Wo

    if equal_in_out:
        out1 = conv_matmul(patches1, p["conv1_wm"],
                           scale=p["bn2_scale"], bias=p["bn2_bias"],
                           out_dtype=MXU_DTYPE)[:M]
        shortcut = x_pad.reshape(N * H * W, cin_p)        # identity (f32)
    else:
        out1, shortcut = conv_matmul(patches1, p["conv1_wm"],
                                     scale=p["bn2_scale"], bias=p["bn2_bias"],
                                     w_sc=p["conv_sc_wm"], cin_p=cin_p,
                                     out_dtype=MXU_DTYPE)
        out1, shortcut = out1[:M], shortcut[:M]

    # drop_rate == 0.0 -> F.dropout is the identity.
    # TODO(synk): in-kernel stochastic dropout (drop_rate > 0, training mode).

    # conv2 (3x3, stride 1) with the residual add fused into the epilogue.
    patches2, _ = build_patches(out1.reshape(Nb, Ho, Wo, cout_p), 1, 1)
    y = conv_matmul(patches2, p["conv2_wm"], residual=shortcut,
                    out_dtype=jnp.float32)[:M]
    return y.reshape(Nb, Ho, Wo, cout_p)


def network_block_forward(x_pad, kparams, configs):
    for p, (equal, stride) in zip(kparams, configs):
        x_pad = basic_block_forward(x_pad, p, equal, stride)
    return x_pad


def network_block_apply(x_nchw, kparams, configs, out_planes):
    """PyTorch-facing wrapper: NCHW in/out, pad/unpad channels once."""
    x = jnp.transpose(x_nchw, (0, 2, 3, 1)).astype(jnp.float32)
    cin = x.shape[-1]
    cin_p = _round_up(cin, LANE)
    if cin_p != cin:
        x = jnp.pad(x, ((0, 0), (0, 0), (0, 0), (0, cin_p - cin)))
    y = network_block_forward(x, kparams, configs)
    return jnp.transpose(y[..., :out_planes], (0, 3, 1, 2))


# ------------------------------- param init ---------------------------------- #

def init_bn_params(key, C):
    k1, k2, k3, k4 = jax.random.split(key, 4)
    gamma = 1.0 + 0.1 * jax.random.normal(k1, (C,), jnp.float32)
    beta = 0.1 * jax.random.normal(k2, (C,), jnp.float32)
    running_mean = 0.1 * jax.random.normal(k3, (C,), jnp.float32)
    running_var = 1.0 + 0.1 * jax.random.uniform(k4, (C,), jnp.float32)
    scale = gamma / jnp.sqrt(running_var + EPS)
    bias = beta - running_mean * scale
    return scale, bias


def init_network_block_params(key, nb_layers, in_planes, out_planes, stride):
    params, configs = [], []
    for i in range(nb_layers):
        cin = in_planes if i == 0 else out_planes
        s = stride if i == 0 else 1
        equal = (cin == out_planes)
        k = jax.random.fold_in(key, i)
        k1, k2, k3, k4, k5 = jax.random.split(k, 5)
        p = {
            "conv1_w": 0.1 * jax.random.normal(k1, (out_planes, cin, 3, 3), jnp.float32),
            "conv2_w": 0.1 * jax.random.normal(k2, (out_planes, out_planes, 3, 3), jnp.float32),
        }
        p["bn1_scale"], p["bn1_bias"] = init_bn_params(k3, cin)
        p["bn2_scale"], p["bn2_bias"] = init_bn_params(k4, out_planes)
        if not equal:
            p["conv_sc_w"] = 0.1 * jax.random.normal(k5, (out_planes, cin, 1, 1), jnp.float32)
        params.append(p)
        configs.append((equal, s))
    return tuple(params), tuple(configs)


def prepare_block_params(p, equal):
    """Convert PyTorch-layout params to kernel layout (padded, flattened, bf16)."""
    cout, cin = p["conv1_w"].shape[:2]
    cin_p, cout_p = _round_up(cin, LANE), _round_up(cout, LANE)
    pad1 = lambda v, n: jnp.pad(v.astype(jnp.float32), (0, n - v.shape[0]))
    kp = {
        "conv1_wm": flatten_conv3x3_weight(p["conv1_w"], cin_p, cout_p),
        "conv2_wm": flatten_conv3x3_weight(p["conv2_w"], cout_p, cout_p),
        "bn1_scale": pad1(p["bn1_scale"], cin_p),
        "bn1_bias": pad1(p["bn1_bias"], cin_p),
        "bn2_scale": pad1(p["bn2_scale"], cout_p),
        "bn2_bias": pad1(p["bn2_bias"], cout_p),
    }
    if not equal:
        wsc = jnp.transpose(p["conv_sc_w"][:, :, 0, 0])           # (Cin, Cout)
        kp["conv_sc_wm"] = jnp.pad(
            wsc, ((0, cin_p - cin), (0, cout_p - cout))).astype(MXU_DTYPE)
    return kp


# ----------------------------- pure-JAX reference ----------------------------- #
# Numerics-matched: bf16 conv operands, f32 accumulation, bf16 intermediates.

def _conv_ref(x_nhwc, w_oihw, stride, pad):
    w_hwio = jnp.transpose(w_oihw, (2, 3, 1, 0))
    return jax.lax.conv_general_dilated(
        x_nhwc.astype(MXU_DTYPE), w_hwio.astype(MXU_DTYPE),
        (stride, stride), [(pad, pad), (pad, pad)],
        dimension_numbers=("NHWC", "HWIO", "NHWC"),
        preferred_element_type=jnp.float32)


def _block_ref(x, p, equal, stride):
    act = jnp.maximum(x * p["bn1_scale"] + p["bn1_bias"], 0.0)
    out = _conv_ref(act, p["conv1_w"], stride, 1)
    out = jnp.maximum(out * p["bn2_scale"] + p["bn2_bias"], 0.0).astype(MXU_DTYPE)
    out = _conv_ref(out, p["conv2_w"], 1, 1)
    if equal:
        shortcut = x
    else:
        shortcut = _conv_ref(act, p["conv_sc_w"], stride, 0)
        shortcut = shortcut.astype(MXU_DTYPE).astype(jnp.float32)
    return shortcut + out


def _network_ref_nchw(x_nchw, params, configs):
    x = jnp.transpose(x_nchw, (0, 2, 3, 1))
    for p, (equal, stride) in zip(params, configs):
        x = _block_ref(x, p, equal, stride)
    return jnp.transpose(x, (0, 3, 1, 2))


# ------------------------------------ main ------------------------------------ #

if __name__ == "__main__":
    key = jax.random.PRNGKey(0)
    k_x, k_p = jax.random.split(key)

    # NetworkBlock(nb_layers=2, in_planes=4, out_planes=8, block=BasicBlock, stride=2)
    nb_layers, in_planes, out_planes, stride = 2, 4, 8, 2
    params, configs = init_network_block_params(k_p, nb_layers, in_planes, out_planes, stride)
    kparams = tuple(prepare_block_params(p, equal)
                    for p, (equal, _) in zip(params, configs))

    # PyTorch-style NCHW input: (2, 4, 16, 16)
    x_nchw = jax.random.normal(k_x, (2, in_planes, 16, 16), jnp.float32)

    fwd = jax.jit(network_block_apply, static_argnums=(2, 3))
    y_nchw = fwd(x_nchw, kparams, configs, out_planes)
    jax.block_until_ready(y_nchw)

    # correctness check against a numerics-matched pure-JAX reference
    y_ref = jax.jit(_network_ref_nchw, static_argnums=(2,))(x_nchw, params, configs)
    assert y_nchw.shape == (2, out_planes, 8, 8)
    max_err = float(jnp.max(jnp.abs(y_nchw - y_ref)))
    assert jnp.allclose(y_nchw, y_ref, atol=2e-2, rtol=2e-2), max_err

    print("KERNEL_OK")
</pallas_src>

<mosaic_0001>
module attributes {stable_mosaic.version = 11 : i64} {
  func.func @_conv1_sc_kernel(%arg0: i32, %arg1: i32, %arg2: memref<64x1152xbf16, #tpu.memory_space<vmem>>, %arg3: memref<1152x128xbf16, #tpu.memory_space<vmem>>, %arg4: memref<1x128xf32, #tpu.memory_space<vmem>>, %arg5: memref<1x128xf32, #tpu.memory_space<vmem>>, %arg6: memref<128x128xbf16, #tpu.memory_space<vmem>>, %arg7: memref<64x128xbf16, #tpu.memory_space<vmem>>, %arg8: memref<64x128xbf16, #tpu.memory_space<vmem>>, %arg9: memref<64x128xf32, #tpu.memory_space<vmem>>) attributes {dimension_semantics = [#tpu.dimension_semantics<parallel>, #tpu.dimension_semantics<arbitrary>], iteration_bounds = array<i64: 2, 1>, scalar_prefetch = 0 : i64, scratch_operands = 1 : i64, tpu.core_type = #tpu.core_type<tc>, window_params = [{transform_indices = @transform_0, window_bounds = array<i64: 64, 1152>}, {transform_indices = @transform_1, window_bounds = array<i64: 1152, 128>}, {pipeline_mode = #tpu.pipeline_mode<synchronous>, transform_indices = @transform_2, window_bounds = array<i64: 1, 128>}, {pipeline_mode = #tpu.pipeline_mode<synchronous>, transform_indices = @transform_3, window_bounds = array<i64: 1, 128>}, {pipeline_mode = #tpu.pipeline_mode<synchronous>, transform_indices = @transform_4, window_bounds = array<i64: 128, 128>}, {transform_indices = @transform_5, window_bounds = array<i64: 64, 128>}, {transform_indices = @transform_6, window_bounds = array<i64: 64, 128>}]} {
    %c0_i32 = arith.constant 0 : i32
    %0 = arith.cmpi eq, %arg1, %c0_i32 : i32
    %1 = arith.extui %0 : i1 to i32
    %c0_i32_0 = arith.constant 0 : i32
    %2 = arith.cmpi ne, %1, %c0_i32_0 : i32
    scf.if %2 {
      %cst_10 = arith.constant 0.000000e+00 : f32
      %12 = vector.broadcast %cst_10 : f32 to vector<64x128xf32>
      %c0_11 = arith.constant 0 : index
      %c0_12 = arith.constant 0 : index
      %13 = vector.load %arg9[%c0_11, %c0_12] : memref<64x128xf32, #tpu.memory_space<vmem>>, vector<64x128xf32>
      tpu.vector_store %arg9[%c0_11, %c0_12], %12 {strides = array<i32>} : memref<64x128xf32, #tpu.memory_space<vmem>>, vector<64x128xf32>,
      %c0_13 = arith.constant 0 : index
      %c0_14 = arith.constant 0 : index
      %14 = vector.load %arg2[%c0_13, %c0_14] : memref<64x1152xbf16, #tpu.memory_space<vmem>>, vector<64x128xbf16>
      %c0_15 = arith.constant 0 : index
      %c0_16 = arith.constant 0 : index
      %15 = vector.load %arg6[%c0_15, %c0_16] : memref<128x128xbf16, #tpu.memory_space<vmem>>, vector<128x128xbf16>
      %cst_17 = arith.constant dense<0.000000e+00> : vector<64x128xf32>
      %16 = tpu.matmul %14, %15, %cst_17 {dimension_numbers = #tpu.dot_dimension_numbers<[1], [0], [0], [1], [0, 0, 1, 1], [], []>} : vector<64x128xbf16>, vector<128x128xbf16>, vector<64x128xf32> -> vector<64x128xf32>
      %17 = arith.truncf %16 : vector<64x128xf32> to vector<64x128xbf16>
      %c0_18 = arith.constant 0 : index
      %c0_19 = arith.constant 0 : index
      %18 = vector.load %arg8[%c0_18, %c0_19] : memref<64x128xbf16, #tpu.memory_space<vmem>>, vector<64x128xbf16>
      tpu.vector_store %arg8[%c0_18, %c0_19], %17 {strides = array<i32>} : memref<64x128xbf16, #tpu.memory_space<vmem>>, vector<64x128xbf16>,
    } else {
    }
    %c0 = arith.constant 0 : index
    %c0_1 = arith.constant 0 : index
    %3 = vector.load %arg9[%c0, %c0_1] : memref<64x128xf32, #tpu.memory_space<vmem>>, vector<64x128xf32>
    %c0_2 = arith.constant 0 : index
    %c0_3 = arith.constant 0 : index
    %4 = vector.load %arg2[%c0_2, %c0_3] : memref<64x1152xbf16, #tpu.memory_space<vmem>>, vector<64x1152xbf16>
    %c0_4 = arith.constant 0 : index
    %c0_5 = arith.constant 0 : index
    %5 = vector.load %arg3[%c0_4, %c0_5] : memref<1152x128xbf16, #tpu.memory_space<vmem>>, vector<1152x128xbf16>
    %cst = arith.constant dense<0.000000e+00> : vector<64x128xf32>
    %6 = tpu.matmul %4, %5, %cst {dimension_numbers = #tpu.dot_dimension_numbers<[1], [0], [0], [1], [0, 0, 1, 1], [], []>} : vector<64x1152xbf16>, vector<1152x128xbf16>, vector<64x128xf32> -> vector<64x128xf32>
    %7 = arith.addf %3, %6 : vector<64x128xf32>
    %c0_6 = arith.constant 0 : index
    %c0_7 = arith.constant 0 : index
    %8 = vector.load %arg9[%c0_6, %c0_7] : memref<64x128xf32, #tpu.memory_space<vmem>>, vector<64x128xf32>
    tpu.vector_store %arg9[%c0_6, %c0_7], %7 {strides = array<i32>} : memref<64x128xf32, #tpu.memory_space<vmem>>, vector<64x128xf32>,
    %c0_i32_8 = arith.constant 0 : i32
    %9 = arith.cmpi eq, %arg1, %c0_i32_8 : i32
    %10 = arith.extui %9 : i1 to i32
    %c0_i32_9 = arith.constant 0 : i32
    %11 = arith.cmpi ne, %10, %c0_i32_9 : i32
    scf.if %11 {
      %c0_10 = arith.constant 0 : index
      %c0_11 = arith.constant 0 : index
      %12 = vector.load %arg9[%c0_10, %c0_11] : memref<64x128xf32, #tpu.memory_space<vmem>>, vector<64x128xf32>
      %c0_12 = arith.constant 0 : index
      %c0_13 = arith.constant 0 : index
      %13 = vector.load %arg4[%c0_12, %c0_13] : memref<1x128xf32, #tpu.memory_space<vmem>>, vector<1x128xf32>
      %14 = vector.broadcast %13 : vector<1x128xf32> to vector<64x128xf32>
      %15 = arith.mulf %12, %14 : vector<64x128xf32>
      %c0_14 = arith.constant 0 : index
      %c0_15 = arith.constant 0 : index
      %16 = vector.load %arg5[%c0_14, %c0_15] : memref<1x128xf32, #tpu.memory_space<vmem>>, vector<1x128xf32>
      %17 = vector.broadcast %16 : vector<1x128xf32> to vector<64x128xf32>
      %18 = arith.addf %15, %17 : vector<64x128xf32>
      %cst_16 = arith.constant 0.000000e+00 : f32
      %19 = vector.broadcast %cst_16 : f32 to vector<64x128xf32>
      %20 = arith.maximumf %18, %19 : vector<64x128xf32>
      %21 = arith.truncf %20 : vector<64x128xf32> to vector<64x128xbf16>
      %c0_17 = arith.constant 0 : index
      %c0_18 = arith.constant 0 : index
      %22 = vector.load %arg7[%c0_17, %c0_18] : memref<64x128xbf16, #tpu.memory_space<vmem>>, vector<64x128xbf16>
      tpu.vector_store %arg7[%c0_17, %c0_18], %21 {strides = array<i32>} : memref<64x128xbf16, #tpu.memory_space<vmem>>, vector<64x128xbf16>,
    } else {
    }
    return
  }
  func.func @transform_0(%arg0: i32, %arg1: i32) -> (i32, i32) {
    %c0_i32 = arith.constant 0 : i32
    return %arg0, %arg1 : i32, i32
  }
  func.func @transform_1(%arg0: i32, %arg1: i32) -> (i32, i32) {
    %c0_i32 = arith.constant 0 : i32
    %c0_i32_0 = arith.constant 0 : i32
    return %arg1, %c0_i32 : i32, i32
  }
  func.func @transform_2(%arg0: i32, %arg1: i32) -> (i32, i32) {
    %c0_i32 = arith.constant 0 : i32
    %c0_i32_0 = arith.constant 0 : i32
    %c0_i32_1 = arith.constant 0 : i32
    return %c0_i32, %c0_i32_0 : i32, i32
  }
  func.func @transform_3(%arg0: i32, %arg1: i32) -> (i32, i32) {
    %c0_i32 = arith.constant 0 : i32
    %c0_i32_0 = arith.constant 0 : i32
    %c0_i32_1 = arith.constant 0 : i32
    return %c0_i32, %c0_i32_0 : i32, i32
  }
  func.func @transform_4(%arg0: i32, %arg1: i32) -> (i32, i32) {
    %c0_i32 = arith.constant 0 : i32
    %c0_i32_0 = arith.constant 0 : i32
    %c0_i32_1 = arith.constant 0 : i32
    return %c0_i32, %c0_i32_0 : i32, i32
  }
  func.func @transform_5(%arg0: i32, %arg1: i32) -> (i32, i32) {
    %c0_i32 = arith.constant 0 : i32
    %c0_i32_0 = arith.constant 0 : i32
    return %arg0, %c0_i32 : i32, i32
  }
  func.func @transform_6(%arg0: i32, %arg1: i32) -> (i32, i32) {
    %c0_i32 = arith.constant 0 : i32
    %c0_i32_0 = arith.constant 0 : i32
    return %arg0, %c0_i32 : i32, i32
  }
}

module attributes {stable_mosaic.version = 11 : i64} {
  func.func @_conv2_kernel(%arg0: i32, %arg1: i32, %arg2: memref<64x1152xbf16, #tpu.memory_space<vmem>>, %arg3: memref<1152x128xbf16, #tpu.memory_space<vmem>>, %arg4: memref<64x128xbf16, #tpu.memory_space<vmem>>, %arg5: memref<64x128xf32, #tpu.memory_space<vmem>>, %arg6: memref<64x128xf32, #tpu.memory_space<vmem>>) attributes {dimension_semantics = [#tpu.dimension_semantics<parallel>, #tpu.dimension_semantics<arbitrary>], iteration_bounds = array<i64: 2, 1>, scalar_prefetch = 0 : i64, scratch_operands = 1 : i64, tpu.core_type = #tpu.core_type<tc>, window_params = [{transform_indices = @transform_0, window_bounds = array<i64: 64, 1152>}, {transform_indices = @transform_1, window_bounds = array<i64: 1152, 128>}, {transform_indices = @transform_2, window_bounds = array<i64: 64, 128>}, {transform_indices = @transform_3, window_bounds = array<i64: 64, 128>}]} {
    %c0_i32 = arith.constant 0 : i32
    %0 = arith.cmpi eq, %arg1, %c0_i32 : i32
    %1 = arith.extui %0 : i1 to i32
    %c0_i32_0 = arith.constant 0 : i32
    %2 = arith.cmpi ne, %1, %c0_i32_0 : i32
    scf.if %2 {
      %cst_10 = arith.constant 0.000000e+00 : f32
      %12 = vector.broadcast %cst_10 : f32 to vector<64x128xf32>
      %c0_11 = arith.constant 0 : index
      %c0_12 = arith.constant 0 : index
      %13 = vector.load %arg6[%c0_11, %c0_12] : memref<64x128xf32, #tpu.memory_space<vmem>>, vector<64x128xf32>
      tpu.vector_store %arg6[%c0_11, %c0_12], %12 {strides = array<i32>} : memref<64x128xf32, #tpu.memory_space<vmem>>, vector<64x128xf32>,
    } else {
    }
    %c0 = arith.constant 0 : index
    %c0_1 = arith.constant 0 : index
    %3 = vector.load %arg6[%c0, %c0_1] : memref<64x128xf32, #tpu.memory_space<vmem>>, vector<64x128xf32>
    %c0_2 = arith.constant 0 : index
    %c0_3 = arith.constant 0 : index
    %4 = vector.load %arg2[%c0_2, %c0_3] : memref<64x1152xbf16, #tpu.memory_space<vmem>>, vector<64x1152xbf16>
    %c0_4 = arith.constant 0 : index
    %c0_5 = arith.constant 0 : index
    %5 = vector.load %arg3[%c0_4, %c0_5] : memref<1152x128xbf16, #tpu.memory_space<vmem>>, vector<1152x128xbf16>
    %cst = arith.constant dense<0.000000e+00> : vector<64x128xf32>
    %6 = tpu.matmul %4, %5, %cst {dimension_numbers = #tpu.dot_dimension_numbers<[1], [0], [0], [1], [0, 0, 1, 1], [], []>} : vector<64x1152xbf16>, vector<1152x128xbf16>, vector<64x128xf32> -> vector<64x128xf32>
    %7 = arith.addf %3, %6 : vector<64x128xf32>
    %c0_6 = arith.constant 0 : index
    %c0_7 = arith.constant 0 : index
    %8 = vector.load %arg6[%c0_6, %c0_7] : memref<64x128xf32, #tpu.memory_space<vmem>>, vector<64x128xf32>
    tpu.vector_store %arg6[%c0_6, %c0_7], %7 {strides = array<i32>} : memref<64x128xf32, #tpu.memory_space<vmem>>, vector<64x128xf32>,
    %c0_i32_8 = arith.constant 0 : i32
    %9 = arith.cmpi eq, %arg1, %c0_i32_8 : i32
    %10 = arith.extui %9 : i1 to i32
    %c0_i32_9 = arith.constant 0 : i32
    %11 = arith.cmpi ne, %10, %c0_i32_9 : i32
    scf.if %11 {
      %c0_10 = arith.constant 0 : index
      %c0_11 = arith.constant 0 : index
      %12 = vector.load %arg6[%c0_10, %c0_11] : memref<64x128xf32, #tpu.memory_space<vmem>>, vector<64x128xf32>
      %c0_12 = arith.constant 0 : index
      %c0_13 = arith.constant 0 : index
      %13 = vector.load %arg4[%c0_12, %c0_13] : memref<64x128xbf16, #tpu.memory_space<vmem>>, vector<64x128xbf16>
      %14 = arith.extf %13 : vector<64x128xbf16> to vector<64x128xf32>
      %15 = arith.addf %12, %14 : vector<64x128xf32>
      %c0_14 = arith.constant 0 : index
      %c0_15 = arith.constant 0 : index
      %16 = vector.load %arg5[%c0_14, %c0_15] : memref<64x128xf32, #tpu.memory_space<vmem>>, vector<64x128xf32>
      tpu.vector_store %arg5[%c0_14, %c0_15], %15 {strides = array<i32>} : memref<64x128xf32, #tpu.memory_space<vmem>>, vector<64x128xf32>,
    } else {
    }
    return
  }
  func.func @transform_0(%arg0: i32, %arg1: i32) -> (i32, i32) {
    %c0_i32 = arith.constant 0 : i32
    return %arg0, %arg1 : i32, i32
  }
  func.func @transform_1(%arg0: i32, %arg1: i32) -> (i32, i32) {
    %c0_i32 = arith.constant 0 : i32
    %c0_i32_0 = arith.constant 0 : i32
    return %arg1, %c0_i32 : i32, i32
  }
  func.func @transform_2(%arg0: i32, %arg1: i32) -> (i32, i32) {
    %c0_i32 = arith.constant 0 : i32
    %c0_i32_0 = arith.constant 0 : i32
    return %arg0, %c0_i32 : i32, i32
  }
  func.func @transform_3(%arg0: i32, %arg1: i32) -> (i32, i32) {
    %c0_i32 = arith.constant 0 : i32
    %c0_i32_0 = arith.constant 0 : i32
    return %arg0, %c0_i32 : i32, i32
  }
}

module attributes {stable_mosaic.version = 11 : i64} {
  func.func @_conv1_kernel(%arg0: i32, %arg1: i32, %arg2: memref<64x1152xbf16, #tpu.memory_space<vmem>>, %arg3: memref<1152x128xbf16, #tpu.memory_space<vmem>>, %arg4: memref<1x128xf32, #tpu.memory_space<vmem>>, %arg5: memref<1x128xf32, #tpu.memory_space<vmem>>, %arg6: memref<64x128xbf16, #tpu.memory_space<vmem>>, %arg7: memref<64x128xf32, #tpu.memory_space<vmem>>) attributes {dimension_semantics = [#tpu.dimension_semantics<parallel>, #tpu.dimension_semantics<arbitrary>], iteration_bounds = array<i64: 2, 1>, scalar_prefetch = 0 : i64, scratch_operands = 1 : i64, tpu.core_type = #tpu.core_type<tc>, window_params = [{transform_indices = @transform_0, window_bounds = array<i64: 64, 1152>}, {transform_indices = @transform_1, window_bounds = array<i64: 1152, 128>}, {pipeline_mode = #tpu.pipeline_mode<synchronous>, transform_indices = @transform_2, window_bounds = array<i64: 1, 128>}, {pipeline_mode = #tpu.pipeline_mode<synchronous>, transform_indices = @transform_3, window_bounds = array<i64: 1, 128>}, {transform_indices = @transform_4, window_bounds = array<i64: 64, 128>}]} {
    %c0_i32 = arith.constant 0 : i32
    %0 = arith.cmpi eq, %arg1, %c0_i32 : i32
    %1 = arith.extui %0 : i1 to i32
    %c0_i32_0 = arith.constant 0 : i32
    %2 = arith.cmpi ne, %1, %c0_i32_0 : i32
    scf.if %2 {
      %cst_10 = arith.constant 0.000000e+00 : f32
      %12 = vector.broadcast %cst_10 : f32 to vector<64x128xf32>
      %c0_11 = arith.constant 0 : index
      %c0_12 = arith.constant 0 : index
      %13 = vector.load %arg7[%c0_11, %c0_12] : memref<64x128xf32, #tpu.memory_space<vmem>>, vector<64x128xf32>
      tpu.vector_store %arg7[%c0_11, %c0_12], %12 {strides = array<i32>} : memref<64x128xf32, #tpu.memory_space<vmem>>, vector<64x128xf32>,
    } else {
    }
    %c0 = arith.constant 0 : index
    %c0_1 = arith.constant 0 : index
    %3 = vector.load %arg7[%c0, %c0_1] : memref<64x128xf32, #tpu.memory_space<vmem>>, vector<64x128xf32>
    %c0_2 = arith.constant 0 : index
    %c0_3 = arith.constant 0 : index
    %4 = vector.load %arg2[%c0_2, %c0_3] : memref<64x1152xbf16, #tpu.memory_space<vmem>>, vector<64x1152xbf16>
    %c0_4 = arith.constant 0 : index
    %c0_5 = arith.constant 0 : index
    %5 = vector.load %arg3[%c0_4, %c0_5] : memref<1152x128xbf16, #tpu.memory_space<vmem>>, vector<1152x128xbf16>
    %cst = arith.constant dense<0.000000e+00> : vector<64x128xf32>
    %6 = tpu.matmul %4, %5, %cst {dimension_numbers = #tpu.dot_dimension_numbers<[1], [0], [0], [1], [0, 0, 1, 1], [], []>} : vector<64x1152xbf16>, vector<1152x128xbf16>, vector<64x128xf32> -> vector<64x128xf32>
    %7 = arith.addf %3, %6 : vector<64x128xf32>
    %c0_6 = arith.constant 0 : index
    %c0_7 = arith.constant 0 : index
    %8 = vector.load %arg7[%c0_6, %c0_7] : memref<64x128xf32, #tpu.memory_space<vmem>>, vector<64x128xf32>
    tpu.vector_store %arg7[%c0_6, %c0_7], %7 {strides = array<i32>} : memref<64x128xf32, #tpu.memory_space<vmem>>, vector<64x128xf32>,
    %c0_i32_8 = arith.constant 0 : i32
    %9 = arith.cmpi eq, %arg1, %c0_i32_8 : i32
    %10 = arith.extui %9 : i1 to i32
    %c0_i32_9 = arith.constant 0 : i32
    %11 = arith.cmpi ne, %10, %c0_i32_9 : i32
    scf.if %11 {
      %c0_10 = arith.constant 0 : index
      %c0_11 = arith.constant 0 : index
      %12 = vector.load %arg7[%c0_10, %c0_11] : memref<64x128xf32, #tpu.memory_space<vmem>>, vector<64x128xf32>
      %c0_12 = arith.constant 0 : index
      %c0_13 = arith.constant 0 : index
      %13 = vector.load %arg4[%c0_12, %c0_13] : memref<1x128xf32, #tpu.memory_space<vmem>>, vector<1x128xf32>
      %14 = vector.broadcast %13 : vector<1x128xf32> to vector<64x128xf32>
      %15 = arith.mulf %12, %14 : vector<64x128xf32>
      %c0_14 = arith.constant 0 : index
      %c0_15 = arith.constant 0 : index
      %16 = vector.load %arg5[%c0_14, %c0_15] : memref<1x128xf32, #tpu.memory_space<vmem>>, vector<1x128xf32>
      %17 = vector.broadcast %16 : vector<1x128xf32> to vector<64x128xf32>
      %18 = arith.addf %15, %17 : vector<64x128xf32>
      %cst_16 = arith.constant 0.000000e+00 : f32
      %19 = vector.broadcast %cst_16 : f32 to vector<64x128xf32>
      %20 = arith.maximumf %18, %19 : vector<64x128xf32>
      %21 = arith.truncf %20 : vector<64x128xf32> to vector<64x128xbf16>
      %c0_17 = arith.constant 0 : index
      %c0_18 = arith.constant 0 : index
      %22 = vector.load %arg6[%c0_17, %c0_18] : memref<64x128xbf16, #tpu.memory_space<vmem>>, vector<64x128xbf16>
      tpu.vector_store %arg6[%c0_17, %c0_18], %21 {strides = array<i32>} : memref<64x128xbf16, #tpu.memory_space<vmem>>, vector<64x128xbf16>,
    } else {
    }
    return
  }
  func.func @transform_0(%arg0: i32, %arg1: i32) -> (i32, i32) {
    %c0_i32 = arith.constant 0 : i32
    return %arg0, %arg1 : i32, i32
  }
  func.func @transform_1(%arg0: i32, %arg1: i32) -> (i32, i32) {
    %c0_i32 = arith.constant 0 : i32
    %c0_i32_0 = arith.constant 0 : i32
    return %arg1, %c0_i32 : i32, i32
  }
  func.func @transform_2(%arg0: i32, %arg1: i32) -> (i32, i32) {
    %c0_i32 = arith.constant 0 : i32
    %c0_i32_0 = arith.constant 0 : i32
    %c0_i32_1 = arith.constant 0 : i32
    return %c0_i32, %c0_i32_0 : i32, i32
  }
  func.func @transform_3(%arg0: i32, %arg1: i32) -> (i32, i32) {
    %c0_i32 = arith.constant 0 : i32
    %c0_i32_0 = arith.constant 0 : i32
    %c0_i32_1 = arith.constant 0 : i32
    return %c0_i32, %c0_i32_0 : i32, i32
  }
  func.func @transform_4(%arg0: i32, %arg1: i32) -> (i32, i32) {
    %c0_i32 = arith.constant 0 : i32
    %c0_i32_0 = arith.constant 0 : i32
    return %arg0, %c0_i32 : i32, i32
  }
}

module attributes {stable_mosaic.version = 11 : i64} {
  func.func @_conv2_kernel(%arg0: i32, %arg1: i32, %arg2: memref<64x1152xbf16, #tpu.memory_space<vmem>>, %arg3: memref<1152x128xbf16, #tpu.memory_space<vmem>>, %arg4: memref<64x128xf32, #tpu.memory_space<vmem>>, %arg5: memref<64x128xf32, #tpu.memory_space<vmem>>, %arg6: memref<64x128xf32, #tpu.memory_space<vmem>>) attributes {dimension_semantics = [#tpu.dimension_semantics<parallel>, #tpu.dimension_semantics<arbitrary>], iteration_bounds = array<i64: 2, 1>, scalar_prefetch = 0 : i64, scratch_operands = 1 : i64, tpu.core_type = #tpu.core_type<tc>, window_params = [{transform_indices = @transform_0, window_bounds = array<i64: 64, 1152>}, {transform_indices = @transform_1, window_bounds = array<i64: 1152, 128>}, {transform_indices = @transform_2, window_bounds = array<i64: 64, 128>}, {transform_indices = @transform_3, window_bounds = array<i64: 64, 128>}]} {
    %c0_i32 = arith.constant 0 : i32
    %0 = arith.cmpi eq, %arg1, %c0_i32 : i32
    %1 = arith.extui %0 : i1 to i32
    %c0_i32_0 = arith.constant 0 : i32
    %2 = arith.cmpi ne, %1, %c0_i32_0 : i32
    scf.if %2 {
      %cst_10 = arith.constant 0.000000e+00 : f32
      %12 = vector.broadcast %cst_10 : f32 to vector<64x128xf32>
      %c0_11 = arith.constant 0 : index
      %c0_12 = arith.constant 0 : index
      %13 = vector.load %arg6[%c0_11, %c0_12] : memref<64x128xf32, #tpu.memory_space<vmem>>, vector<64x128xf32>
      tpu.vector_store %arg6[%c0_11, %c0_12], %12 {strides = array<i32>} : memref<64x128xf32, #tpu.memory_space<vmem>>, vector<64x128xf32>,
    } else {
    }
    %c0 = arith.constant 0 : index
    %c0_1 = arith.constant 0 : index
    %3 = vector.load %arg6[%c0, %c0_1] : memref<64x128xf32, #tpu.memory_space<vmem>>, vector<64x128xf32>
    %c0_2 = arith.constant 0 : index
    %c0_3 = arith.constant 0 : index
    %4 = vector.load %arg2[%c0_2, %c0_3] : memref<64x1152xbf16, #tpu.memory_space<vmem>>, vector<64x1152xbf16>
    %c0_4 = arith.constant 0 : index
    %c0_5 = arith.constant 0 : index
    %5 = vector.load %arg3[%c0_4, %c0_5] : memref<1152x128xbf16, #tpu.memory_space<vmem>>, vector<1152x128xbf16>
    %cst = arith.constant dense<0.000000e+00> : vector<64x128xf32>
    %6 = tpu.matmul %4, %5, %cst {dimension_numbers = #tpu.dot_dimension_numbers<[1], [0], [0], [1], [0, 0, 1, 1], [], []>} : vector<64x1152xbf16>, vector<1152x128xbf16>, vector<64x128xf32> -> vector<64x128xf32>
    %7 = arith.addf %3, %6 : vector<64x128xf32>
    %c0_6 = arith.constant 0 : index
    %c0_7 = arith.constant 0 : index
    %8 = vector.load %arg6[%c0_6, %c0_7] : memref<64x128xf32, #tpu.memory_space<vmem>>, vector<64x128xf32>
    tpu.vector_store %arg6[%c0_6, %c0_7], %7 {strides = array<i32>} : memref<64x128xf32, #tpu.memory_space<vmem>>, vector<64x128xf32>,
    %c0_i32_8 = arith.constant 0 : i32
    %9 = arith.cmpi eq, %arg1, %c0_i32_8 : i32
    %10 = arith.extui %9 : i1 to i32
    %c0_i32_9 = arith.constant 0 : i32
    %11 = arith.cmpi ne, %10, %c0_i32_9 : i32
    scf.if %11 {
      %c0_10 = arith.constant 0 : index
      %c0_11 = arith.constant 0 : index
      %12 = vector.load %arg6[%c0_10, %c0_11] : memref<64x128xf32, #tpu.memory_space<vmem>>, vector<64x128xf32>
      %c0_12 = arith.constant 0 : index
      %c0_13 = arith.constant 0 : index
      %13 = vector.load %arg4[%c0_12, %c0_13] : memref<64x128xf32, #tpu.memory_space<vmem>>, vector<64x128xf32>
      %14 = arith.addf %12, %13 : vector<64x128xf32>
      %c0_14 = arith.constant 0 : index
      %c0_15 = arith.constant 0 : index
      %15 = vector.load %arg5[%c0_14, %c0_15] : memref<64x128xf32, #tpu.memory_space<vmem>>, vector<64x128xf32>
      tpu.vector_store %arg5[%c0_14, %c0_15], %14 {strides = array<i32>} : memref<64x128xf32, #tpu.memory_space<vmem>>, vector<64x128xf32>,
    } else {
    }
    return
  }
  func.func @transform_0(%arg0: i32, %arg1: i32) -> (i32, i32) {
    %c0_i32 = arith.constant 0 : i32
    return %arg0, %arg1 : i32, i32
  }
  func.func @transform_1(%arg0: i32, %arg1: i32) -> (i32, i32) {
    %c0_i32 = arith.constant 0 : i32
    %c0_i32_0 = arith.constant 0 : i32
    return %arg1, %c0_i32 : i32, i32
  }
  func.func @transform_2(%arg0: i32, %arg1: i32) -> (i32, i32) {
    %c0_i32 = arith.constant 0 : i32
    %c0_i32_0 = arith.constant 0 : i32
    return %arg0, %c0_i32 : i32, i32
  }
  func.func @transform_3(%arg0: i32, %arg1: i32) -> (i32, i32) {
    %c0_i32 = arith.constant 0 : i32
    %c0_i32_0 = arith.constant 0 : i32
    return %arg0, %c0_i32 : i32, i32
  }
}

</mosaic_0001>

<llo_original>
// kernel: network_block_apply.5
$region0: #{network_block_apply.5}
  #allocation0 [shape = 'u32[]', space=smem, size = 0x4, offset = 0x4, fixed_abs, tag = 'smem constant byte address 0x4 - core index']
  #allocation1 [shape = 'u32[144,128]{1,0:T(1,128)}', space=vmem, size = 0x12000, scoped, tag = 'internal scratch']
  #allocation2 [shape = 'f32[64,128]{1,0:T(8,128)}', space=vmem, size = 0x8000, scoped, tag = 'scratch operand']
  %s0 = inlined_call_operand.vmem [shape: bf16[128,1152], index: 0, kind: input, shape index: {}]
  %s1 = inlined_call_operand.vmem [shape: bf16[1152,128], index: 1, kind: input, shape index: {}]
  %s2 = inlined_call_operand.vmem [shape: bf16[128,128], index: 2, kind: input, shape index: {}]
  %s3 = inlined_call_operand.vmem [shape: f32[128,128], index: 3, kind: output, shape index: {}]
  %s4 = sld [smem:[#allocation0]]
  $region53: #{network_block_apply.5} parent=0
    _
  %s6 = ssub.s32 1, %s4
  %s7 = scalar_select 0, %s6, %s4
  loop: start=0, step=1, limit=4
  $region2: #{network_block_apply.5} parent=0 // loop_pre_header
    _
  $region3: #{network_block_apply.5} parent=0 // loop_header
    %s9 = sphi 0, %s13
    %p10 = scmp.ge.s32.totalorder %s9, 4
    %s16 = sphi 0, %s28
    %s17 = sphi 0, %s24
    %s18 = sphi 0, %s16
    %s19 = sphi 0, %s17
    %s20 = sphi 0, %s18
    %s21 = sphi 0, %s19
    %s33 = sphi 0, %s35
    %s36 = sphi 0, %s33
    %s37 = sphi 0, %s36
    %s53 = sphi 0, %s37
    %s59 = sphi 0, %s61
    %s62 = sphi 0, %s59
    %s63 = sphi 0, %s62
    %s79 = sphi 0, %s63
    %s85 = sphi 0, %s87
    %s88 = sphi 0, %s85
    %s89 = sphi 0, %s88
    %s105 = sphi 0, %s89
    %s111 = sphi 0, %s113
    %s114 = sphi 0, %s111
    %s115 = sphi 0, %s114
    %s131 = sphi 0, %s115
  $region4: #{network_block_apply.5} parent=0 // loop_header_branch
    %12 = sbr.rel (%p10) target = $region8
  $region5: #{network_block_apply.5} parent=0 // loop_body
    %s14 = ssub.s32 %s9, 1
    %s15 = ssub.s32 %s9, 2
    %s22 = sadd.s32 1, %s17
    %p23 = scmp.ge.s32.totalorder %s22, 1
    %s24 = scalar_select %p23, 0, %s22
    %s25 = sadd.s32 1, %s16
    %s26 = scalar_select %p23, %s25, %s16
    %p27 = scmp.ge.s32.totalorder %s26, 2
    %s28 = scalar_select %p27, 0, %s26
    %s29 = ssub.s32 %s16, %s28
    %s30 = ssub.s32 %s17, %s24
    %s31 = sor.u32 %s29, %s30
    %p32 = scmp.eq.s32.totalorder %s31, 0
    %s34 = sadd.s32 %s33, 1
    %s35 = scalar_select %p32, %s33, %s34
    %p38 = pneg %p32
    %p39 = scmp.eq.s32.totalorder %s9, 1
    %p40 = por %p38, %p39
    %p41 = scmp.ne.s32.totalorder %s33, %s36
    %p42 = scmp.eq.s32.totalorder %s9, 0
    %p43 = por %p41, %p42
    %p44 = scmp.ne.s32.totalorder %s33, %s36
    %p45 = scmp.eq.s32.totalorder %s14, 1
    %p46 = por %p44, %p45
    %p47 = scmp.ne.s32.totalorder %s36, %s37
    %p48 = scmp.eq.s32.totalorder %s14, 0
    %p49 = por %p47, %p48
    %p50 = scmp.ne.s32.totalorder %s36, %s37
    %p51 = scmp.eq.s32.totalorder %s15, 1
    %p52 = por %p50, %p51
    %p54 = scmp.ne.s32.totalorder %s37, %s53
    %p55 = scmp.eq.s32.totalorder %s15, 0
    %p56 = por %p54, %p55
    %s57 = ssub.s32 %s17, %s24
    %p58 = scmp.eq.s32.totalorder %s57, 0
    %s60 = sadd.s32 %s59, 1
    %s61 = scalar_select %p58, %s59, %s60
    %p64 = pneg %p58
    %p65 = scmp.eq.s32.totalorder %s9, 1
    %p66 = por %p64, %p65
    %p67 = scmp.ne.s32.totalorder %s59, %s62
    %p68 = scmp.eq.s32.totalorder %s9, 0
    %p69 = por %p67, %p68
    %p70 = scmp.ne.s32.totalorder %s59, %s62
    %p71 = scmp.eq.s32.totalorder %s14, 1
    %p72 = por %p70, %p71
    %p73 = scmp.ne.s32.totalorder %s62, %s63
    %p74 = scmp.eq.s32.totalorder %s14, 0
    %p75 = por %p73, %p74
    %p76 = scmp.ne.s32.totalorder %s62, %s63
    %p77 = scmp.eq.s32.totalorder %s15, 1
    %p78 = por %p76, %p77
    %p80 = scmp.ne.s32.totalorder %s63, %s79
    %p81 = scmp.eq.s32.totalorder %s15, 0
    %p82 = por %p80, %p81
    %s83 = ssub.s32 %s16, %s28
    %p84 = scmp.eq.s32.totalorder %s83, 0
    %s86 = sadd.s32 %s85, 1
    %s87 = scalar_select %p84, %s85, %s86
    %p90 = pneg %p84
    %p91 = scmp.eq.s32.totalorder %s9, 1
    %p92 = por %p90, %p91
    %p93 = scmp.ne.s32.totalorder %s85, %s88
    %p94 = scmp.eq.s32.totalorder %s9, 0
    %p95 = por %p93, %p94
    %p96 = scmp.ne.s32.totalorder %s85, %s88
    %p97 = scmp.eq.s32.totalorder %s14, 1
    %p98 = por %p96, %p97
    %p99 = scmp.ne.s32.totalorder %s88, %s89
    %p100 = scmp.eq.s32.totalorder %s14, 0
    %p101 = por %p99, %p100
    %p102 = scmp.ne.s32.totalorder %s88, %s89
    %p103 = scmp.eq.s32.totalorder %s15, 1
    %p104 = por %p102, %p103
    %p106 = scmp.ne.s32.totalorder %s89, %s105
    %p107 = scmp.eq.s32.totalorder %s15, 0
    %p108 = por %p106, %p107
    %s109 = ssub.s32 %s16, %s28
    %p110 = scmp.eq.s32.totalorder %s109, 0
    %s112 = sadd.s32 %s111, 1
    %s113 = scalar_select %p110, %s111, %s112
    %p116 = pneg %p110
    %p117 = scmp.eq.s32.totalorder %s9, 1
    %p118 = por %p116, %p117
    %p119 = scmp.ne.s32.totalorder %s111, %s114
    %p120 = scmp.eq.s32.totalorder %s9, 0
    %p121 = por %p119, %p120
    %p122 = scmp.ne.s32.totalorder %s111, %s114
    %p123 = scmp.eq.s32.totalorder %s14, 1
    %p124 = por %p122, %p123
    %p125 = scmp.ne.s32.totalorder %s114, %s115
    %p126 = scmp.eq.s32.totalorder %s14, 0
    %p127 = por %p125, %p126
    %p128 = scmp.ne.s32.totalorder %s114, %s115
    %p129 = scmp.eq.s32.totalorder %s15, 1
    %p130 = por %p128, %p129
    %p132 = scmp.ne.s32.totalorder %s115, %s131
    %p133 = scmp.eq.s32.totalorder %s15, 0
    %p134 = por %p132, %p133
    %p135 = scmp.le.s32.totalorder 1, %s9
    %p136 = scmp.lt.s32.totalorder %s9, 3
    %p137 = pnand %p135, %p136
    %p138 = pneg %p137
    // Predicated region
    $region9: #{network_block_apply.5} parent=5 // pred_check
      _
    $region10: #{network_block_apply.5} parent=5 // pred_check_branch
      %140 = sbr.rel (%p137) target = $region12
    $region11: #{network_block_apply.5} parent=5 // pred_region
      %s141 = ssub.s32 %s9, 1
      // Predicated region
      $region13: #{network_block_apply.5} parent=11 // pred_check
        %p142 = pneg %p75
      $region14: #{network_block_apply.5} parent=11 // pred_check_branch
        %144 = sbr.rel (%p142) target = $region16
      $region15: #{network_block_apply.5} parent=11 // pred_region
        %s145 = smul.u32 144, %s19
        %p146 = scmp.lt.s32.totalorder %s145, 143
        %s147 = scalar_select %p146, %s145, 143
        %s148 = smul.addr %s147, 4
        %s149 = scalar_lea.vmem %s1, %s148
        %s150 = smul.u32 144, %s19
      $region16: #{network_block_apply.5} parent=11 // pred_fallthru
        _
    $region12: #{network_block_apply.5} parent=5 // pred_fallthru
      _
    %p151 = scmp.lt.s32.totalorder %s9, 2
    // Predicated region
    $region17: #{network_block_apply.5} parent=5 // pred_check
      %p152 = pneg %p151
    $region18: #{network_block_apply.5} parent=5 // pred_check_branch
      %154 = sbr.rel (%p152) target = $region20
    $region19: #{network_block_apply.5} parent=5 // pred_region
      // Predicated region
      $region21: #{network_block_apply.5} parent=19 // pred_check
        %p155 = pneg %p43
      $region22: #{network_block_apply.5} parent=19 // pred_check_branch
        %157 = sbr.rel (%p155) target = $region24
      $region23: #{network_block_apply.5} parent=19 // pred_region
        %s158 = smul.u32 8, %s16
        %s159 = smul.u32 9, %s17
        %p160 = scmp.lt.s32.totalorder %s158, 15
        %s161 = scalar_select %p160, %s158, 15
        %p162 = scmp.lt.s32.totalorder %s159, 8
        %s163 = scalar_select %p162, %s159, 8
        %s164 = smul.addr %s161, 9
        %s165 = sadd.s32 %s163, %s164
        %s166 = smul.addr %s165, 4
        %s167 = scalar_lea.vmem %s0, %s166
        %s168 = smul.u32 8, %s16
        %s169 = smul.u32 9, %s17
      $region24: #{network_block_apply.5} parent=19 // pred_fallthru
        _
      // Predicated region
      $region25: #{network_block_apply.5} parent=19 // pred_check
        %p170 = pneg %p95
      $region26: #{network_block_apply.5} parent=19 // pred_check_branch
        %172 = sbr.rel (%p170) target = $region28
      $region27: #{network_block_apply.5} parent=19 // pred_region
        %s173 = smul.u32 8, %s16
        %p174 = scmp.lt.s32.totalorder %s173, 15
        %s175 = scalar_select %p174, %s173, 15
        %s176 = smul.addr %s175, 4
        %s177 = scalar_lea.vmem %s2, %s176
        %s178 = smul.u32 8, %s16
      $region28: #{network_block_apply.5} parent=19 // pred_fallthru
        _
    $region20: #{network_block_apply.5} parent=5 // pred_fallthru
      _
    %p179 = scmp.le.s32.totalorder 1, %s9
    %p180 = scmp.lt.s32.totalorder %s9, 3
    %p181 = pnand %p179, %p180
    %p182 = pneg %p181
    // Predicated region
    $region29: #{network_block_apply.5} parent=5 // pred_check
      _
    $region30: #{network_block_apply.5} parent=5 // pred_check_branch
      %184 = sbr.rel (%p181) target = $region32
    $region31: #{network_block_apply.5} parent=5 // pred_region
      %s185 = ssub.s32 %s9, 1
      %s186 = smul.u32 8, %s18
      %s187 = smul.u32 9, %s19
      %p188 = scmp.lt.s32.totalorder %s186, 15
      %s189 = scalar_select %p188, %s186, 15
      %p190 = scmp.lt.s32.totalorder %s187, 8
      %s191 = scalar_select %p190, %s187, 8
      %s192 = smul.addr %s189, 9
      %s193 = sadd.s32 %s191, %s192
      %s194 = smul.addr %s193, 4
      %s195 = scalar_lea.vmem %s0, %s194
      %p196 = pneg %p49
      %p197 = pneg %p46
      %s198 = smul.u32 144, %s19
      %p199 = scmp.lt.s32.totalorder %s198, 143
      %s200 = scalar_select %p199, %s198, 143
      %s201 = smul.addr %s200, 4
      %s202 = scalar_lea.vmem %s1, %s201
      %p203 = pneg %p75
      %p204 = pneg %p72
      %s205 = smul.u32 8, %s18
      %p206 = scmp.lt.s32.totalorder %s205, 15
      %s207 = scalar_select %p206, %s205, 15
      %s208 = smul.addr %s207, 4
      %s209 = scalar_lea.vmem %s2, %s208
      %p210 = pneg %p101
      %p211 = pneg %p98
      %p212 = pneg %p127
      %p213 = pneg %p124
      %s214 = smul.u32 8, %s18
      %p215 = scmp.lt.s32.totalorder %s214, 15
      %s216 = scalar_select %p215, %s214, 15
      %s217 = smul.addr %s216, 8
      %s218 = scalar_lea.vmem %s3, %s217
      %s219 = smul.u32 8, %s18
      %s220 = smul.u32 9, %s19
      %p221 = scmp.lt.s32.totalorder %s219, 15
      %s222 = scalar_select %p221, %s219, 15
      %p223 = scmp.lt.s32.totalorder %s220, 8
      %s224 = scalar_select %p223, %s220, 8
      %s225 = smul.addr %s222, 9
      %s226 = sadd.s32 %s224, %s225
      %s227 = smul.addr %s226, 4
      %s228 = scalar_lea.vmem %s0, %s227
      %s229 = smul.u32 8, %s18
      %s230 = smul.u32 9, %s19
      %s231 = smul.u32 144, %s19
      %p232 = scmp.lt.s32.totalorder %s231, 143
      %s233 = scalar_select %p232, %s231, 143
      %s234 = smul.addr %s233, 4
      %s235 = scalar_lea.vmem %s1, %s234
      %s236 = smul.u32 144, %s19
      %s237 = smul.u32 8, %s18
      %p238 = scmp.lt.s32.totalorder %s237, 15
      %s239 = scalar_select %p238, %s237, 15
      %s240 = smul.addr %s239, 4
      %s241 = scalar_lea.vmem %s2, %s240
      %s242 = smul.u32 8, %s18
      %s243 = smul.u32 8, %s18
      %p244 = scmp.lt.s32.totalorder %s243, 15
      %s245 = scalar_select %p244, %s243, 15
      %s246 = smul.addr %s245, 8
      %s247 = scalar_lea.vmem %s3, %s246
      %s248 = smul.u32 8, %s18
      %p250 = scmp.eq.s32.totalorder %s19, 0
      // Predicated region
      $region33: #{network_block_apply.5} parent=31 // pred_check
        %p251 = pneg %p250
      $region34: #{network_block_apply.5} parent=31 // pred_check_branch
        %253 = sbr.rel (%p251) target = $region36
      $region35: #{network_block_apply.5} parent=31 // pred_region
        %254 = vst [vmem:[#allocation2] sm:$0xff] 0.0
        %255 = vst [vmem:[#allocation2 + $0x8] sm:$0xff] 0.0
        %256 = vst [vmem:[#allocation2 + $0x10] sm:$0xff] 0.0
        %257 = vst [vmem:[#allocation2 + $0x18] sm:$0xff] 0.0
        %258 = vst [vmem:[#allocation2 + $0x20] sm:$0xff] 0.0
        %259 = vst [vmem:[#allocation2 + $0x28] sm:$0xff] 0.0
        %260 = vst [vmem:[#allocation2 + $0x30] sm:$0xff] 0.0
        %261 = vst [vmem:[#allocation2 + $0x38] sm:$0xff] 0.0
      $region36: #{network_block_apply.5} parent=31 // pred_fallthru
        _
      %v262 = vld [vmem:[#allocation2] sm:$0xff]
      %v263 = vld [vmem:[#allocation2 + $0x8] sm:$0xff]
      %v264 = vld [vmem:[#allocation2 + $0x10] sm:$0xff]
      %v265 = vld [vmem:[#allocation2 + $0x18] sm:$0xff]
      %v266 = vld [vmem:[#allocation2 + $0x20] sm:$0xff]
      %v267 = vld [vmem:[#allocation2 + $0x28] sm:$0xff]
      %v268 = vld [vmem:[#allocation2 + $0x30] sm:$0xff]
      %v269 = vld [vmem:[#allocation2 + $0x38] sm:$0xff]
      %v270 = vld [vmem:[%s228] sm:$0xff]
      %v271 = vld [vmem:[%s228 + $0x8] sm:$0xff]
      %v272 = vld [vmem:[%s228 + $0x10] sm:$0xff]
      %v273 = vld [vmem:[%s228 + $0x18] sm:$0xff]
      %v274 = vld [vmem:[%s228 + $0x20] sm:$0xf]
      %v275 = vld [vmem:[%s228 + $0x24] sm:$0xff]
      %v276 = vld [vmem:[%s228 + $0x2c] sm:$0xff]
      %v277 = vld [vmem:[%s228 + $0x34] sm:$0xff]
      %v278 = vld [vmem:[%s228 + $0x3c] sm:$0xff]
      %v279 = vld [vmem:[%s228 + $0x44] sm:$0xf]
      %v280 = vld [vmem:[%s228 + $0x48] sm:$0xff]
      %v281 = vld [vmem:[%s228 + $0x50] sm:$0xff]
      %v282 = vld [vmem:[%s228 + $0x58] sm:$0xff]
      %v283 = vld [vmem:[%s228 + $0x60] sm:$0xff]
      %v284 = vld [vmem:[%s228 + $0x68] sm:$0xf]
      %v285 = vld [vmem:[%s228 + $0x6c] sm:$0xff]
      %v286 = vld [vmem:[%s228 + $0x74] sm:$0xff]
      %v287 = vld [vmem:[%s228 + $0x7c] sm:$0xff]
      %v288 = vld [vmem:[%s228 + $0x84] sm:$0xff]
      %v289 = vld [vmem:[%s228 + $0x8c] sm:$0xf]
      %v290 = vld [vmem:[%s228 + $0x90] sm:$0xff]
      %v291 = vld [vmem:[%s228 + $0x98] sm:$0xff]
      %v292 = vld [vmem:[%s228 + $0xa0] sm:$0xff]
      %v293 = vld [vmem:[%s228 + $0xa8] sm:$0xff]
      %v294 = vld [vmem:[%s228 + $0xb0] sm:$0xf]
      %v295 = vld [vmem:[%s228 + $0xb4] sm:$0xff]
      %v296 = vld [vmem:[%s228 + $0xbc] sm:$0xff]
      %v297 = vld [vmem:[%s228 + $0xc4] sm:$0xff]
      %v298 = vld [vmem:[%s228 + $0xcc] sm:$0xff]
      %v299 = vld [vmem:[%s228 + $0xd4] sm:$0xf]
      %v300 = vld [vmem:[%s228 + $0xd8] sm:$0xff]
      %v301 = vld [vmem:[%s228 + $0xe0] sm:$0xff]
      %v302 = vld [vmem:[%s228 + $0xe8] sm:$0xff]
      %v303 = vld [vmem:[%s228 + $0xf0] sm:$0xff]
      %v304 = vld [vmem:[%s228 + $0xf8] sm:$0xf]
      %v305 = vld [vmem:[%s228 + $0xfc] sm:$0xff]
      %v306 = vld [vmem:[%s228 + $0x104] sm:$0xff]
      %v307 = vld [vmem:[%s228 + $0x10c] sm:$0xff]
      %v308 = vld [vmem:[%s228 + $0x114] sm:$0xff]
      %v309 = vld [vmem:[%s228 + $0x11c] sm:$0xf]
      %v310 = vld [vmem:[%s235] sm:$0xf]
      %v311 = vld [vmem:[%s235 + $0x4] sm:$0xf]
      %v312 = vld [vmem:[%s235 + $0x8] sm:$0xf]
      %v313 = vld [vmem:[%s235 + $0xc] sm:$0xf]
      %v314 = vld [vmem:[%s235 + $0x10] sm:$0xf]
      %v315 = vld [vmem:[%s235 + $0x14] sm:$0xf]
      %v316 = vld [vmem:[%s235 + $0x18] sm:$0xf]
      %v317 = vld [vmem:[%s235 + $0x1c] sm:$0xf]
      %v318 = vld [vmem:[%s235 + $0x20] sm:$0xf]
      %v319 = vld [vmem:[%s235 + $0x24] sm:$0xf]
      %v320 = vld [vmem:[%s235 + $0x28] sm:$0xf]
      %v321 = vld [vmem:[%s235 + $0x2c] sm:$0xf]
      %v322 = vld [vmem:[%s235 + $0x30] sm:$0xf]
      %v323 = vld [vmem:[%s235 + $0x34] sm:$0xf]
      %v324 = vld [vmem:[%s235 + $0x38] sm:$0xf]
      %v325 = vld [vmem:[%s235 + $0x3c] sm:$0xf]
      %v326 = vld [vmem:[%s235 + $0x40] sm:$0xf]
      %v327 = vld [vmem:[%s235 + $0x44] sm:$0xf]
      %v328 = vld [vmem:[%s235 + $0x48] sm:$0xf]
      %v329 = vld [vmem:[%s235 + $0x4c] sm:$0xf]
      %v330 = vld [vmem:[%s235 + $0x50] sm:$0xf]
      %v331 = vld [vmem:[%s235 + $0x54] sm:$0xf]
      %v332 = vld [vmem:[%s235 + $0x58] sm:$0xf]
      %v333 = vld [vmem:[%s235 + $0x5c] sm:$0xf]
      %v334 = vld [vmem:[%s235 + $0x60] sm:$0xf]
      %v335 = vld [vmem:[%s235 + $0x64] sm:$0xf]
      %v336 = vld [vmem:[%s235 + $0x68] sm:$0xf]
      %v337 = vld [vmem:[%s235 + $0x6c] sm:$0xf]
      %v338 = vld [vmem:[%s235 + $0x70] sm:$0xf]
      %v339 = vld [vmem:[%s235 + $0x74] sm:$0xf]
      %v340 = vld [vmem:[%s235 + $0x78] sm:$0xf]
      %v341 = vld [vmem:[%s235 + $0x7c] sm:$0xf]
      %v342 = vld [vmem:[%s235 + $0x80] sm:$0xf]
      %v343 = vld [vmem:[%s235 + $0x84] sm:$0xf]
      %v344 = vld [vmem:[%s235 + $0x88] sm:$0xf]
      %v345 = vld [vmem:[%s235 + $0x8c] sm:$0xf]
      %v346 = vld [vmem:[%s235 + $0x90] sm:$0xf]
      %v347 = vld [vmem:[%s235 + $0x94] sm:$0xf]
      %v348 = vld [vmem:[%s235 + $0x98] sm:$0xf]
      %v349 = vld [vmem:[%s235 + $0x9c] sm:$0xf]
      %v350 = vld [vmem:[%s235 + $0xa0] sm:$0xf]
      %v351 = vld [vmem:[%s235 + $0xa4] sm:$0xf]
      %v352 = vld [vmem:[%s235 + $0xa8] sm:$0xf]
      %v353 = vld [vmem:[%s235 + $0xac] sm:$0xf]
      %v354 = vld [vmem:[%s235 + $0xb0] sm:$0xf]
      %v355 = vld [vmem:[%s235 + $0xb4] sm:$0xf]
      %v356 = vld [vmem:[%s235 + $0xb8] sm:$0xf]
      %v357 = vld [vmem:[%s235 + $0xbc] sm:$0xf]
      %v358 = vld [vmem:[%s235 + $0xc0] sm:$0xf]
      %v359 = vld [vmem:[%s235 + $0xc4] sm:$0xf]
      %v360 = vld [vmem:[%s235 + $0xc8] sm:$0xf]
      %v361 = vld [vmem:[%s235 + $0xcc] sm:$0xf]
      %v362 = vld [vmem:[%s235 + $0xd0] sm:$0xf]
      %v363 = vld [vmem:[%s235 + $0xd4] sm:$0xf]
      %v364 = vld [vmem:[%s235 + $0xd8] sm:$0xf]
      %v365 = vld [vmem:[%s235 + $0xdc] sm:$0xf]
      %v366 = vld [vmem:[%s235 + $0xe0] sm:$0xf]
      %v367 = vld [vmem:[%s235 + $0xe4] sm:$0xf]
      %v368 = vld [vmem:[%s235 + $0xe8] sm:$0xf]
      %v369 = vld [vmem:[%s235 + $0xec] sm:$0xf]
      %v370 = vld [vmem:[%s235 + $0xf0] sm:$0xf]
      %v371 = vld [vmem:[%s235 + $0xf4] sm:$0xf]
      %v372 = vld [vmem:[%s235 + $0xf8] sm:$0xf]
      %v373 = vld [vmem:[%s235 + $0xfc] sm:$0xf]
      %v374 = vld [vmem:[%s235 + $0x100] sm:$0xf]
      %v375 = vld [vmem:[%s235 + $0x104] sm:$0xf]
      %v376 = vld [vmem:[%s235 + $0x108] sm:$0xf]
      %v377 = vld [vmem:[%s235 + $0x10c] sm:$0xf]
      %v378 = vld [vmem:[%s235 + $0x110] sm:$0xf]
      %v379 = vld [vmem:[%s235 + $0x114] sm:$0xf]
      %v380 = vld [vmem:[%s235 + $0x118] sm:$0xf]
      %v381 = vld [vmem:[%s235 + $0x11c] sm:$0xf]
      %v382 = vld [vmem:[%s235 + $0x120] sm:$0xf]
      %v383 = vld [vmem:[%s235 + $0x124] sm:$0xf]
      %v384 = vld [vmem:[%s235 + $0x128] sm:$0xf]
      %v385 = vld [vmem:[%s235 + $0x12c] sm:$0xf]
      %v386 = vld [vmem:[%s235 + $0x130] sm:$0xf]
      %v387 = vld [vmem:[%s235 + $0x134] sm:$0xf]
      %v388 = vld [vmem:[%s235 + $0x138] sm:$0xf]
      %v389 = vld [vmem:[%s235 + $0x13c] sm:$0xf]
      %v390 = vld [vmem:[%s235 + $0x140] sm:$0xf]
      %v391 = vld [vmem:[%s235 + $0x144] sm:$0xf]
      %v392 = vld [vmem:[%s235 + $0x148] sm:$0xf]
      %v393 = vld [vmem:[%s235 + $0x14c] sm:$0xf]
      %v394 = vld [vmem:[%s235 + $0x150] sm:$0xf]
      %v395 = vld [vmem:[%s235 + $0x154] sm:$0xf]
      %v396 = vld [vmem:[%s235 + $0x158] sm:$0xf]
      %v397 = vld [vmem:[%s235 + $0x15c] sm:$0xf]
      %v398 = vld [vmem:[%s235 + $0x160] sm:$0xf]
      %v399 = vld [vmem:[%s235 + $0x164] sm:$0xf]
      %v400 = vld [vmem:[%s235 + $0x168] sm:$0xf]
      %v401 = vld [vmem:[%s235 + $0x16c] sm:$0xf]
      %v402 = vld [vmem:[%s235 + $0x170] sm:$0xf]
      %v403 = vld [vmem:[%s235 + $0x174] sm:$0xf]
      %v404 = vld [vmem:[%s235 + $0x178] sm:$0xf]
      %v405 = vld [vmem:[%s235 + $0x17c] sm:$0xf]
      %v406 = vld [vmem:[%s235 + $0x180] sm:$0xf]
      %v407 = vld [vmem:[%s235 + $0x184] sm:$0xf]
      %v408 = vld [vmem:[%s235 + $0x188] sm:$0xf]
      %v409 = vld [vmem:[%s235 + $0x18c] sm:$0xf]
      %v410 = vld [vmem:[%s235 + $0x190] sm:$0xf]
      %v411 = vld [vmem:[%s235 + $0x194] sm:$0xf]
      %v412 = vld [vmem:[%s235 + $0x198] sm:$0xf]
      %v413 = vld [vmem:[%s235 + $0x19c] sm:$0xf]
      %v414 = vld [vmem:[%s235 + $0x1a0] sm:$0xf]
      %v415 = vld [vmem:[%s235 + $0x1a4] sm:$0xf]
      %v416 = vld [vmem:[%s235 + $0x1a8] sm:$0xf]
      %v417 = vld [vmem:[%s235 + $0x1ac] sm:$0xf]
      %v418 = vld [vmem:[%s235 + $0x1b0] sm:$0xf]
      %v419 = vld [vmem:[%s235 + $0x1b4] sm:$0xf]
      %v420 = vld [vmem:[%s235 + $0x1b8] sm:$0xf]
      %v421 = vld [vmem:[%s235 + $0x1bc] sm:$0xf]
      %v422 = vld [vmem:[%s235 + $0x1c0] sm:$0xf]
      %v423 = vld [vmem:[%s235 + $0x1c4] sm:$0xf]
      %v424 = vld [vmem:[%s235 + $0x1c8] sm:$0xf]
      %v425 = vld [vmem:[%s235 + $0x1cc] sm:$0xf]
      %v426 = vld [vmem:[%s235 + $0x1d0] sm:$0xf]
      %v427 = vld [vmem:[%s235 + $0x1d4] sm:$0xf]
      %v428 = vld [vmem:[%s235 + $0x1d8] sm:$0xf]
      %v429 = vld [vmem:[%s235 + $0x1dc] sm:$0xf]
      %v430 = vld [vmem:[%s235 + $0x1e0] sm:$0xf]
      %v431 = vld [vmem:[%s235 + $0x1e4] sm:$0xf]
      %v432 = vld [vmem:[%s235 + $0x1e8] sm:$0xf]
      %v433 = vld [vmem:[%s235 + $0x1ec] sm:$0xf]
      %v434 = vld [vmem:[%s235 + $0x1f0] sm:$0xf]
      %v435 = vld [vmem:[%s235 + $0x1f4] sm:$0xf]
      %v436 = vld [vmem:[%s235 + $0x1f8] sm:$0xf]
      %v437 = vld [vmem:[%s235 + $0x1fc] sm:$0xf]
      %v438 = vld [vmem:[%s235 + $0x200] sm:$0xf]
      %v439 = vld [vmem:[%s235 + $0x204] sm:$0xf]
      %v440 = vld [vmem:[%s235 + $0x208] sm:$0xf]
      %v441 = vld [vmem:[%s235 + $0x20c] sm:$0xf]
      %v442 = vld [vmem:[%s235 + $0x210] sm:$0xf]
      %v443 = vld [vmem:[%s235 + $0x214] sm:$0xf]
      %v444 = vld [vmem:[%s235 + $0x218] sm:$0xf]
      %v445 = vld [vmem:[%s235 + $0x21c] sm:$0xf]
      %v446 = vld [vmem:[%s235 + $0x220] sm:$0xf]
      %v447 = vld [vmem:[%s235 + $0x224] sm:$0xf]
      %v448 = vld [vmem:[%s235 + $0x228] sm:$0xf]
      %v449 = vld [vmem:[%s235 + $0x22c] sm:$0xf]
      %v450 = vld [vmem:[%s235 + $0x230] sm:$0xf]
      %v451 = vld [vmem:[%s235 + $0x234] sm:$0xf]
      %v452 = vld [vmem:[%s235 + $0x238] sm:$0xf]
      %v453 = vld [vmem:[%s235 + $0x23c] sm:$0xf]
      %v494 = vunpack.c.l.b16 %v270
      %v495 = vunpack.c.h.b16 %v270
      %v496 = vunpack.c.l.b16 %v271
      %v497 = vunpack.c.h.b16 %v271
      %v498 = vunpack.c.l.b16 %v272
      %v499 = vunpack.c.h.b16 %v272
      %v500 = vunpack.c.l.b16 %v273
      %v501 = vunpack.c.h.b16 %v273
      %v502 = vunpack.c.l.b16 %v274
      %v503 = vunpack.c.l.b16 %v275
      %v504 = vunpack.c.h.b16 %v275
      %v505 = vunpack.c.l.b16 %v276
      %v506 = vunpack.c.h.b16 %v276
      %v507 = vunpack.c.l.b16 %v277
      %v508 = vunpack.c.h.b16 %v277
      %v509 = vunpack.c.l.b16 %v278
      %v510 = vunpack.c.h.b16 %v278
      %v511 = vunpack.c.l.b16 %v279
      %v512 = vunpack.c.l.b16 %v280
      %v513 = vunpack.c.h.b16 %v280
      %v514 = vunpack.c.l.b16 %v281
      %v515 = vunpack.c.h.b16 %v281
      %v516 = vunpack.c.l.b16 %v282
      %v517 = vunpack.c.h.b16 %v282
      %v518 = vunpack.c.l.b16 %v283
      %v519 = vunpack.c.h.b16 %v283
      %v520 = vunpack.c.l.b16 %v284
      %v521 = vunpack.c.l.b16 %v285
      %v522 = vunpack.c.h.b16 %v285
      %v523 = vunpack.c.l.b16 %v286
      %v524 = vunpack.c.h.b16 %v286
      %v525 = vunpack.c.l.b16 %v287
      %v526 = vunpack.c.h.b16 %v287
      %v527 = vunpack.c.l.b16 %v288
      %v528 = vunpack.c.h.b16 %v288
      %v529 = vunpack.c.l.b16 %v289
      %v530 = vunpack.c.l.b16 %v290
      %v531 = vunpack.c.h.b16 %v290
      %v532 = vunpack.c.l.b16 %v291
      %v533 = vunpack.c.h.b16 %v291
      %v534 = vunpack.c.l.b16 %v292
      %v535 = vunpack.c.h.b16 %v292
      %v536 = vunpack.c.l.b16 %v293
      %v537 = vunpack.c.h.b16 %v293
      %v538 = vunpack.c.l.b16 %v294
      %v539 = vunpack.c.l.b16 %v295
      %v540 = vunpack.c.h.b16 %v295
      %v541 = vunpack.c.l.b16 %v296
      %v542 = vunpack.c.h.b16 %v296
      %v543 = vunpack.c.l.b16 %v297
      %v544 = vunpack.c.h.b16 %v297
      %v545 = vunpack.c.l.b16 %v298
      %v546 = vunpack.c.h.b16 %v298
      %v547 = vunpack.c.l.b16 %v299
      %v548 = vunpack.c.l.b16 %v300
      %v549 = vunpack.c.h.b16 %v300
      %v550 = vunpack.c.l.b16 %v301
      %v551 = vunpack.c.h.b16 %v301
      %v552 = vunpack.c.l.b16 %v302
      %v553 = vunpack.c.h.b16 %v302
      %v554 = vunpack.c.l.b16 %v303
      %v555 = vunpack.c.h.b16 %v303
      %v556 = vunpack.c.l.b16 %v304
      %v557 = vunpack.c.l.b16 %v305
      %v558 = vunpack.c.h.b16 %v305
      %v559 = vunpack.c.l.b16 %v306
      %v560 = vunpack.c.h.b16 %v306
      %v561 = vunpack.c.l.b16 %v307
      %v562 = vunpack.c.h.b16 %v307
      %v563 = vunpack.c.l.b16 %v308
      %v564 = vunpack.c.h.b16 %v308
      %v565 = vunpack.c.l.b16 %v309
      %v566 = vpack.c.b16 %v503, %v494
      %v567 = vpack.c.b16 %v504, %v495
      %v568 = vpack.c.b16 %v505, %v496
      %v569 = vpack.c.b16 %v506, %v497
      %v570 = vpack.c.b16 %v507, %v498
      %v571 = vpack.c.b16 %v508, %v499
      %v572 = vpack.c.b16 %v509, %v500
      %v573 = vpack.c.b16 %v510, %v501
      %v574 = vpack.c.b16 %v511, %v502
      %v575 = vpack.c.b16 %v521, %v512
      %v576 = vpack.c.b16 %v522, %v513
      %v577 = vpack.c.b16 %v523, %v514
      %v578 = vpack.c.b16 %v524, %v515
      %v579 = vpack.c.b16 %v525, %v516
      %v580 = vpack.c.b16 %v526, %v517
      %v581 = vpack.c.b16 %v527, %v518
      %v582 = vpack.c.b16 %v528, %v519
      %v583 = vpack.c.b16 %v529, %v520
      %v584 = vpack.c.b16 %v539, %v530
      %v585 = vpack.c.b16 %v540, %v531
      %v586 = vpack.c.b16 %v541, %v532
      %v587 = vpack.c.b16 %v542, %v533
      %v588 = vpack.c.b16 %v543, %v534
      %v589 = vpack.c.b16 %v544, %v535
      %v590 = vpack.c.b16 %v545, %v536
      %v591 = vpack.c.b16 %v546, %v537
      %v592 = vpack.c.b16 %v547, %v538
      %v593 = vpack.c.b16 %v557, %v548
      %v594 = vpack.c.b16 %v558, %v549
      %v595 = vpack.c.b16 %v559, %v550
      %v596 = vpack.c.b16 %v560, %v551
      %v597 = vpack.c.b16 %v561, %v552
      %v598 = vpack.c.b16 %v562, %v553
      %v599 = vpack.c.b16 %v563, %v554
      %v600 = vpack.c.b16 %v564, %v555
      %v601 = vpack.c.b16 %v565, %v556
      %v782 = vunpack.c.l.b16 %v310
      %v783 = vunpack.c.l.b16 %v311
      %v784 = vunpack.c.l.b16 %v312
      %v785 = vunpack.c.l.b16 %v313
      %v786 = vunpack.c.l.b16 %v314
      %v787 = vunpack.c.l.b16 %v315
      %v788 = vunpack.c.l.b16 %v316
      %v789 = vunpack.c.l.b16 %v317
      %v790 = vunpack.c.l.b16 %v318
      %v791 = vunpack.c.l.b16 %v319
      %v792 = vunpack.c.l.b16 %v320
      %v793 = vunpack.c.l.b16 %v321
      %v794 = vunpack.c.l.b16 %v322
      %v795 = vunpack.c.l.b16 %v323
      %v796 = vunpack.c.l.b16 %v324
      %v797 = vunpack.c.l.b16 %v325
      %v798 = vunpack.c.l.b16 %v326
      %v799 = vunpack.c.l.b16 %v327
      %v800 = vunpack.c.l.b16 %v328
      %v801 = vunpack.c.l.b16 %v329
      %v802 = vunpack.c.l.b16 %v330
      %v803 = vunpack.c.l.b16 %v331
      %v804 = vunpack.c.l.b16 %v332
      %v805 = vunpack.c.l.b16 %v333
      %v806 = vunpack.c.l.b16 %v334
      %v807 = vunpack.c.l.b16 %v335
      %v808 = vunpack.c.l.b16 %v336
      %v809 = vunpack.c.l.b16 %v337
      %v810 = vunpack.c.l.b16 %v338
      %v811 = vunpack.c.l.b16 %v339
      %v812 = vunpack.c.l.b16 %v340
      %v813 = vunpack.c.l.b16 %v341
      %v814 = vunpack.c.l.b16 %v342
      %v815 = vunpack.c.l.b16 %v343
      %v816 = vunpack.c.l.b16 %v344
      %v817 = vunpack.c.l.b16 %v345
      %v818 = vunpack.c.l.b16 %v346
      %v819 = vunpack.c.l.b16 %v347
      %v820 = vunpack.c.l.b16 %v348
      %v821 = vunpack.c.l.b16 %v349
      %v822 = vunpack.c.l.b16 %v350
      %v823 = vunpack.c.l.b16 %v351
      %v824 = vunpack.c.l.b16 %v352
      %v825 = vunpack.c.l.b16 %v353
      %v826 = vunpack.c.l.b16 %v354
      %v827 = vunpack.c.l.b16 %v355
      %v828 = vunpack.c.l.b16 %v356
      %v829 = vunpack.c.l.b16 %v357
      %v830 = vunpack.c.l.b16 %v358
      %v831 = vunpack.c.l.b16 %v359
      %v832 = vunpack.c.l.b16 %v360
      %v833 = vunpack.c.l.b16 %v361
      %v834 = vunpack.c.l.b16 %v362
      %v835 = vunpack.c.l.b16 %v363
      %v836 = vunpack.c.l.b16 %v364
      %v837 = vunpack.c.l.b16 %v365
      %v838 = vunpack.c.l.b16 %v366
      %v839 = vunpack.c.l.b16 %v367
      %v840 = vunpack.c.l.b16 %v368
      %v841 = vunpack.c.l.b16 %v369
      %v842 = vunpack.c.l.b16 %v370
      %v843 = vunpack.c.l.b16 %v371
      %v844 = vunpack.c.l.b16 %v372
      %v845 = vunpack.c.l.b16 %v373
      %v846 = vunpack.c.l.b16 %v374
      %v847 = vunpack.c.l.b16 %v375
      %v848 = vunpack.c.l.b16 %v376
      %v849 = vunpack.c.l.b16 %v377
      %v850 = vunpack.c.l.b16 %v378
      %v851 = vunpack.c.l.b16 %v379
      %v852 = vunpack.c.l.b16 %v380
      %v853 = vunpack.c.l.b16 %v381
      %v854 = vunpack.c.l.b16 %v382
      %v855 = vunpack.c.l.b16 %v383
      %v856 = vunpack.c.l.b16 %v384
      %v857 = vunpack.c.l.b16 %v385
      %v858 = vunpack.c.l.b16 %v386
      %v859 = vunpack.c.l.b16 %v387
      %v860 = vunpack.c.l.b16 %v388
      %v861 = vunpack.c.l.b16 %v389
      %v862 = vunpack.c.l.b16 %v390
      %v863 = vunpack.c.l.b16 %v391
      %v864 = vunpack.c.l.b16 %v392
      %v865 = vunpack.c.l.b16 %v393
      %v866 = vunpack.c.l.b16 %v394
      %v867 = vunpack.c.l.b16 %v395
      %v868 = vunpack.c.l.b16 %v396
      %v869 = vunpack.c.l.b16 %v397
      %v870 = vunpack.c.l.b16 %v398
      %v871 = vunpack.c.l.b16 %v399
      %v872 = vunpack.c.l.b16 %v400
      %v873 = vunpack.c.l.b16 %v401
      %v874 = vunpack.c.l.b16 %v402
      %v875 = vunpack.c.l.b16 %v403
      %v876 = vunpack.c.l.b16 %v404
      %v877 = vunpack.c.l.b16 %v405
      %v878 = vunpack.c.l.b16 %v406
      %v879 = vunpack.c.l.b16 %v407
      %v880 = vunpack.c.l.b16 %v408
      %v881 = vunpack.c.l.b16 %v409
      %v882 = vunpack.c.l.b16 %v410
      %v883 = vunpack.c.l.b16 %v411
      %v884 = vunpack.c.l.b16 %v412
      %v885 = vunpack.c.l.b16 %v413
      %v886 = vunpack.c.l.b16 %v414
      %v887 = vunpack.c.l.b16 %v415
      %v888 = vunpack.c.l.b16 %v416
      %v889 = vunpack.c.l.b16 %v417
      %v890 = vunpack.c.l.b16 %v418
      %v891 = vunpack.c.l.b16 %v419
      %v892 = vunpack.c.l.b16 %v420
      %v893 = vunpack.c.l.b16 %v421
      %v894 = vunpack.c.l.b16 %v422
      %v895 = vunpack.c.l.b16 %v423
      %v896 = vunpack.c.l.b16 %v424
      %v897 = vunpack.c.l.b16 %v425
      %v898 = vunpack.c.l.b16 %v426
      %v899 = vunpack.c.l.b16 %v427
      %v900 = vunpack.c.l.b16 %v428
      %v901 = vunpack.c.l.b16 %v429
      %v902 = vunpack.c.l.b16 %v430
      %v903 = vunpack.c.l.b16 %v431
      %v904 = vunpack.c.l.b16 %v432
      %v905 = vunpack.c.l.b16 %v433
      %v906 = vunpack.c.l.b16 %v434
      %v907 = vunpack.c.l.b16 %v435
      %v908 = vunpack.c.l.b16 %v436
      %v909 = vunpack.c.l.b16 %v437
      %v910 = vunpack.c.l.b16 %v438
      %v911 = vunpack.c.l.b16 %v439
      %v912 = vunpack.c.l.b16 %v440
      %v913 = vunpack.c.l.b16 %v441
      %v914 = vunpack.c.l.b16 %v442
      %v915 = vunpack.c.l.b16 %v443
      %v916 = vunpack.c.l.b16 %v444
      %v917 = vunpack.c.l.b16 %v445
      %v918 = vunpack.c.l.b16 %v446
      %v919 = vunpack.c.l.b16 %v447
      %v920 = vunpack.c.l.b16 %v448
      %v921 = vunpack.c.l.b16 %v449
      %v922 = vunpack.c.l.b16 %v450
      %v923 = vunpack.c.l.b16 %v451
      %v924 = vunpack.c.l.b16 %v452
      %v925 = vunpack.c.l.b16 %v453
      %v926 = vpack.c.b16 %v783, %v782
      %v927 = vpack.c.b16 %v785, %v784
      %v928 = vpack.c.b16 %v787, %v786
      %v929 = vpack.c.b16 %v789, %v788
      %v930 = vpack.c.b16 %v791, %v790
      %v931 = vpack.c.b16 %v793, %v792
      %v932 = vpack.c.b16 %v795, %v794
      %v933 = vpack.c.b16 %v797, %v796
      %v934 = vpack.c.b16 %v799, %v798
      %v935 = vpack.c.b16 %v801, %v800
      %v936 = vpack.c.b16 %v803, %v802
      %v937 = vpack.c.b16 %v805, %v804
      %v938 = vpack.c.b16 %v807, %v806
      %v939 = vpack.c.b16 %v809, %v808
      %v940 = vpack.c.b16 %v811, %v810
      %v941 = vpack.c.b16 %v813, %v812
      %v942 = vpack.c.b16 %v815, %v814
      %v943 = vpack.c.b16 %v817, %v816
      %v944 = vpack.c.b16 %v819, %v818
      %v945 = vpack.c.b16 %v821, %v820
      %v946 = vpack.c.b16 %v823, %v822
      %v947 = vpack.c.b16 %v825, %v824
      %v948 = vpack.c.b16 %v827, %v826
      %v949 = vpack.c.b16 %v829, %v828
      %v950 = vpack.c.b16 %v831, %v830
      %v951 = vpack.c.b16 %v833, %v832
      %v952 = vpack.c.b16 %v835, %v834
      %v953 = vpack.c.b16 %v837, %v836
      %v954 = vpack.c.b16 %v839, %v838
      %v955 = vpack.c.b16 %v841, %v840
      %v956 = vpack.c.b16 %v843, %v842
      %v957 = vpack.c.b16 %v845, %v844
      %v958 = vpack.c.b16 %v847, %v846
      %v959 = vpack.c.b16 %v849, %v848
      %v960 = vpack.c.b16 %v851, %v850
      %v961 = vpack.c.b16 %v853, %v852
      %v962 = vpack.c.b16 %v855, %v854
      %v963 = vpack.c.b16 %v857, %v856
      %v964 = vpack.c.b16 %v859, %v858
      %v965 = vpack.c.b16 %v861, %v860
      %v966 = vpack.c.b16 %v863, %v862
      %v967 = vpack.c.b16 %v865, %v864
      %v968 = vpack.c.b16 %v867, %v866
      %v969 = vpack.c.b16 %v869, %v868
      %v970 = vpack.c.b16 %v871, %v870
      %v971 = vpack.c.b16 %v873, %v872
      %v972 = vpack.c.b16 %v875, %v874
      %v973 = vpack.c.b16 %v877, %v876
      %v974 = vpack.c.b16 %v879, %v878
      %v975 = vpack.c.b16 %v881, %v880
      %v976 = vpack.c.b16 %v883, %v882
      %v977 = vpack.c.b16 %v885, %v884
      %v978 = vpack.c.b16 %v887, %v886
      %v979 = vpack.c.b16 %v889, %v888
      %v980 = vpack.c.b16 %v891, %v890
      %v981 = vpack.c.b16 %v893, %v892
      %v982 = vpack.c.b16 %v895, %v894
      %v983 = vpack.c.b16 %v897, %v896
      %v984 = vpack.c.b16 %v899, %v898
      %v985 = vpack.c.b16 %v901, %v900
      %v986 = vpack.c.b16 %v903, %v902
      %v987 = vpack.c.b16 %v905, %v904
      %v988 = vpack.c.b16 %v907, %v906
      %v989 = vpack.c.b16 %v909, %v908
      %v990 = vpack.c.b16 %v911, %v910
      %v991 = vpack.c.b16 %v913, %v912
      %v992 = vpack.c.b16 %v915, %v914
      %v993 = vpack.c.b16 %v917, %v916
      %v994 = vpack.c.b16 %v919, %v918
      %v995 = vpack.c.b16 %v921, %v920
      %v996 = vpack.c.b16 %v923, %v922
      %v997 = vpack.c.b16 %v925, %v924
      %1070 = vmatprep.subr.bf16.mxu0 0
      %1071 = vmatpush1.bf16.msra.mxu0 %v926
      %1072 = vmatprep.subr.bf16.mxu0 0
      %1073 = vmatpush1.bf16.msra.mxu0 %v927
      %1074 = vmatprep.subr.bf16.mxu0 0
      %1075 = vmatpush1.bf16.msra.mxu0 %v928
      %1076 = vmatprep.subr.bf16.mxu0 0
      %1077 = vmatpush1.bf16.msra.mxu0 %v929
      %1078 = vmatprep.subr.bf16.mxu0 0
      %1079 = vmatpush1.bf16.msra.mxu0 %v930
      %1080 = vmatprep.subr.bf16.mxu0 0
      %1081 = vmatpush1.bf16.msra.mxu0 %v931
      %1082 = vmatprep.subr.bf16.mxu0 0
      %1083 = vmatpush1.bf16.msra.mxu0 %v932
      %1084 = vmatprep.subr.bf16.mxu0 0
      %1085 = vmatpush1.bf16.msra.mxu0 %v933
      %1086 = vmatprep.subr.bf16.mxu0 0
      %1087 = vmatpush1.bf16.msra.mxu0 %v934
      %1088 = vmatprep.subr.bf16.mxu0 0
      %1089 = vmatpush1.bf16.msra.mxu0 %v935
      %1090 = vmatprep.subr.bf16.mxu0 0
      %1091 = vmatpush1.bf16.msra.mxu0 %v936
      %1092 = vmatprep.subr.bf16.mxu0 0
      %1093 = vmatpush1.bf16.msra.mxu0 %v937
      %1094 = vmatprep.subr.bf16.mxu0 0
      %1095 = vmatpush1.bf16.msra.mxu0 %v938
      %1096 = vmatprep.subr.bf16.mxu0 0
      %1097 = vmatpush1.bf16.msra.mxu0 %v939
      %1098 = vmatprep.subr.bf16.mxu0 0
      %1099 = vmatpush1.bf16.msra.mxu0 %v940
      %1100 = vmatprep.subr.bf16.mxu0 0
      %1101 = vmatpush1.bf16.msra.mxu0 %v941
      %1102 = vmatprep.mubr.bf16.mxu0 %v567
      %1103 = vmatmul.mubr.bf16.gmra.mrb[0].mxu0 %v566
      %v1104 = vpop.f32.mrb[0].mxu0
      %v1105 = vadd.f32 0.0, %v1104
      %v1106 = vpop.f32.mrb[0].mxu0
      %v1107 = vpop.f32.mrb[0].mxu0
      %v1108 = vadd.f32 0.0, %v1107
      %v1109 = vpop.f32.mrb[0].mxu0
      %1110 = vmatprep.mubr.bf16.mxu0 %v576
      %1111 = vmatmul.mubr.bf16.gmra.mrb[0].mxu0 %v575
      %v1112 = vpop.f32.mrb[0].mxu0
      %v1113 = vadd.f32 0.0, %v1112
      %v1114 = vpop.f32.mrb[0].mxu0
      %v1115 = vpop.f32.mrb[0].mxu0
      %v1116 = vadd.f32 0.0, %v1115
      %v1117 = vpop.f32.mrb[0].mxu0
      %1118 = vmatprep.mubr.bf16.mxu0 %v585
      %1119 = vmatmul.mubr.bf16.gmra.mrb[0].mxu0 %v584
      %v1120 = vpop.f32.mrb[0].mxu0
      %v1121 = vadd.f32 0.0, %v1120
      %v1122 = vpop.f32.mrb[0].mxu0
      %v1123 = vpop.f32.mrb[0].mxu0
      %v1124 = vadd.f32 0.0, %v1123
      %v1125 = vpop.f32.mrb[0].mxu0
      %1126 = vmatprep.mubr.bf16.mxu0 %v594
      %1127 = vmatmul.mubr.bf16.gmra.mrb[0].mxu0 %v593
      %v1128 = vpop.f32.mrb[0].mxu0
      %v1129 = vadd.f32 0.0, %v1128
      %v1130 = vpop.f32.mrb[0].mxu0
      %v1131 = vpop.f32.mrb[0].mxu0
      %v1132 = vadd.f32 0.0, %v1131
      %v1133 = vpop.f32.mrb[0].mxu0
      %1134 = vdwg.mxu0
      %1135 = vmatprep.subr.bf16.mxu0 0
      %1136 = vmatpush1.bf16.msra.mxu0 %v942
      %1137 = vmatprep.subr.bf16.mxu0 0
      %1138 = vmatpush1.bf16.msra.mxu0 %v943
      %1139 = vmatprep.subr.bf16.mxu0 0
      %1140 = vmatpush1.bf16.msra.mxu0 %v944
      %1141 = vmatprep.subr.bf16.mxu0 0
      %1142 = vmatpush1.bf16.msra.mxu0 %v945
      %1143 = vmatprep.subr.bf16.mxu0 0
      %1144 = vmatpush1.bf16.msra.mxu0 %v946
      %1145 = vmatprep.subr.bf16.mxu0 0
      %1146 = vmatpush1.bf16.msra.mxu0 %v947
      %1147 = vmatprep.subr.bf16.mxu0 0
      %1148 = vmatpush1.bf16.msra.mxu0 %v948
      %1149 = vmatprep.subr.bf16.mxu0 0
      %1150 = vmatpush1.bf16.msra.mxu0 %v949
      %1151 = vmatprep.subr.bf16.mxu0 0
      %1152 = vmatpush1.bf16.msra.mxu0 %v950
      %1153 = vmatprep.subr.bf16.mxu0 0
      %1154 = vmatpush1.bf16.msra.mxu0 %v951
      %1155 = vmatprep.subr.bf16.mxu0 0
      %1156 = vmatpush1.bf16.msra.mxu0 %v952
      %1157 = vmatprep.subr.bf16.mxu0 0
      %1158 = vmatpush1.bf16.msra.mxu0 %v953
      %1159 = vmatprep.subr.bf16.mxu0 0
      %1160 = vmatpush1.bf16.msra.mxu0 %v954
      %1161 = vmatprep.subr.bf16.mxu0 0
      %1162 = vmatpush1.bf16.msra.mxu0 %v955
      %1163 = vmatprep.subr.bf16.mxu0 0
      %1164 = vmatpush1.bf16.msra.mxu0 %v956
      %1165 = vmatprep.subr.bf16.mxu0 0
      %1166 = vmatpush1.bf16.msra.mxu0 %v957
      %1167 = vmatprep.mubr.bf16.mxu0 %v569
      %1168 = vmatmul.mubr.bf16.gmra.mrb[0].mxu0 %v568
      %v1169 = vpop.f32.mrb[0].mxu0
      %v1170 = vadd.f32 %v1105, %v1169
      %v1171 = vpop.f32.mrb[0].mxu0
      %v1172 = vpop.f32.mrb[0].mxu0
      %v1173 = vadd.f32 %v1108, %v1172
      %v1174 = vpop.f32.mrb[0].mxu0
      %1175 = vmatprep.mubr.bf16.mxu0 %v578
      %1176 = vmatmul.mubr.bf16.gmra.mrb[0].mxu0 %v577
      %v1177 = vpop.f32.mrb[0].mxu0
      %v1178 = vadd.f32 %v1113, %v1177
      %v1179 = vpop.f32.mrb[0].mxu0
      %v1180 = vpop.f32.mrb[0].mxu0
      %v1181 = vadd.f32 %v1116, %v1180
      %v1182 = vpop.f32.mrb[0].mxu0
      %1183 = vmatprep.mubr.bf16.mxu0 %v587
      %1184 = vmatmul.mubr.bf16.gmra.mrb[0].mxu0 %v586
      %v1185 = vpop.f32.mrb[0].mxu0
      %v1186 = vadd.f32 %v1121, %v1185
      %v1187 = vpop.f32.mrb[0].mxu0
      %v1188 = vpop.f32.mrb[0].mxu0
      %v1189 = vadd.f32 %v1124, %v1188
      %v1190 = vpop.f32.mrb[0].mxu0
      %1191 = vmatprep.mubr.bf16.mxu0 %v596
      %1192 = vmatmul.mubr.bf16.gmra.mrb[0].mxu0 %v595
      %v1193 = vpop.f32.mrb[0].mxu0
      %v1194 = vadd.f32 %v1129, %v1193
      %v1195 = vpop.f32.mrb[0].mxu0
      %v1196 = vpop.f32.mrb[0].mxu0
      %v1197 = vadd.f32 %v1132, %v1196
      %v1198 = vpop.f32.mrb[0].mxu0
      %1199 = vdwg.mxu0
      %1200 = vmatprep.subr.bf16.mxu0 0
      %1201 = vmatpush1.bf16.msra.mxu0 %v958
      %1202 = vmatprep.subr.bf16.mxu0 0
      %1203 = vmatpush1.bf16.msra.mxu0 %v959
      %1204 = vmatprep.subr.bf16.mxu0 0
      %1205 = vmatpush1.bf16.msra.mxu0 %v960
      %1206 = vmatprep.subr.bf16.mxu0 0
      %1207 = vmatpush1.bf16.msra.mxu0 %v961
      %1208 = vmatprep.subr.bf16.mxu0 0
      %1209 = vmatpush1.bf16.msra.mxu0 %v962
      %1210 = vmatprep.subr.bf16.mxu0 0
      %1211 = vmatpush1.bf16.msra.mxu0 %v963
      %1212 = vmatprep.subr.bf16.mxu0 0
      %1213 = vmatpush1.bf16.msra.mxu0 %v964
      %1214 = vmatprep.subr.bf16.mxu0 0
      %1215 = vmatpush1.bf16.msra.mxu0 %v965
      %1216 = vmatprep.subr.bf16.mxu0 0
      %1217 = vmatpush1.bf16.msra.mxu0 %v966
      %1218 = vmatprep.subr.bf16.mxu0 0
      %1219 = vmatpush1.bf16.msra.mxu0 %v967
      %1220 = vmatprep.subr.bf16.mxu0 0
      %1221 = vmatpush1.bf16.msra.mxu0 %v968
      %1222 = vmatprep.subr.bf16.mxu0 0
      %1223 = vmatpush1.bf16.msra.mxu0 %v969
      %1224 = vmatprep.subr.bf16.mxu0 0
      %1225 = vmatpush1.bf16.msra.mxu0 %v970
      %1226 = vmatprep.subr.bf16.mxu0 0
      %1227 = vmatpush1.bf16.msra.mxu0 %v971
      %1228 = vmatprep.subr.bf16.mxu0 0
      %1229 = vmatpush1.bf16.msra.mxu0 %v972
      %1230 = vmatprep.subr.bf16.mxu0 0
      %1231 = vmatpush1.bf16.msra.mxu0 %v973
      %1232 = vmatprep.mubr.bf16.mxu0 %v571
      %1233 = vmatmul.mubr.bf16.gmra.mrb[0].mxu0 %v570
      %v1234 = vpop.f32.mrb[0].mxu0
      %v1235 = vadd.f32 %v1170, %v1234
      %v1236 = vpop.f32.mrb[0].mxu0
      %v1237 = vpop.f32.mrb[0].mxu0
      %v1238 = vadd.f32 %v1173, %v1237
      %v1239 = vpop.f32.mrb[0].mxu0
      %1240 = vmatprep.mubr.bf16.mxu0 %v580
      %1241 = vmatmul.mubr.bf16.gmra.mrb[0].mxu0 %v579
      %v1242 = vpop.f32.mrb[0].mxu0
      %v1243 = vadd.f32 %v1178, %v1242
      %v1244 = vpop.f32.mrb[0].mxu0
      %v1245 = vpop.f32.mrb[0].mxu0
      %v1246 = vadd.f32 %v1181, %v1245
      %v1247 = vpop.f32.mrb[0].mxu0
      %1248 = vmatprep.mubr.bf16.mxu0 %v589
      %1249 = vmatmul.mubr.bf16.gmra.mrb[0].mxu0 %v588
      %v1250 = vpop.f32.mrb[0].mxu0
      %v1251 = vadd.f32 %v1186, %v1250
      %v1252 = vpop.f32.mrb[0].mxu0
      %v1253 = vpop.f32.mrb[0].mxu0
      %v1254 = vadd.f32 %v1189, %v1253
      %v1255 = vpop.f32.mrb[0].mxu0
      %1256 = vmatprep.mubr.bf16.mxu0 %v598
      %1257 = vmatmul.mubr.bf16.gmra.mrb[0].mxu0 %v597
      %v1258 = vpop.f32.mrb[0].mxu0
      %v1259 = vadd.f32 %v1194, %v1258
      %v1260 = vpop.f32.mrb[0].mxu0
      %v1261 = vpop.f32.mrb[0].mxu0
      %v1262 = vadd.f32 %v1197, %v1261
      %v1263 = vpop.f32.mrb[0].mxu0
      %1264 = vdwg.mxu0
      %1265 = vmatprep.subr.bf16.mxu0 0
      %1266 = vmatpush1.bf16.msra.mxu0 %v974
      %1267 = vmatprep.subr.bf16.mxu0 0
      %1268 = vmatpush1.bf16.msra.mxu0 %v975
      %1269 = vmatprep.subr.bf16.mxu0 0
      %1270 = vmatpush1.bf16.msra.mxu0 %v976
      %1271 = vmatprep.subr.bf16.mxu0 0
      %1272 = vmatpush1.bf16.msra.mxu0 %v977
      %1273 = vmatprep.subr.bf16.mxu0 0
      %1274 = vmatpush1.bf16.msra.mxu0 %v978
      %1275 = vmatprep.subr.bf16.mxu0 0
      %1276 = vmatpush1.bf16.msra.mxu0 %v979
      %1277 = vmatprep.subr.bf16.mxu0 0
      %1278 = vmatpush1.bf16.msra.mxu0 %v980
      %1279 = vmatprep.subr.bf16.mxu0 0
      %1280 = vmatpush1.bf16.msra.mxu0 %v981
      %1281 = vmatprep.subr.bf16.mxu0 0
      %1282 = vmatpush1.bf16.msra.mxu0 %v982
      %1283 = vmatprep.subr.bf16.mxu0 0
      %1284 = vmatpush1.bf16.msra.mxu0 %v983
      %1285 = vmatprep.subr.bf16.mxu0 0
      %1286 = vmatpush1.bf16.msra.mxu0 %v984
      %1287 = vmatprep.subr.bf16.mxu0 0
      %1288 = vmatpush1.bf16.msra.mxu0 %v985
      %1289 = vmatprep.subr.bf16.mxu0 0
      %1290 = vmatpush1.bf16.msra.mxu0 %v986
      %1291 = vmatprep.subr.bf16.mxu0 0
      %1292 = vmatpush1.bf16.msra.mxu0 %v987
      %1293 = vmatprep.subr.bf16.mxu0 0
      %1294 = vmatpush1.bf16.msra.mxu0 %v988
      %1295 = vmatprep.subr.bf16.mxu0 0
      %1296 = vmatpush1.bf16.msra.mxu0 %v989
      %1297 = vmatprep.mubr.bf16.mxu0 %v573
      %1298 = vmatmul.mubr.bf16.gmra.mrb[0].mxu0 %v572
      %v1299 = vpop.f32.mrb[0].mxu0
      %v1300 = vadd.f32 %v1235, %v1299
      %v1301 = vpop.f32.mrb[0].mxu0
      %v1302 = vpop.f32.mrb[0].mxu0
      %v1303 = vadd.f32 %v1238, %v1302
      %v1304 = vpop.f32.mrb[0].mxu0
      %1305 = vmatprep.mubr.bf16.mxu0 %v582
      %1306 = vmatmul.mubr.bf16.gmra.mrb[0].mxu0 %v581
      %v1307 = vpop.f32.mrb[0].mxu0
      %v1308 = vadd.f32 %v1243, %v1307
      %v1309 = vpop.f32.mrb[0].mxu0
      %v1310 = vpop.f32.mrb[0].mxu0
      %v1311 = vadd.f32 %v1246, %v1310
      %v1312 = vpop.f32.mrb[0].mxu0
      %1313 = vmatprep.mubr.bf16.mxu0 %v591
      %1314 = vmatmul.mubr.bf16.gmra.mrb[0].mxu0 %v590
      %v1315 = vpop.f32.mrb[0].mxu0
      %v1316 = vadd.f32 %v1251, %v1315
      %v1317 = vpop.f32.mrb[0].mxu0
      %v1318 = vpop.f32.mrb[0].mxu0
      %v1319 = vadd.f32 %v1254, %v1318
      %v1320 = vpop.f32.mrb[0].mxu0
      %1321 = vmatprep.mubr.bf16.mxu0 %v600
      %1322 = vmatmul.mubr.bf16.gmra.mrb[0].mxu0 %v599
      %v1323 = vpop.f32.mrb[0].mxu0
      %v1324 = vadd.f32 %v1259, %v1323
      %v1325 = vpop.f32.mrb[0].mxu0
      %v1326 = vpop.f32.mrb[0].mxu0
      %v1327 = vadd.f32 %v1262, %v1326
      %v1328 = vpop.f32.mrb[0].mxu0
      %1329 = vdwg.mxu0
      %1330 = vmatprep.subr.bf16.mxu0 0
      %1331 = vmatpush1.bf16.msra.mxu0 %v990
      %1332 = vmatprep.subr.bf16.mxu0 0
      %1333 = vmatpush1.bf16.msra.mxu0 %v991
      %1334 = vmatprep.subr.bf16.mxu0 0
      %1335 = vmatpush1.bf16.msra.mxu0 %v992
      %1336 = vmatprep.subr.bf16.mxu0 0
      %1337 = vmatpush1.bf16.msra.mxu0 %v993
      %1338 = vmatprep.subr.bf16.mxu0 0
      %1339 = vmatpush1.bf16.msra.mxu0 %v994
      %1340 = vmatprep.subr.bf16.mxu0 0
      %1341 = vmatpush1.bf16.msra.mxu0 %v995
      %1342 = vmatprep.subr.bf16.mxu0 0
      %1343 = vmatpush1.bf16.msra.mxu0 %v996
      %1344 = vmatprep.subr.bf16.mxu0 0
      %1345 = vmatpush1.bf16.msra.mxu0 %v997
      %1346 = vmatprep.subr.bf16.mxu0 0
      %1347 = vmatpush1.bf16.msra.mxu0 0
      %1348 = vmatprep.subr.bf16.mxu0 0
      %1349 = vmatpush1.bf16.msra.mxu0 0
      %1350 = vmatprep.subr.bf16.mxu0 0
      %1351 = vmatpush1.bf16.msra.mxu0 0
      %1352 = vmatprep.subr.bf16.mxu0 0
      %1353 = vmatpush1.bf16.msra.mxu0 0
      %1354 = vmatprep.subr.bf16.mxu0 0
      %1355 = vmatpush1.bf16.msra.mxu0 0
      %1356 = vmatprep.subr.bf16.mxu0 0
      %1357 = vmatpush1.bf16.msra.mxu0 0
      %1358 = vmatprep.subr.bf16.mxu0 0
      %1359 = vmatpush1.bf16.msra.mxu0 0
      %1360 = vmatprep.subr.bf16.mxu0 0
      %1361 = vmatpush1.bf16.msra.mxu0 0
      %1362 = vmatprep.mubr.bf16.mxu0 0
      %1363 = vmatmul.mubr.bf16.gmra.mrb[0].mxu0 %v574
      %v1364 = vpop.f32.mrb[0].mxu0
      %v1365 = vadd.f32 %v1300, %v1364
      %v1366 = vpop.f32.mrb[0].mxu0
      %v1367 = vpop.f32.mrb[0].mxu0
      %v1368 = vadd.f32 %v1303, %v1367
      %v1369 = vpop.f32.mrb[0].mxu0
      %1370 = vmatprep.mubr.bf16.mxu0 0
      %1371 = vmatmul.mubr.bf16.gmra.mrb[0].mxu0 %v583
      %v1372 = vpop.f32.mrb[0].mxu0
      %v1373 = vadd.f32 %v1308, %v1372
      %v1374 = vpop.f32.mrb[0].mxu0
      %v1375 = vpop.f32.mrb[0].mxu0
      %v1376 = vadd.f32 %v1311, %v1375
      %v1377 = vpop.f32.mrb[0].mxu0
      %1378 = vmatprep.mubr.bf16.mxu0 0
      %1379 = vmatmul.mubr.bf16.gmra.mrb[0].mxu0 %v592
      %v1380 = vpop.f32.mrb[0].mxu0
      %v1381 = vadd.f32 %v1316, %v1380
      %v1382 = vpop.f32.mrb[0].mxu0
      %v1383 = vpop.f32.mrb[0].mxu0
      %v1384 = vadd.f32 %v1319, %v1383
      %v1385 = vpop.f32.mrb[0].mxu0
      %1386 = vmatprep.mubr.bf16.mxu0 0
      %1387 = vmatmul.mubr.bf16.gmra.mrb[0].mxu0 %v601
      %v1388 = vpop.f32.mrb[0].mxu0
      %v1389 = vadd.f32 %v1324, %v1388
      %v1390 = vpop.f32.mrb[0].mxu0
      %v1391 = vpop.f32.mrb[0].mxu0
      %v1392 = vadd.f32 %v1327, %v1391
      %v1393 = vpop.f32.mrb[0].mxu0
      %1394 = vdwg.mxu0
      %v1395 = vadd.f32 %v262, %v1365
      %v1396 = vadd.f32 %v263, %v1368
      %v1397 = vadd.f32 %v264, %v1373
      %v1398 = vadd.f32 %v265, %v1376
      %v1399 = vadd.f32 %v266, %v1381
      %v1400 = vadd.f32 %v267, %v1384
      %v1401 = vadd.f32 %v268, %v1389
      %v1402 = vadd.f32 %v269, %v1392
      %1403 = vst [vmem:[#allocation2] sm:$0xff] %v1395
      %1404 = vst [vmem:[#allocation2 + $0x8] sm:$0xff] %v1396
      %1405 = vst [vmem:[#allocation2 + $0x10] sm:$0xff] %v1397
      %1406 = vst [vmem:[#allocation2 + $0x18] sm:$0xff] %v1398
      %1407 = vst [vmem:[#allocation2 + $0x20] sm:$0xff] %v1399
      %1408 = vst [vmem:[#allocation2 + $0x28] sm:$0xff] %v1400
      %1409 = vst [vmem:[#allocation2 + $0x30] sm:$0xff] %v1401
      %1410 = vst [vmem:[#allocation2 + $0x38] sm:$0xff] %v1402
      // Predicated region
      $region37: #{network_block_apply.5} parent=31 // pred_check
        %p1411 = pneg %p250
      $region38: #{network_block_apply.5} parent=31 // pred_check_branch
        %1413 = sbr.rel (%p1411) target = $region40
      $region39: #{network_block_apply.5} parent=31 // pred_region
        %v1414 = vld [vmem:[#allocation2] sm:$0xff]
        %v1415 = vld [vmem:[#allocation2 + $0x8] sm:$0xff]
        %v1416 = vld [vmem:[#allocation2 + $0x10] sm:$0xff]
        %v1417 = vld [vmem:[#allocation2 + $0x18] sm:$0xff]
        %v1418 = vld [vmem:[#allocation2 + $0x20] sm:$0xff]
        %v1419 = vld [vmem:[#allocation2 + $0x28] sm:$0xff]
        %v1420 = vld [vmem:[#allocation2 + $0x30] sm:$0xff]
        %v1421 = vld [vmem:[#allocation2 + $0x38] sm:$0xff]
        %v1422 = vld [vmem:[%s241] sm:$0xf]
        %v1423 = vld [vmem:[%s241 + $0x4] sm:$0xf]
        %v1424 = vld [vmem:[%s241 + $0x8] sm:$0xf]
        %v1425 = vld [vmem:[%s241 + $0xc] sm:$0xf]
        %v1426 = vld [vmem:[%s241 + $0x10] sm:$0xf]
        %v1427 = vld [vmem:[%s241 + $0x14] sm:$0xf]
        %v1428 = vld [vmem:[%s241 + $0x18] sm:$0xf]
        %v1429 = vld [vmem:[%s241 + $0x1c] sm:$0xf]
        %v1430 = vunpack.c.l.bf16 %v1422
        %v1431 = vunpack.c.l.bf16 %v1423
        %v1432 = vunpack.c.l.bf16 %v1424
        %v1433 = vunpack.c.l.bf16 %v1425
        %v1434 = vunpack.c.l.bf16 %v1426
        %v1435 = vunpack.c.l.bf16 %v1427
        %v1436 = vunpack.c.l.bf16 %v1428
        %v1437 = vunpack.c.l.bf16 %v1429
        %v1438 = vadd.f32 %v1414, %v1430
        %v1439 = vadd.f32 %v1415, %v1431
        %v1440 = vadd.f32 %v1416, %v1432
        %v1441 = vadd.f32 %v1417, %v1433
        %v1442 = vadd.f32 %v1418, %v1434
        %v1443 = vadd.f32 %v1419, %v1435
        %v1444 = vadd.f32 %v1420, %v1436
        %v1445 = vadd.f32 %v1421, %v1437
        %1446 = vst [vmem:[%s247] sm:$0xff] %v1438
        %1447 = vst [vmem:[%s247 + $0x8] sm:$0xff] %v1439
        %1448 = vst [vmem:[%s247 + $0x10] sm:$0xff] %v1440
        %1449 = vst [vmem:[%s247 + $0x18] sm:$0xff] %v1441
        %1450 = vst [vmem:[%s247 + $0x20] sm:$0xff] %v1442
        %1451 = vst [vmem:[%s247 + $0x28] sm:$0xff] %v1443
        %1452 = vst [vmem:[%s247 + $0x30] sm:$0xff] %v1444
        %1453 = vst [vmem:[%s247 + $0x38] sm:$0xff] %v1445
      $region40: #{network_block_apply.5} parent=31 // pred_fallthru
        _
      %s1454 = smul.u32 8, %s18
      %p1455 = scmp.lt.s32.totalorder %s1454, 15
      %s1456 = scalar_select %p1455, %s1454, 15
      %s1457 = smul.addr %s1456, 8
      %s1458 = scalar_lea.vmem %s3, %s1457
      // Predicated region
      $region41: #{network_block_apply.5} parent=31 // pred_check
        %p1459 = pneg %p124
      $region42: #{network_block_apply.5} parent=31 // pred_check_branch
        %1461 = sbr.rel (%p1459) target = $region44
      $region43: #{network_block_apply.5} parent=31 // pred_region
        %s1462 = smul.u32 8, %s18
      $region44: #{network_block_apply.5} parent=31 // pred_fallthru
        _
    $region32: #{network_block_apply.5} parent=5 // pred_fallthru
      _
    %p1463 = scmp.le.s32.totalorder 2, %s9
    // Predicated region
    $region45: #{network_block_apply.5} parent=5 // pred_check
      %p1464 = pneg %p1463
    $region46: #{network_block_apply.5} parent=5 // pred_check_branch
      %1466 = sbr.rel (%p1464) target = $region48
    $region47: #{network_block_apply.5} parent=5 // pred_region
      %s1467 = ssub.s32 %s9, 2
      // Predicated region
      $region49: #{network_block_apply.5} parent=47 // pred_check
        %p1468 = pneg %p130
      $region50: #{network_block_apply.5} parent=47 // pred_check_branch
        %1470 = sbr.rel (%p1468) target = $region52
      $region51: #{network_block_apply.5} parent=47 // pred_region
        %s1471 = smul.u32 8, %s20
        %p1472 = scmp.lt.s32.totalorder %s1471, 15
        %s1473 = scalar_select %p1472, %s1471, 15
        %s1474 = smul.addr %s1473, 8
        %s1475 = scalar_lea.vmem %s3, %s1474
      $region52: #{network_block_apply.5} parent=47 // pred_fallthru
        _
    $region48: #{network_block_apply.5} parent=5 // pred_fallthru
      _
  $region6: #{network_block_apply.5} parent=0 // loop_footer
    %s13 = sadd.s32 1, %s9
  $region7: #{network_block_apply.5} parent=0 // loop_footer_branch
    %8 = sbr.rel target = $region3
  $region8: #{network_block_apply.5} parent=0 // loop_exit
    _

// kernel: network_block_apply.4
$region0: #{network_block_apply.4}
  #allocation0 [shape = 'u32[]', space=smem, size = 0x4, offset = 0x4, fixed_abs, tag = 'smem constant byte address 0x4 - core index']
  #allocation1 [shape = 'u32[144,128]{1,0:T(1,128)}', space=vmem, size = 0x12000, scoped, tag = 'internal scratch']
  #allocation2 [shape = 'f32[64,128]{1,0:T(8,128)}', space=vmem, size = 0x8000, scoped, tag = 'scratch operand']
  %s0 = inlined_call_operand.vmem [shape: bf16[128,1152], index: 0, kind: input, shape index: {}]
  %s1 = inlined_call_operand.vmem [shape: bf16[1152,128], index: 1, kind: input, shape index: {}]
  %s2 = inlined_call_operand.vmem [shape: f32[1,128], index: 2, kind: input, shape index: {}]
  %s3 = inlined_call_operand.vmem [shape: f32[1,128], index: 3, kind: input, shape index: {}]
  %s4 = inlined_call_operand.vmem [shape: bf16[128,128], index: 4, kind: input, shape index: {}]
  %s5 = inlined_call_operand.vmem [shape: bf16[128,128], index: 5, kind: output, shape index: {0}]
  %s6 = inlined_call_operand.vmem [shape: bf16[128,128], index: 6, kind: output, shape index: {1}]
  %7 = xla_tuple %s5, %s6
  %s8 = sld [smem:[#allocation0]]
  $region69: #{network_block_apply.4} parent=0
    _
  %s10 = ssub.s32 1, %s8
  %s11 = scalar_select 0, %s10, %s8
  loop: start=0, step=1, limit=4
  $region2: #{network_block_apply.4} parent=0 // loop_pre_header
    _
  $region3: #{network_block_apply.4} parent=0 // loop_header
    %s13 = sphi 0, %s17
    %p14 = scmp.ge.s32.totalorder %s13, 4
    %s20 = sphi 0, %s32
    %s21 = sphi 0, %s28
    %s22 = sphi 0, %s20
    %s23 = sphi 0, %s21
    %s24 = sphi 0, %s22
    %s25 = sphi 0, %s23
    %s37 = sphi 0, %s39
    %s40 = sphi 0, %s37
    %s41 = sphi 0, %s40
    %s57 = sphi 0, %s41
    %s63 = sphi 0, %s65
    %s66 = sphi 0, %s63
    %s67 = sphi 0, %s66
    %s83 = sphi 0, %s67
    %s87 = sphi 0, %s87
    %s89 = sphi 0, %s87
    %s90 = sphi 0, %s89
    %s104 = sphi 0, %s90
    %s108 = sphi 0, %s108
    %s110 = sphi 0, %s108
    %s111 = sphi 0, %s110
    %s125 = sphi 0, %s111
    %s129 = sphi 0, %s129
    %s131 = sphi 0, %s129
    %s132 = sphi 0, %s131
    %s146 = sphi 0, %s132
    %s152 = sphi 0, %s154
    %s155 = sphi 0, %s152
    %s156 = sphi 0, %s155
    %s172 = sphi 0, %s156
    %s178 = sphi 0, %s180
    %s181 = sphi 0, %s178
    %s182 = sphi 0, %s181
    %s198 = sphi 0, %s182
  $region4: #{network_block_apply.4} parent=0 // loop_header_branch
    %16 = sbr.rel (%p14) target = $region8
  $region5: #{network_block_apply.4} parent=0 // loop_body
    %s18 = ssub.s32 %s13, 1
    %s19 = ssub.s32 %s13, 2
    %s26 = sadd.s32 1, %s21
    %p27 = scmp.ge.s32.totalorder %s26, 1
    %s28 = scalar_select %p27, 0, %s26
    %s29 = sadd.s32 1, %s20
    %s30 = scalar_select %p27, %s29, %s20
    %p31 = scmp.ge.s32.totalorder %s30, 2
    %s32 = scalar_select %p31, 0, %s30
    %s33 = ssub.s32 %s20, %s32
    %s34 = ssub.s32 %s21, %s28
    %s35 = sor.u32 %s33, %s34
    %p36 = scmp.eq.s32.totalorder %s35, 0
    %s38 = sadd.s32 %s37, 1
    %s39 = scalar_select %p36, %s37, %s38
    %p42 = pneg %p36
    %p43 = scmp.eq.s32.totalorder %s13, 1
    %p44 = por %p42, %p43
    %p45 = scmp.ne.s32.totalorder %s37, %s40
    %p46 = scmp.eq.s32.totalorder %s13, 0
    %p47 = por %p45, %p46
    %p48 = scmp.ne.s32.totalorder %s37, %s40
    %p49 = scmp.eq.s32.totalorder %s18, 1
    %p50 = por %p48, %p49
    %p51 = scmp.ne.s32.totalorder %s40, %s41
    %p52 = scmp.eq.s32.totalorder %s18, 0
    %p53 = por %p51, %p52
    %p54 = scmp.ne.s32.totalorder %s40, %s41
    %p55 = scmp.eq.s32.totalorder %s19, 1
    %p56 = por %p54, %p55
    %p58 = scmp.ne.s32.totalorder %s41, %s57
    %p59 = scmp.eq.s32.totalorder %s19, 0
    %p60 = por %p58, %p59
    %s61 = ssub.s32 %s21, %s28
    %p62 = scmp.eq.s32.totalorder %s61, 0
    %s64 = sadd.s32 %s63, 1
    %s65 = scalar_select %p62, %s63, %s64
    %p68 = pneg %p62
    %p69 = scmp.eq.s32.totalorder %s13, 1
    %p70 = por %p68, %p69
    %p71 = scmp.ne.s32.totalorder %s63, %s66
    %p72 = scmp.eq.s32.totalorder %s13, 0
    %p73 = por %p71, %p72
    %p74 = scmp.ne.s32.totalorder %s63, %s66
    %p75 = scmp.eq.s32.totalorder %s18, 1
    %p76 = por %p74, %p75
    %p77 = scmp.ne.s32.totalorder %s66, %s67
    %p78 = scmp.eq.s32.totalorder %s18, 0
    %p79 = por %p77, %p78
    %p80 = scmp.ne.s32.totalorder %s66, %s67
    %p81 = scmp.eq.s32.totalorder %s19, 1
    %p82 = por %p80, %p81
    %p84 = scmp.ne.s32.totalorder %s67, %s83
    %p85 = scmp.eq.s32.totalorder %s19, 0
    %p86 = por %p84, %p85
    %s88 = sadd.s32 %s87, 1
    %p91 = scmp.eq.s32.totalorder %s13, 1
    %p92 = scmp.ne.s32.totalorder %s87, %s89
    %p93 = scmp.eq.s32.totalorder %s13, 0
    %p94 = por %p92, %p93
    %p95 = scmp.ne.s32.totalorder %s87, %s89
    %p96 = scmp.eq.s32.totalorder %s18, 1
    %p97 = por %p95, %p96
    %p98 = scmp.ne.s32.totalorder %s89, %s90
    %p99 = scmp.eq.s32.totalorder %s18, 0
    %p100 = por %p98, %p99
    %p101 = scmp.ne.s32.totalorder %s89, %s90
    %p102 = scmp.eq.s32.totalorder %s19, 1
    %p103 = por %p101, %p102
    %p105 = scmp.ne.s32.totalorder %s90, %s104
    %p106 = scmp.eq.s32.totalorder %s19, 0
    %p107 = por %p105, %p106
    %s109 = sadd.s32 %s108, 1
    %p112 = scmp.eq.s32.totalorder %s13, 1
    %p113 = scmp.ne.s32.totalorder %s108, %s110
    %p114 = scmp.eq.s32.totalorder %s13, 0
    %p115 = por %p113, %p114
    %p116 = scmp.ne.s32.totalorder %s108, %s110
    %p117 = scmp.eq.s32.totalorder %s18, 1
    %p118 = por %p116, %p117
    %p119 = scmp.ne.s32.totalorder %s110, %s111
    %p120 = scmp.eq.s32.totalorder %s18, 0
    %p121 = por %p119, %p120
    %p122 = scmp.ne.s32.totalorder %s110, %s111
    %p123 = scmp.eq.s32.totalorder %s19, 1
    %p124 = por %p122, %p123
    %p126 = scmp.ne.s32.totalorder %s111, %s125
    %p127 = scmp.eq.s32.totalorder %s19, 0
    %p128 = por %p126, %p127
    %s130 = sadd.s32 %s129, 1
    %p133 = scmp.eq.s32.totalorder %s13, 1
    %p134 = scmp.ne.s32.totalorder %s129, %s131
    %p135 = scmp.eq.s32.totalorder %s13, 0
    %p136 = por %p134, %p135
    %p137 = scmp.ne.s32.totalorder %s129, %s131
    %p138 = scmp.eq.s32.totalorder %s18, 1
    %p139 = por %p137, %p138
    %p140 = scmp.ne.s32.totalorder %s131, %s132
    %p141 = scmp.eq.s32.totalorder %s18, 0
    %p142 = por %p140, %p141
    %p143 = scmp.ne.s32.totalorder %s131, %s132
    %p144 = scmp.eq.s32.totalorder %s19, 1
    %p145 = por %p143, %p144
    %p147 = scmp.ne.s32.totalorder %s132, %s146
    %p148 = scmp.eq.s32.totalorder %s19, 0
    %p149 = por %p147, %p148
    %s150 = ssub.s32 %s20, %s32
    %p151 = scmp.eq.s32.totalorder %s150, 0
    %s153 = sadd.s32 %s152, 1
    %s154 = scalar_select %p151, %s152, %s153
    %p157 = pneg %p151
    %p158 = scmp.eq.s32.totalorder %s13, 1
    %p159 = por %p157, %p158
    %p160 = scmp.ne.s32.totalorder %s152, %s155
    %p161 = scmp.eq.s32.totalorder %s13, 0
    %p162 = por %p160, %p161
    %p163 = scmp.ne.s32.totalorder %s152, %s155
    %p164 = scmp.eq.s32.totalorder %s18, 1
    %p165 = por %p163, %p164
    %p166 = scmp.ne.s32.totalorder %s155, %s156
    %p167 = scmp.eq.s32.totalorder %s18, 0
    %p168 = por %p166, %p167
    %p169 = scmp.ne.s32.totalorder %s155, %s156
    %p170 = scmp.eq.s32.totalorder %s19, 1
    %p171 = por %p169, %p170
    %p173 = scmp.ne.s32.totalorder %s156, %s172
    %p174 = scmp.eq.s32.totalorder %s19, 0
    %p175 = por %p173, %p174
    %s176 = ssub.s32 %s20, %s32
    %p177 = scmp.eq.s32.totalorder %s176, 0
    %s179 = sadd.s32 %s178, 1
    %s180 = scalar_select %p177, %s178, %s179
    %p183 = pneg %p177
    %p184 = scmp.eq.s32.totalorder %s13, 1
    %p185 = por %p183, %p184
    %p186 = scmp.ne.s32.totalorder %s178, %s181
    %p187 = scmp.eq.s32.totalorder %s13, 0
    %p188 = por %p186, %p187
    %p189 = scmp.ne.s32.totalorder %s178, %s181
    %p190 = scmp.eq.s32.totalorder %s18, 1
    %p191 = por %p189, %p190
    %p192 = scmp.ne.s32.totalorder %s181, %s182
    %p193 = scmp.eq.s32.totalorder %s18, 0
    %p194 = por %p192, %p193
    %p195 = scmp.ne.s32.totalorder %s181, %s182
    %p196 = scmp.eq.s32.totalorder %s19, 1
    %p197 = por %p195, %p196
    %p199 = scmp.ne.s32.totalorder %s182, %s198
    %p200 = scmp.eq.s32.totalorder %s19, 0
    %p201 = por %p199, %p200
    %p202 = scmp.le.s32.totalorder 1, %s13
    %p203 = scmp.lt.s32.totalorder %s13, 3
    %p204 = pnand %p202, %p203
    %p205 = pneg %p204
    // Predicated region
    $region9: #{network_block_apply.4} parent=5 // pred_check
      _
    $region10: #{network_block_apply.4} parent=5 // pred_check_branch
      %207 = sbr.rel (%p204) target = $region12
    $region11: #{network_block_apply.4} parent=5 // pred_region
      %s208 = ssub.s32 %s13, 1
      // Predicated region
      $region13: #{network_block_apply.4} parent=11 // pred_check
        %p209 = pneg %p79
      $region14: #{network_block_apply.4} parent=11 // pred_check_branch
        %211 = sbr.rel (%p209) target = $region16
      $region15: #{network_block_apply.4} parent=11 // pred_region
        %s212 = smul.u32 144, %s23
        %p213 = scmp.lt.s32.totalorder %s212, 143
        %s214 = scalar_select %p213, %s212, 143
        %s215 = smul.addr %s214, 4
        %s216 = scalar_lea.vmem %s1, %s215
        %s217 = smul.u32 144, %s23
      $region16: #{network_block_apply.4} parent=11 // pred_fallthru
        _
      // Predicated region
      $region17: #{network_block_apply.4} parent=11 // pred_check
        %p218 = pneg %p100
      $region18: #{network_block_apply.4} parent=11 // pred_check_branch
        %220 = sbr.rel (%p218) target = $region20
      $region19: #{network_block_apply.4} parent=11 // pred_region
        _
      $region20: #{network_block_apply.4} parent=11 // pred_fallthru
        _
      // Predicated region
      $region21: #{network_block_apply.4} parent=11 // pred_check
        %p221 = pneg %p121
      $region22: #{network_block_apply.4} parent=11 // pred_check_branch
        %223 = sbr.rel (%p221) target = $region24
      $region23: #{network_block_apply.4} parent=11 // pred_region
        _
      $region24: #{network_block_apply.4} parent=11 // pred_fallthru
        _
      // Predicated region
      $region25: #{network_block_apply.4} parent=11 // pred_check
        %p224 = pneg %p142
      $region26: #{network_block_apply.4} parent=11 // pred_check_branch
        %226 = sbr.rel (%p224) target = $region28
      $region27: #{network_block_apply.4} parent=11 // pred_region
        _
      $region28: #{network_block_apply.4} parent=11 // pred_fallthru
        _
    $region12: #{network_block_apply.4} parent=5 // pred_fallthru
      _
    %p227 = scmp.lt.s32.totalorder %s13, 2
    // Predicated region
    $region29: #{network_block_apply.4} parent=5 // pred_check
      %p228 = pneg %p227
    $region30: #{network_block_apply.4} parent=5 // pred_check_branch
      %230 = sbr.rel (%p228) target = $region32
    $region31: #{network_block_apply.4} parent=5 // pred_region
      // Predicated region
      $region33: #{network_block_apply.4} parent=31 // pred_check
        %p231 = pneg %p47
      $region34: #{network_block_apply.4} parent=31 // pred_check_branch
        %233 = sbr.rel (%p231) target = $region36
      $region35: #{network_block_apply.4} parent=31 // pred_region
        %s234 = smul.u32 8, %s20
        %s235 = smul.u32 9, %s21
        %p236 = scmp.lt.s32.totalorder %s234, 15
        %s237 = scalar_select %p236, %s234, 15
        %p238 = scmp.lt.s32.totalorder %s235, 8
        %s239 = scalar_select %p238, %s235, 8
        %s240 = smul.addr %s237, 9
        %s241 = sadd.s32 %s239, %s240
        %s242 = smul.addr %s241, 4
        %s243 = scalar_lea.vmem %s0, %s242
        %s244 = smul.u32 8, %s20
        %s245 = smul.u32 9, %s21
      $region36: #{network_block_apply.4} parent=31 // pred_fallthru
        _
    $region32: #{network_block_apply.4} parent=5 // pred_fallthru
      _
    %p246 = scmp.le.s32.totalorder 1, %s13
    %p247 = scmp.lt.s32.totalorder %s13, 3
    %p248 = pnand %p246, %p247
    %p249 = pneg %p248
    // Predicated region
    $region37: #{network_block_apply.4} parent=5 // pred_check
      _
    $region38: #{network_block_apply.4} parent=5 // pred_check_branch
      %251 = sbr.rel (%p248) target = $region40
    $region39: #{network_block_apply.4} parent=5 // pred_region
      %s252 = ssub.s32 %s13, 1
      %s253 = smul.u32 8, %s22
      %s254 = smul.u32 9, %s23
      %p255 = scmp.lt.s32.totalorder %s253, 15
      %s256 = scalar_select %p255, %s253, 15
      %p257 = scmp.lt.s32.totalorder %s254, 8
      %s258 = scalar_select %p257, %s254, 8
      %s259 = smul.addr %s256, 9
      %s260 = sadd.s32 %s258, %s259
      %s261 = smul.addr %s260, 4
      %s262 = scalar_lea.vmem %s0, %s261
      %p263 = pneg %p53
      %p264 = pneg %p50
      %s265 = smul.u32 144, %s23
      %p266 = scmp.lt.s32.totalorder %s265, 143
      %s267 = scalar_select %p266, %s265, 143
      %s268 = smul.addr %s267, 4
      %s269 = scalar_lea.vmem %s1, %s268
      %p270 = pneg %p79
      %p271 = pneg %p76
      %p272 = pneg %p100
      %p273 = pneg %p97
      %p274 = pneg %p121
      %p275 = pneg %p118
      %p276 = pneg %p142
      %p277 = pneg %p139
      %p278 = pneg %p168
      %p279 = pneg %p165
      %s280 = smul.u32 8, %s22
      %p281 = scmp.lt.s32.totalorder %s280, 15
      %s282 = scalar_select %p281, %s280, 15
      %s283 = smul.addr %s282, 4
      %s284 = scalar_lea.vmem %s5, %s283
      %p285 = pneg %p194
      %p286 = pneg %p191
      %s287 = smul.u32 8, %s22
      %p288 = scmp.lt.s32.totalorder %s287, 15
      %s289 = scalar_select %p288, %s287, 15
      %s290 = smul.addr %s289, 4
      %s291 = scalar_lea.vmem %s6, %s290
      %s292 = smul.u32 8, %s22
      %s293 = smul.u32 9, %s23
      %p294 = scmp.lt.s32.totalorder %s292, 15
      %s295 = scalar_select %p294, %s292, 15
      %p296 = scmp.lt.s32.totalorder %s293, 8
      %s297 = scalar_select %p296, %s293, 8
      %s298 = smul.addr %s295, 9
      %s299 = sadd.s32 %s297, %s298
      %s300 = smul.addr %s299, 4
      %s301 = scalar_lea.vmem %s0, %s300
      %s302 = smul.u32 8, %s22
      %s303 = smul.u32 9, %s23
      %s304 = smul.u32 144, %s23
      %p305 = scmp.lt.s32.totalorder %s304, 143
      %s306 = scalar_select %p305, %s304, 143
      %s307 = smul.addr %s306, 4
      %s308 = scalar_lea.vmem %s1, %s307
      %s309 = smul.u32 144, %s23
      %s310 = smul.u32 8, %s22
      %p311 = scmp.lt.s32.totalorder %s310, 15
      %s312 = scalar_select %p311, %s310, 15
      %s313 = smul.addr %s312, 4
      %s314 = scalar_lea.vmem %s5, %s313
      %s315 = smul.u32 8, %s22
      %s316 = smul.u32 8, %s22
      %p317 = scmp.lt.s32.totalorder %s316, 15
      %s318 = scalar_select %p317, %s316, 15
      %s319 = smul.addr %s318, 4
      %s320 = scalar_lea.vmem %s6, %s319
      %s321 = smul.u32 8, %s22
      %p323 = scmp.eq.s32.totalorder %s23, 0
      // Predicated region
      $region41: #{network_block_apply.4} parent=39 // pred_check
        %p324 = pneg %p323
      $region42: #{network_block_apply.4} parent=39 // pred_check_branch
        %326 = sbr.rel (%p324) target = $region44
      $region43: #{network_block_apply.4} parent=39 // pred_region
        %327 = vst [vmem:[#allocation2] sm:$0xff] 0.0
        %328 = vst [vmem:[#allocation2 + $0x8] sm:$0xff] 0.0
        %329 = vst [vmem:[#allocation2 + $0x10] sm:$0xff] 0.0
        %330 = vst [vmem:[#allocation2 + $0x18] sm:$0xff] 0.0
        %331 = vst [vmem:[#allocation2 + $0x20] sm:$0xff] 0.0
        %332 = vst [vmem:[#allocation2 + $0x28] sm:$0xff] 0.0
        %333 = vst [vmem:[#allocation2 + $0x30] sm:$0xff] 0.0
        %334 = vst [vmem:[#allocation2 + $0x38] sm:$0xff] 0.0
        %v335 = vld [vmem:[%s301] sm:$0xf]
        %v336 = vld [vmem:[%s301 + $0x24] sm:$0xf]
        %v337 = vld [vmem:[%s301 + $0x48] sm:$0xf]
        %v338 = vld [vmem:[%s301 + $0x6c] sm:$0xf]
        %v339 = vld [vmem:[%s301 + $0x90] sm:$0xf]
        %v340 = vld [vmem:[%s301 + $0xb4] sm:$0xf]
        %v341 = vld [vmem:[%s301 + $0xd8] sm:$0xf]
        %v342 = vld [vmem:[%s301 + $0xfc] sm:$0xf]
        %v343 = vld [vmem:[%s4] sm:$0xf]
        %v344 = vld [vmem:[%s4 + $0x4] sm:$0xf]
        %v345 = vld [vmem:[%s4 + $0x8] sm:$0xf]
        %v346 = vld [vmem:[%s4 + $0xc] sm:$0xf]
        %v347 = vld [vmem:[%s4 + $0x10] sm:$0xf]
        %v348 = vld [vmem:[%s4 + $0x14] sm:$0xf]
        %v349 = vld [vmem:[%s4 + $0x18] sm:$0xf]
        %v350 = vld [vmem:[%s4 + $0x1c] sm:$0xf]
        %v351 = vld [vmem:[%s4 + $0x20] sm:$0xf]
        %v352 = vld [vmem:[%s4 + $0x24] sm:$0xf]
        %v353 = vld [vmem:[%s4 + $0x28] sm:$0xf]
        %v354 = vld [vmem:[%s4 + $0x2c] sm:$0xf]
        %v355 = vld [vmem:[%s4 + $0x30] sm:$0xf]
        %v356 = vld [vmem:[%s4 + $0x34] sm:$0xf]
        %v357 = vld [vmem:[%s4 + $0x38] sm:$0xf]
        %v358 = vld [vmem:[%s4 + $0x3c] sm:$0xf]
        %v367 = vunpack.c.l.b16 %v335
        %v368 = vunpack.c.l.b16 %v336
        %v369 = vunpack.c.l.b16 %v337
        %v370 = vunpack.c.l.b16 %v338
        %v371 = vunpack.c.l.b16 %v339
        %v372 = vunpack.c.l.b16 %v340
        %v373 = vunpack.c.l.b16 %v341
        %v374 = vunpack.c.l.b16 %v342
        %v375 = vpack.c.b16 %v368, %v367
        %v376 = vpack.c.b16 %v370, %v369
        %v377 = vpack.c.b16 %v372, %v371
        %v378 = vpack.c.b16 %v374, %v373
        %v399 = vunpack.c.l.b16 %v343
        %v400 = vunpack.c.l.b16 %v344
        %v401 = vunpack.c.l.b16 %v345
        %v402 = vunpack.c.l.b16 %v346
        %v403 = vunpack.c.l.b16 %v347
        %v404 = vunpack.c.l.b16 %v348
        %v405 = vunpack.c.l.b16 %v349
        %v406 = vunpack.c.l.b16 %v350
        %v407 = vunpack.c.l.b16 %v351
        %v408 = vunpack.c.l.b16 %v352
        %v409 = vunpack.c.l.b16 %v353
        %v410 = vunpack.c.l.b16 %v354
        %v411 = vunpack.c.l.b16 %v355
        %v412 = vunpack.c.l.b16 %v356
        %v413 = vunpack.c.l.b16 %v357
        %v414 = vunpack.c.l.b16 %v358
        %v415 = vpack.c.b16 %v400, %v399
        %v416 = vpack.c.b16 %v402, %v401
        %v417 = vpack.c.b16 %v404, %v403
        %v418 = vpack.c.b16 %v406, %v405
        %v419 = vpack.c.b16 %v408, %v407
        %v420 = vpack.c.b16 %v410, %v409
        %v421 = vpack.c.b16 %v412, %v411
        %v422 = vpack.c.b16 %v414, %v413
        %431 = vmatprep.subr.bf16.mxu0 0
        %432 = vmatpush1.bf16.msra.mxu0 %v415
        %433 = vmatprep.subr.bf16.mxu0 0
        %434 = vmatpush1.bf16.msra.mxu0 %v416
        %435 = vmatprep.subr.bf16.mxu0 0
        %436 = vmatpush1.bf16.msra.mxu0 %v417
        %437 = vmatprep.subr.bf16.mxu0 0
        %438 = vmatpush1.bf16.msra.mxu0 %v418
        %439 = vmatprep.subr.bf16.mxu0 0
        %440 = vmatpush1.bf16.msra.mxu0 %v419
        %441 = vmatprep.subr.bf16.mxu0 0
        %442 = vmatpush1.bf16.msra.mxu0 %v420
        %443 = vmatprep.subr.bf16.mxu0 0
        %444 = vmatpush1.bf16.msra.mxu0 %v421
        %445 = vmatprep.subr.bf16.mxu0 0
        %446 = vmatpush1.bf16.msra.mxu0 %v422
        %447 = vmatprep.subr.bf16.mxu0 0
        %448 = vmatpush1.bf16.msra.mxu0 0
        %449 = vmatprep.subr.bf16.mxu0 0
        %450 = vmatpush1.bf16.msra.mxu0 0
        %451 = vmatprep.subr.bf16.mxu0 0
        %452 = vmatpush1.bf16.msra.mxu0 0
        %453 = vmatprep.subr.bf16.mxu0 0
        %454 = vmatpush1.bf16.msra.mxu0 0
        %455 = vmatprep.subr.bf16.mxu0 0
        %456 = vmatpush1.bf16.msra.mxu0 0
        %457 = vmatprep.subr.bf16.mxu0 0
        %458 = vmatpush1.bf16.msra.mxu0 0
        %459 = vmatprep.subr.bf16.mxu0 0
        %460 = vmatpush1.bf16.msra.mxu0 0
        %461 = vmatprep.subr.bf16.mxu0 0
        %462 = vmatpush1.bf16.msra.mxu0 0
        %463 = vmatprep.mubr.bf16.mxu0 0
        %464 = vmatmul.mubr.bf16.gmra.mrb[0].mxu0 %v375
        %v465 = vpop.f32.mrb[0].mxu0
        %v466 = vadd.f32 0.0, %v465
        %v467 = vpop.f32.mrb[0].mxu0
        %v468 = vpop.f32.mrb[0].mxu0
        %v469 = vadd.f32 0.0, %v468
        %v470 = vpop.f32.mrb[0].mxu0
        %471 = vmatprep.mubr.bf16.mxu0 0
        %472 = vmatmul.mubr.bf16.gmra.mrb[0].mxu0 %v376
        %v473 = vpop.f32.mrb[0].mxu0
        %v474 = vadd.f32 0.0, %v473
        %v475 = vpop.f32.mrb[0].mxu0
        %v476 = vpop.f32.mrb[0].mxu0
        %v477 = vadd.f32 0.0, %v476
        %v478 = vpop.f32.mrb[0].mxu0
        %479 = vmatprep.mubr.bf16.mxu0 0
        %480 = vmatmul.mubr.bf16.gmra.mrb[0].mxu0 %v377
        %v481 = vpop.f32.mrb[0].mxu0
        %v482 = vadd.f32 0.0, %v481
        %v483 = vpop.f32.mrb[0].mxu0
        %v484 = vpop.f32.mrb[0].mxu0
        %v485 = vadd.f32 0.0, %v484
        %v486 = vpop.f32.mrb[0].mxu0
        %487 = vmatprep.mubr.bf16.mxu0 0
        %488 = vmatmul.mubr.bf16.gmra.mrb[0].mxu0 %v378
        %v489 = vpop.f32.mrb[0].mxu0
        %v490 = vadd.f32 0.0, %v489
        %v491 = vpop.f32.mrb[0].mxu0
        %v492 = vpop.f32.mrb[0].mxu0
        %v493 = vadd.f32 0.0, %v492
        %v494 = vpop.f32.mrb[0].mxu0
        %495 = vdwg.mxu0
        %v496 = vpack.c.bf16 %v469, %v466
        %v497 = vpack.c.bf16 %v477, %v474
        %v498 = vpack.c.bf16 %v485, %v482
        %v499 = vpack.c.bf16 %v493, %v490
        %v504 = vunpack.c.l.b16 %v496
        %v505 = vunpack.c.h.b16 %v496
        %v506 = vunpack.c.l.b16 %v497
        %v507 = vunpack.c.h.b16 %v497
        %v508 = vunpack.c.l.b16 %v498
        %v509 = vunpack.c.h.b16 %v498
        %v510 = vunpack.c.l.b16 %v499
        %v511 = vunpack.c.h.b16 %v499
        %v512 = vpack.c.b16 %v504, %v504
        %v513 = vpack.c.b16 %v505, %v505
        %v514 = vpack.c.b16 %v506, %v506
        %v515 = vpack.c.b16 %v507, %v507
        %v516 = vpack.c.b16 %v508, %v508
        %v517 = vpack.c.b16 %v509, %v509
        %v518 = vpack.c.b16 %v510, %v510
        %v519 = vpack.c.b16 %v511, %v511
        %528 = vst [vmem:[%s320] sm:$0xf] %v512
        %529 = vst [vmem:[%s320 + $0x4] sm:$0xf] %v513
        %530 = vst [vmem:[%s320 + $0x8] sm:$0xf] %v514
        %531 = vst [vmem:[%s320 + $0xc] sm:$0xf] %v515
        %532 = vst [vmem:[%s320 + $0x10] sm:$0xf] %v516
        %533 = vst [vmem:[%s320 + $0x14] sm:$0xf] %v517
        %534 = vst [vmem:[%s320 + $0x18] sm:$0xf] %v518
        %535 = vst [vmem:[%s320 + $0x1c] sm:$0xf] %v519
      $region44: #{network_block_apply.4} parent=39 // pred_fallthru
        _
      %v536 = vld [vmem:[#allocation2] sm:$0xff]
      %v537 = vld [vmem:[#allocation2 + $0x8] sm:$0xff]
      %v538 = vld [vmem:[#allocation2 + $0x10] sm:$0xff]
      %v539 = vld [vmem:[#allocation2 + $0x18] sm:$0xff]
      %v540 = vld [vmem:[#allocation2 + $0x20] sm:$0xff]
      %v541 = vld [vmem:[#allocation2 + $0x28] sm:$0xff]
      %v542 = vld [vmem:[#allocation2 + $0x30] sm:$0xff]
      %v543 = vld [vmem:[#allocation2 + $0x38] sm:$0xff]
      %v544 = vld [vmem:[%s301] sm:$0xff]
      %v545 = vld [vmem:[%s301 + $0x8] sm:$0xff]
      %v546 = vld [vmem:[%s301 + $0x10] sm:$0xff]
      %v547 = vld [vmem:[%s301 + $0x18] sm:$0xff]
      %v548 = vld [vmem:[%s301 + $0x20] sm:$0xf]
      %v549 = vld [vmem:[%s301 + $0x24] sm:$0xff]
      %v550 = vld [vmem:[%s301 + $0x2c] sm:$0xff]
      %v551 = vld [vmem:[%s301 + $0x34] sm:$0xff]
      %v552 = vld [vmem:[%s301 + $0x3c] sm:$0xff]
      %v553 = vld [vmem:[%s301 + $0x44] sm:$0xf]
      %v554 = vld [vmem:[%s301 + $0x48] sm:$0xff]
      %v555 = vld [vmem:[%s301 + $0x50] sm:$0xff]
      %v556 = vld [vmem:[%s301 + $0x58] sm:$0xff]
      %v557 = vld [vmem:[%s301 + $0x60] sm:$0xff]
      %v558 = vld [vmem:[%s301 + $0x68] sm:$0xf]
      %v559 = vld [vmem:[%s301 + $0x6c] sm:$0xff]
      %v560 = vld [vmem:[%s301 + $0x74] sm:$0xff]
      %v561 = vld [vmem:[%s301 + $0x7c] sm:$0xff]
      %v562 = vld [vmem:[%s301 + $0x84] sm:$0xff]
      %v563 = vld [vmem:[%s301 + $0x8c] sm:$0xf]
      %v564 = vld [vmem:[%s301 + $0x90] sm:$0xff]
      %v565 = vld [vmem:[%s301 + $0x98] sm:$0xff]
      %v566 = vld [vmem:[%s301 + $0xa0] sm:$0xff]
      %v567 = vld [vmem:[%s301 + $0xa8] sm:$0xff]
      %v568 = vld [vmem:[%s301 + $0xb0] sm:$0xf]
      %v569 = vld [vmem:[%s301 + $0xb4] sm:$0xff]
      %v570 = vld [vmem:[%s301 + $0xbc] sm:$0xff]
      %v571 = vld [vmem:[%s301 + $0xc4] sm:$0xff]
      %v572 = vld [vmem:[%s301 + $0xcc] sm:$0xff]
      %v573 = vld [vmem:[%s301 + $0xd4] sm:$0xf]
      %v574 = vld [vmem:[%s301 + $0xd8] sm:$0xff]
      %v575 = vld [vmem:[%s301 + $0xe0] sm:$0xff]
      %v576 = vld [vmem:[%s301 + $0xe8] sm:$0xff]
      %v577 = vld [vmem:[%s301 + $0xf0] sm:$0xff]
      %v578 = vld [vmem:[%s301 + $0xf8] sm:$0xf]
      %v579 = vld [vmem:[%s301 + $0xfc] sm:$0xff]
      %v580 = vld [vmem:[%s301 + $0x104] sm:$0xff]
      %v581 = vld [vmem:[%s301 + $0x10c] sm:$0xff]
      %v582 = vld [vmem:[%s301 + $0x114] sm:$0xff]
      %v583 = vld [vmem:[%s301 + $0x11c] sm:$0xf]
      %v584 = vld [vmem:[%s308] sm:$0xf]
      %v585 = vld [vmem:[%s308 + $0x4] sm:$0xf]
      %v586 = vld [vmem:[%s308 + $0x8] sm:$0xf]
      %v587 = vld [vmem:[%s308 + $0xc] sm:$0xf]
      %v588 = vld [vmem:[%s308 + $0x10] sm:$0xf]
      %v589 = vld [vmem:[%s308 + $0x14] sm:$0xf]
      %v590 = vld [vmem:[%s308 + $0x18] sm:$0xf]
      %v591 = vld [vmem:[%s308 + $0x1c] sm:$0xf]
      %v592 = vld [vmem:[%s308 + $0x20] sm:$0xf]
      %v593 = vld [vmem:[%s308 + $0x24] sm:$0xf]
      %v594 = vld [vmem:[%s308 + $0x28] sm:$0xf]
      %v595 = vld [vmem:[%s308 + $0x2c] sm:$0xf]
      %v596 = vld [vmem:[%s308 + $0x30] sm:$0xf]
      %v597 = vld [vmem:[%s308 + $0x34] sm:$0xf]
      %v598 = vld [vmem:[%s308 + $0x38] sm:$0xf]
      %v599 = vld [vmem:[%s308 + $0x3c] sm:$0xf]
      %v600 = vld [vmem:[%s308 + $0x40] sm:$0xf]
      %v601 = vld [vmem:[%s308 + $0x44] sm:$0xf]
      %v602 = vld [vmem:[%s308 + $0x48] sm:$0xf]
      %v603 = vld [vmem:[%s308 + $0x4c] sm:$0xf]
      %v604 = vld [vmem:[%s308 + $0x50] sm:$0xf]
      %v605 = vld [vmem:[%s308 + $0x54] sm:$0xf]
      %v606 = vld [vmem:[%s308 + $0x58] sm:$0xf]
      %v607 = vld [vmem:[%s308 + $0x5c] sm:$0xf]
      %v608 = vld [vmem:[%s308 + $0x60] sm:$0xf]
      %v609 = vld [vmem:[%s308 + $0x64] sm:$0xf]
      %v610 = vld [vmem:[%s308 + $0x68] sm:$0xf]
      %v611 = vld [vmem:[%s308 + $0x6c] sm:$0xf]
      %v612 = vld [vmem:[%s308 + $0x70] sm:$0xf]
      %v613 = vld [vmem:[%s308 + $0x74] sm:$0xf]
      %v614 = vld [vmem:[%s308 + $0x78] sm:$0xf]
      %v615 = vld [vmem:[%s308 + $0x7c] sm:$0xf]
      %v616 = vld [vmem:[%s308 + $0x80] sm:$0xf]
      %v617 = vld [vmem:[%s308 + $0x84] sm:$0xf]
      %v618 = vld [vmem:[%s308 + $0x88] sm:$0xf]
      %v619 = vld [vmem:[%s308 + $0x8c] sm:$0xf]
      %v620 = vld [vmem:[%s308 + $0x90] sm:$0xf]
      %v621 = vld [vmem:[%s308 + $0x94] sm:$0xf]
      %v622 = vld [vmem:[%s308 + $0x98] sm:$0xf]
      %v623 = vld [vmem:[%s308 + $0x9c] sm:$0xf]
      %v624 = vld [vmem:[%s308 + $0xa0] sm:$0xf]
      %v625 = vld [vmem:[%s308 + $0xa4] sm:$0xf]
      %v626 = vld [vmem:[%s308 + $0xa8] sm:$0xf]
      %v627 = vld [vmem:[%s308 + $0xac] sm:$0xf]
      %v628 = vld [vmem:[%s308 + $0xb0] sm:$0xf]
      %v629 = vld [vmem:[%s308 + $0xb4] sm:$0xf]
      %v630 = vld [vmem:[%s308 + $0xb8] sm:$0xf]
      %v631 = vld [vmem:[%s308 + $0xbc] sm:$0xf]
      %v632 = vld [vmem:[%s308 + $0xc0] sm:$0xf]
      %v633 = vld [vmem:[%s308 + $0xc4] sm:$0xf]
      %v634 = vld [vmem:[%s308 + $0xc8] sm:$0xf]
      %v635 = vld [vmem:[%s308 + $0xcc] sm:$0xf]
      %v636 = vld [vmem:[%s308 + $0xd0] sm:$0xf]
      %v637 = vld [vmem:[%s308 + $0xd4] sm:$0xf]
      %v638 = vld [vmem:[%s308 + $0xd8] sm:$0xf]
      %v639 = vld [vmem:[%s308 + $0xdc] sm:$0xf]
      %v640 = vld [vmem:[%s308 + $0xe0] sm:$0xf]
      %v641 = vld [vmem:[%s308 + $0xe4] sm:$0xf]
      %v642 = vld [vmem:[%s308 + $0xe8] sm:$0xf]
      %v643 = vld [vmem:[%s308 + $0xec] sm:$0xf]
      %v644 = vld [vmem:[%s308 + $0xf0] sm:$0xf]
      %v645 = vld [vmem:[%s308 + $0xf4] sm:$0xf]
      %v646 = vld [vmem:[%s308 + $0xf8] sm:$0xf]
      %v647 = vld [vmem:[%s308 + $0xfc] sm:$0xf]
      %v648 = vld [vmem:[%s308 + $0x100] sm:$0xf]
      %v649 = vld [vmem:[%s308 + $0x104] sm:$0xf]
      %v650 = vld [vmem:[%s308 + $0x108] sm:$0xf]
      %v651 = vld [vmem:[%s308 + $0x10c] sm:$0xf]
      %v652 = vld [vmem:[%s308 + $0x110] sm:$0xf]
      %v653 = vld [vmem:[%s308 + $0x114] sm:$0xf]
      %v654 = vld [vmem:[%s308 + $0x118] sm:$0xf]
      %v655 = vld [vmem:[%s308 + $0x11c] sm:$0xf]
      %v656 = vld [vmem:[%s308 + $0x120] sm:$0xf]
      %v657 = vld [vmem:[%s308 + $0x124] sm:$0xf]
      %v658 = vld [vmem:[%s308 + $0x128] sm:$0xf]
      %v659 = vld [vmem:[%s308 + $0x12c] sm:$0xf]
      %v660 = vld [vmem:[%s308 + $0x130] sm:$0xf]
      %v661 = vld [vmem:[%s308 + $0x134] sm:$0xf]
      %v662 = vld [vmem:[%s308 + $0x138] sm:$0xf]
      %v663 = vld [vmem:[%s308 + $0x13c] sm:$0xf]
      %v664 = vld [vmem:[%s308 + $0x140] sm:$0xf]
      %v665 = vld [vmem:[%s308 + $0x144] sm:$0xf]
      %v666 = vld [vmem:[%s308 + $0x148] sm:$0xf]
      %v667 = vld [vmem:[%s308 + $0x14c] sm:$0xf]
      %v668 = vld [vmem:[%s308 + $0x150] sm:$0xf]
      %v669 = vld [vmem:[%s308 + $0x154] sm:$0xf]
      %v670 = vld [vmem:[%s308 + $0x158] sm:$0xf]
      %v671 = vld [vmem:[%s308 + $0x15c] sm:$0xf]
      %v672 = vld [vmem:[%s308 + $0x160] sm:$0xf]
      %v673 = vld [vmem:[%s308 + $0x164] sm:$0xf]
      %v674 = vld [vmem:[%s308 + $0x168] sm:$0xf]
      %v675 = vld [vmem:[%s308 + $0x16c] sm:$0xf]
      %v676 = vld [vmem:[%s308 + $0x170] sm:$0xf]
      %v677 = vld [vmem:[%s308 + $0x174] sm:$0xf]
      %v678 = vld [vmem:[%s308 + $0x178] sm:$0xf]
      %v679 = vld [vmem:[%s308 + $0x17c] sm:$0xf]
      %v680 = vld [vmem:[%s308 + $0x180] sm:$0xf]
      %v681 = vld [vmem:[%s308 + $0x184] sm:$0xf]
      %v682 = vld [vmem:[%s308 + $0x188] sm:$0xf]
      %v683 = vld [vmem:[%s308 + $0x18c] sm:$0xf]
      %v684 = vld [vmem:[%s308 + $0x190] sm:$0xf]
      %v685 = vld [vmem:[%s308 + $0x194] sm:$0xf]
      %v686 = vld [vmem:[%s308 + $0x198] sm:$0xf]
      %v687 = vld [vmem:[%s308 + $0x19c] sm:$0xf]
      %v688 = vld [vmem:[%s308 + $0x1a0] sm:$0xf]
      %v689 = vld [vmem:[%s308 + $0x1a4] sm:$0xf]
      %v690 = vld [vmem:[%s308 + $0x1a8] sm:$0xf]
      %v691 = vld [vmem:[%s308 + $0x1ac] sm:$0xf]
      %v692 = vld [vmem:[%s308 + $0x1b0] sm:$0xf]
      %v693 = vld [vmem:[%s308 + $0x1b4] sm:$0xf]
      %v694 = vld [vmem:[%s308 + $0x1b8] sm:$0xf]
      %v695 = vld [vmem:[%s308 + $0x1bc] sm:$0xf]
      %v696 = vld [vmem:[%s308 + $0x1c0] sm:$0xf]
      %v697 = vld [vmem:[%s308 + $0x1c4] sm:$0xf]
      %v698 = vld [vmem:[%s308 + $0x1c8] sm:$0xf]
      %v699 = vld [vmem:[%s308 + $0x1cc] sm:$0xf]
      %v700 = vld [vmem:[%s308 + $0x1d0] sm:$0xf]
      %v701 = vld [vmem:[%s308 + $0x1d4] sm:$0xf]
      %v702 = vld [vmem:[%s308 + $0x1d8] sm:$0xf]
      %v703 = vld [vmem:[%s308 + $0x1dc] sm:$0xf]
      %v704 = vld [vmem:[%s308 + $0x1e0] sm:$0xf]
      %v705 = vld [vmem:[%s308 + $0x1e4] sm:$0xf]
      %v706 = vld [vmem:[%s308 + $0x1e8] sm:$0xf]
      %v707 = vld [vmem:[%s308 + $0x1ec] sm:$0xf]
      %v708 = vld [vmem:[%s308 + $0x1f0] sm:$0xf]
      %v709 = vld [vmem:[%s308 + $0x1f4] sm:$0xf]
      %v710 = vld [vmem:[%s308 + $0x1f8] sm:$0xf]
      %v711 = vld [vmem:[%s308 + $0x1fc] sm:$0xf]
      %v712 = vld [vmem:[%s308 + $0x200] sm:$0xf]
      %v713 = vld [vmem:[%s308 + $0x204] sm:$0xf]
      %v714 = vld [vmem:[%s308 + $0x208] sm:$0xf]
      %v715 = vld [vmem:[%s308 + $0x20c] sm:$0xf]
      %v716 = vld [vmem:[%s308 + $0x210] sm:$0xf]
      %v717 = vld [vmem:[%s308 + $0x214] sm:$0xf]
      %v718 = vld [vmem:[%s308 + $0x218] sm:$0xf]
      %v719 = vld [vmem:[%s308 + $0x21c] sm:$0xf]
      %v720 = vld [vmem:[%s308 + $0x220] sm:$0xf]
      %v721 = vld [vmem:[%s308 + $0x224] sm:$0xf]
      %v722 = vld [vmem:[%s308 + $0x228] sm:$0xf]
      %v723 = vld [vmem:[%s308 + $0x22c] sm:$0xf]
      %v724 = vld [vmem:[%s308 + $0x230] sm:$0xf]
      %v725 = vld [vmem:[%s308 + $0x234] sm:$0xf]
      %v726 = vld [vmem:[%s308 + $0x238] sm:$0xf]
      %v727 = vld [vmem:[%s308 + $0x23c] sm:$0xf]
      %v768 = vunpack.c.l.b16 %v544
      %v769 = vunpack.c.h.b16 %v544
      %v770 = vunpack.c.l.b16 %v545
      %v771 = vunpack.c.h.b16 %v545
      %v772 = vunpack.c.l.b16 %v546
      %v773 = vunpack.c.h.b16 %v546
      %v774 = vunpack.c.l.b16 %v547
      %v775 = vunpack.c.h.b16 %v547
      %v776 = vunpack.c.l.b16 %v548
      %v777 = vunpack.c.l.b16 %v549
      %v778 = vunpack.c.h.b16 %v549
      %v779 = vunpack.c.l.b16 %v550
      %v780 = vunpack.c.h.b16 %v550
      %v781 = vunpack.c.l.b16 %v551
      %v782 = vunpack.c.h.b16 %v551
      %v783 = vunpack.c.l.b16 %v552
      %v784 = vunpack.c.h.b16 %v552
      %v785 = vunpack.c.l.b16 %v553
      %v786 = vunpack.c.l.b16 %v554
      %v787 = vunpack.c.h.b16 %v554
      %v788 = vunpack.c.l.b16 %v555
      %v789 = vunpack.c.h.b16 %v555
      %v790 = vunpack.c.l.b16 %v556
      %v791 = vunpack.c.h.b16 %v556
      %v792 = vunpack.c.l.b16 %v557
      %v793 = vunpack.c.h.b16 %v557
      %v794 = vunpack.c.l.b16 %v558
      %v795 = vunpack.c.l.b16 %v559
      %v796 = vunpack.c.h.b16 %v559
      %v797 = vunpack.c.l.b16 %v560
      %v798 = vunpack.c.h.b16 %v560
      %v799 = vunpack.c.l.b16 %v561
      %v800 = vunpack.c.h.b16 %v561
      %v801 = vunpack.c.l.b16 %v562
      %v802 = vunpack.c.h.b16 %v562
      %v803 = vunpack.c.l.b16 %v563
      %v804 = vunpack.c.l.b16 %v564
      %v805 = vunpack.c.h.b16 %v564
      %v806 = vunpack.c.l.b16 %v565
      %v807 = vunpack.c.h.b16 %v565
      %v808 = vunpack.c.l.b16 %v566
      %v809 = vunpack.c.h.b16 %v566
      %v810 = vunpack.c.l.b16 %v567
      %v811 = vunpack.c.h.b16 %v567
      %v812 = vunpack.c.l.b16 %v568
      %v813 = vunpack.c.l.b16 %v569
      %v814 = vunpack.c.h.b16 %v569
      %v815 = vunpack.c.l.b16 %v570
      %v816 = vunpack.c.h.b16 %v570
      %v817 = vunpack.c.l.b16 %v571
      %v818 = vunpack.c.h.b16 %v571
      %v819 = vunpack.c.l.b16 %v572
      %v820 = vunpack.c.h.b16 %v572
      %v821 = vunpack.c.l.b16 %v573
      %v822 = vunpack.c.l.b16 %v574
      %v823 = vunpack.c.h.b16 %v574
      %v824 = vunpack.c.l.b16 %v575
      %v825 = vunpack.c.h.b16 %v575
      %v826 = vunpack.c.l.b16 %v576
      %v827 = vunpack.c.h.b16 %v576
      %v828 = vunpack.c.l.b16 %v577
      %v829 = vunpack.c.h.b16 %v577
      %v830 = vunpack.c.l.b16 %v578
      %v831 = vunpack.c.l.b16 %v579
      %v832 = vunpack.c.h.b16 %v579
      %v833 = vunpack.c.l.b16 %v580
      %v834 = vunpack.c.h.b16 %v580
      %v835 = vunpack.c.l.b16 %v581
      %v836 = vunpack.c.h.b16 %v581
      %v837 = vunpack.c.l.b16 %v582
      %v838 = vunpack.c.h.b16 %v582
      %v839 = vunpack.c.l.b16 %v583
      %v840 = vpack.c.b16 %v777, %v768
      %v841 = vpack.c.b16 %v778, %v769
      %v842 = vpack.c.b16 %v779, %v770
      %v843 = vpack.c.b16 %v780, %v771
      %v844 = vpack.c.b16 %v781, %v772
      %v845 = vpack.c.b16 %v782, %v773
      %v846 = vpack.c.b16 %v783, %v774
      %v847 = vpack.c.b16 %v784, %v775
      %v848 = vpack.c.b16 %v785, %v776
      %v849 = vpack.c.b16 %v795, %v786
      %v850 = vpack.c.b16 %v796, %v787
      %v851 = vpack.c.b16 %v797, %v788
      %v852 = vpack.c.b16 %v798, %v789
      %v853 = vpack.c.b16 %v799, %v790
      %v854 = vpack.c.b16 %v800, %v791
      %v855 = vpack.c.b16 %v801, %v792
      %v856 = vpack.c.b16 %v802, %v793
      %v857 = vpack.c.b16 %v803, %v794
      %v858 = vpack.c.b16 %v813, %v804
      %v859 = vpack.c.b16 %v814, %v805
      %v860 = vpack.c.b16 %v815, %v806
      %v861 = vpack.c.b16 %v816, %v807
      %v862 = vpack.c.b16 %v817, %v808
      %v863 = vpack.c.b16 %v818, %v809
      %v864 = vpack.c.b16 %v819, %v810
      %v865 = vpack.c.b16 %v820, %v811
      %v866 = vpack.c.b16 %v821, %v812
      %v867 = vpack.c.b16 %v831, %v822
      %v868 = vpack.c.b16 %v832, %v823
      %v869 = vpack.c.b16 %v833, %v824
      %v870 = vpack.c.b16 %v834, %v825
      %v871 = vpack.c.b16 %v835, %v826
      %v872 = vpack.c.b16 %v836, %v827
      %v873 = vpack.c.b16 %v837, %v828
      %v874 = vpack.c.b16 %v838, %v829
      %v875 = vpack.c.b16 %v839, %v830
      %v1056 = vunpack.c.l.b16 %v584
      %v1057 = vunpack.c.l.b16 %v585
      %v1058 = vunpack.c.l.b16 %v586
      %v1059 = vunpack.c.l.b16 %v587
      %v1060 = vunpack.c.l.b16 %v588
      %v1061 = vunpack.c.l.b16 %v589
      %v1062 = vunpack.c.l.b16 %v590
      %v1063 = vunpack.c.l.b16 %v591
      %v1064 = vunpack.c.l.b16 %v592
      %v1065 = vunpack.c.l.b16 %v593
      %v1066 = vunpack.c.l.b16 %v594
      %v1067 = vunpack.c.l.b16 %v595
      %v1068 = vunpack.c.l.b16 %v596
      %v1069 = vunpack.c.l.b16 %v597
      %v1070 = vunpack.c.l.b16 %v598
      %v1071 = vunpack.c.l.b16 %v599
      %v1072 = vunpack.c.l.b16 %v600
      %v1073 = vunpack.c.l.b16 %v601
      %v1074 = vunpack.c.l.b16 %v602
      %v1075 = vunpack.c.l.b16 %v603
      %v1076 = vunpack.c.l.b16 %v604
      %v1077 = vunpack.c.l.b16 %v605
      %v1078 = vunpack.c.l.b16 %v606
      %v1079 = vunpack.c.l.b16 %v607
      %v1080 = vunpack.c.l.b16 %v608
      %v1081 = vunpack.c.l.b16 %v609
      %v1082 = vunpack.c.l.b16 %v610
      %v1083 = vunpack.c.l.b16 %v611
      %v1084 = vunpack.c.l.b16 %v612
      %v1085 = vunpack.c.l.b16 %v613
      %v1086 = vunpack.c.l.b16 %v614
      %v1087 = vunpack.c.l.b16 %v615
      %v1088 = vunpack.c.l.b16 %v616
      %v1089 = vunpack.c.l.b16 %v617
      %v1090 = vunpack.c.l.b16 %v618
      %v1091 = vunpack.c.l.b16 %v619
      %v1092 = vunpack.c.l.b16 %v620
      %v1093 = vunpack.c.l.b16 %v621
      %v1094 = vunpack.c.l.b16 %v622
      %v1095 = vunpack.c.l.b16 %v623
      %v1096 = vunpack.c.l.b16 %v624
      %v1097 = vunpack.c.l.b16 %v625
      %v1098 = vunpack.c.l.b16 %v626
      %v1099 = vunpack.c.l.b16 %v627
      %v1100 = vunpack.c.l.b16 %v628
      %v1101 = vunpack.c.l.b16 %v629
      %v1102 = vunpack.c.l.b16 %v630
      %v1103 = vunpack.c.l.b16 %v631
      %v1104 = vunpack.c.l.b16 %v632
      %v1105 = vunpack.c.l.b16 %v633
      %v1106 = vunpack.c.l.b16 %v634
      %v1107 = vunpack.c.l.b16 %v635
      %v1108 = vunpack.c.l.b16 %v636
      %v1109 = vunpack.c.l.b16 %v637
      %v1110 = vunpack.c.l.b16 %v638
      %v1111 = vunpack.c.l.b16 %v639
      %v1112 = vunpack.c.l.b16 %v640
      %v1113 = vunpack.c.l.b16 %v641
      %v1114 = vunpack.c.l.b16 %v642
      %v1115 = vunpack.c.l.b16 %v643
      %v1116 = vunpack.c.l.b16 %v644
      %v1117 = vunpack.c.l.b16 %v645
      %v1118 = vunpack.c.l.b16 %v646
      %v1119 = vunpack.c.l.b16 %v647
      %v1120 = vunpack.c.l.b16 %v648
      %v1121 = vunpack.c.l.b16 %v649
      %v1122 = vunpack.c.l.b16 %v650
      %v1123 = vunpack.c.l.b16 %v651
      %v1124 = vunpack.c.l.b16 %v652
      %v1125 = vunpack.c.l.b16 %v653
      %v1126 = vunpack.c.l.b16 %v654
      %v1127 = vunpack.c.l.b16 %v655
      %v1128 = vunpack.c.l.b16 %v656
      %v1129 = vunpack.c.l.b16 %v657
      %v1130 = vunpack.c.l.b16 %v658
      %v1131 = vunpack.c.l.b16 %v659
      %v1132 = vunpack.c.l.b16 %v660
      %v1133 = vunpack.c.l.b16 %v661
      %v1134 = vunpack.c.l.b16 %v662
      %v1135 = vunpack.c.l.b16 %v663
      %v1136 = vunpack.c.l.b16 %v664
      %v1137 = vunpack.c.l.b16 %v665
      %v1138 = vunpack.c.l.b16 %v666
      %v1139 = vunpack.c.l.b16 %v667
      %v1140 = vunpack.c.l.b16 %v668
      %v1141 = vunpack.c.l.b16 %v669
      %v1142 = vunpack.c.l.b16 %v670
      %v1143 = vunpack.c.l.b16 %v671
      %v1144 = vunpack.c.l.b16 %v672
      %v1145 = vunpack.c.l.b16 %v673
      %v1146 = vunpack.c.l.b16 %v674
      %v1147 = vunpack.c.l.b16 %v675
      %v1148 = vunpack.c.l.b16 %v676
      %v1149 = vunpack.c.l.b16 %v677
      %v1150 = vunpack.c.l.b16 %v678
      %v1151 = vunpack.c.l.b16 %v679
      %v1152 = vunpack.c.l.b16 %v680
      %v1153 = vunpack.c.l.b16 %v681
      %v1154 = vunpack.c.l.b16 %v682
      %v1155 = vunpack.c.l.b16 %v683
      %v1156 = vunpack.c.l.b16 %v684
      %v1157 = vunpack.c.l.b16 %v685
      %v1158 = vunpack.c.l.b16 %v686
      %v1159 = vunpack.c.l.b16 %v687
      %v1160 = vunpack.c.l.b16 %v688
      %v1161 = vunpack.c.l.b16 %v689
      %v1162 = vunpack.c.l.b16 %v690
      %v1163 = vunpack.c.l.b16 %v691
      %v1164 = vunpack.c.l.b16 %v692
      %v1165 = vunpack.c.l.b16 %v693
      %v1166 = vunpack.c.l.b16 %v694
      %v1167 = vunpack.c.l.b16 %v695
      %v1168 = vunpack.c.l.b16 %v696
      %v1169 = vunpack.c.l.b16 %v697
      %v1170 = vunpack.c.l.b16 %v698
      %v1171 = vunpack.c.l.b16 %v699
      %v1172 = vunpack.c.l.b16 %v700
      %v1173 = vunpack.c.l.b16 %v701
      %v1174 = vunpack.c.l.b16 %v702
      %v1175 = vunpack.c.l.b16 %v703
      %v1176 = vunpack.c.l.b16 %v704
      %v1177 = vunpack.c.l.b16 %v705
      %v1178 = vunpack.c.l.b16 %v706
      %v1179 = vunpack.c.l.b16 %v707
      %v1180 = vunpack.c.l.b16 %v708
      %v1181 = vunpack.c.l.b16 %v709
      %v1182 = vunpack.c.l.b16 %v710
      %v1183 = vunpack.c.l.b16 %v711
      %v1184 = vunpack.c.l.b16 %v712
      %v1185 = vunpack.c.l.b16 %v713
      %v1186 = vunpack.c.l.b16 %v714
      %v1187 = vunpack.c.l.b16 %v715
      %v1188 = vunpack.c.l.b16 %v716
      %v1189 = vunpack.c.l.b16 %v717
      %v1190 = vunpack.c.l.b16 %v718
      %v1191 = vunpack.c.l.b16 %v719
      %v1192 = vunpack.c.l.b16 %v720
      %v1193 = vunpack.c.l.b16 %v721
      %v1194 = vunpack.c.l.b16 %v722
      %v1195 = vunpack.c.l.b16 %v723
      %v1196 = vunpack.c.l.b16 %v724
      %v1197 = vunpack.c.l.b16 %v725
      %v1198 = vunpack.c.l.b16 %v726
      %v1199 = vunpack.c.l.b16 %v727
      %v1200 = vpack.c.b16 %v1057, %v1056
      %v1201 = vpack.c.b16 %v1059, %v1058
      %v1202 = vpack.c.b16 %v1061, %v1060
      %v1203 = vpack.c.b16 %v1063, %v1062
      %v1204 = vpack.c.b16 %v1065, %v1064
      %v1205 = vpack.c.b16 %v1067, %v1066
      %v1206 = vpack.c.b16 %v1069, %v1068
      %v1207 = vpack.c.b16 %v1071, %v1070
      %v1208 = vpack.c.b16 %v1073, %v1072
      %v1209 = vpack.c.b16 %v1075, %v1074
      %v1210 = vpack.c.b16 %v1077, %v1076
      %v1211 = vpack.c.b16 %v1079, %v1078
      %v1212 = vpack.c.b16 %v1081, %v1080
      %v1213 = vpack.c.b16 %v1083, %v1082
      %v1214 = vpack.c.b16 %v1085, %v1084
      %v1215 = vpack.c.b16 %v1087, %v1086
      %v1216 = vpack.c.b16 %v1089, %v1088
      %v1217 = vpack.c.b16 %v1091, %v1090
      %v1218 = vpack.c.b16 %v1093, %v1092
      %v1219 = vpack.c.b16 %v1095, %v1094
      %v1220 = vpack.c.b16 %v1097, %v1096
      %v1221 = vpack.c.b16 %v1099, %v1098
      %v1222 = vpack.c.b16 %v1101, %v1100
      %v1223 = vpack.c.b16 %v1103, %v1102
      %v1224 = vpack.c.b16 %v1105, %v1104
      %v1225 = vpack.c.b16 %v1107, %v1106
      %v1226 = vpack.c.b16 %v1109, %v1108
      %v1227 = vpack.c.b16 %v1111, %v1110
      %v1228 = vpack.c.b16 %v1113, %v1112
      %v1229 = vpack.c.b16 %v1115, %v1114
      %v1230 = vpack.c.b16 %v1117, %v1116
      %v1231 = vpack.c.b16 %v1119, %v1118
      %v1232 = vpack.c.b16 %v1121, %v1120
      %v1233 = vpack.c.b16 %v1123, %v1122
      %v1234 = vpack.c.b16 %v1125, %v1124
      %v1235 = vpack.c.b16 %v1127, %v1126
      %v1236 = vpack.c.b16 %v1129, %v1128
      %v1237 = vpack.c.b16 %v1131, %v1130
      %v1238 = vpack.c.b16 %v1133, %v1132
      %v1239 = vpack.c.b16 %v1135, %v1134
      %v1240 = vpack.c.b16 %v1137, %v1136
      %v1241 = vpack.c.b16 %v1139, %v1138
      %v1242 = vpack.c.b16 %v1141, %v1140
      %v1243 = vpack.c.b16 %v1143, %v1142
      %v1244 = vpack.c.b16 %v1145, %v1144
      %v1245 = vpack.c.b16 %v1147, %v1146
      %v1246 = vpack.c.b16 %v1149, %v1148
      %v1247 = vpack.c.b16 %v1151, %v1150
      %v1248 = vpack.c.b16 %v1153, %v1152
      %v1249 = vpack.c.b16 %v1155, %v1154
      %v1250 = vpack.c.b16 %v1157, %v1156
      %v1251 = vpack.c.b16 %v1159, %v1158
      %v1252 = vpack.c.b16 %v1161, %v1160
      %v1253 = vpack.c.b16 %v1163, %v1162
      %v1254 = vpack.c.b16 %v1165, %v1164
      %v1255 = vpack.c.b16 %v1167, %v1166
      %v1256 = vpack.c.b16 %v1169, %v1168
      %v1257 = vpack.c.b16 %v1171, %v1170
      %v1258 = vpack.c.b16 %v1173, %v1172
      %v1259 = vpack.c.b16 %v1175, %v1174
      %v1260 = vpack.c.b16 %v1177, %v1176
      %v1261 = vpack.c.b16 %v1179, %v1178
      %v1262 = vpack.c.b16 %v1181, %v1180
      %v1263 = vpack.c.b16 %v1183, %v1182
      %v1264 = vpack.c.b16 %v1185, %v1184
      %v1265 = vpack.c.b16 %v1187, %v1186
      %v1266 = vpack.c.b16 %v1189, %v1188
      %v1267 = vpack.c.b16 %v1191, %v1190
      %v1268 = vpack.c.b16 %v1193, %v1192
      %v1269 = vpack.c.b16 %v1195, %v1194
      %v1270 = vpack.c.b16 %v1197, %v1196
      %v1271 = vpack.c.b16 %v1199, %v1198
      %1344 = vmatprep.subr.bf16.mxu0 0
      %1345 = vmatpush1.bf16.msra.mxu0 %v1200
      %1346 = vmatprep.subr.bf16.mxu0 0
      %1347 = vmatpush1.bf16.msra.mxu0 %v1201
      %1348 = vmatprep.subr.bf16.mxu0 0
      %1349 = vmatpush1.bf16.msra.mxu0 %v1202
      %1350 = vmatprep.subr.bf16.mxu0 0
      %1351 = vmatpush1.bf16.msra.mxu0 %v1203
      %1352 = vmatprep.subr.bf16.mxu0 0
      %1353 = vmatpush1.bf16.msra.mxu0 %v1204
      %1354 = vmatprep.subr.bf16.mxu0 0
      %1355 = vmatpush1.bf16.msra.mxu0 %v1205
      %1356 = vmatprep.subr.bf16.mxu0 0
      %1357 = vmatpush1.bf16.msra.mxu0 %v1206
      %1358 = vmatprep.subr.bf16.mxu0 0
      %1359 = vmatpush1.bf16.msra.mxu0 %v1207
      %1360 = vmatprep.subr.bf16.mxu0 0
      %1361 = vmatpush1.bf16.msra.mxu0 %v1208
      %1362 = vmatprep.subr.bf16.mxu0 0
      %1363 = vmatpush1.bf16.msra.mxu0 %v1209
      %1364 = vmatprep.subr.bf16.mxu0 0
      %1365 = vmatpush1.bf16.msra.mxu0 %v1210
      %1366 = vmatprep.subr.bf16.mxu0 0
      %1367 = vmatpush1.bf16.msra.mxu0 %v1211
      %1368 = vmatprep.subr.bf16.mxu0 0
      %1369 = vmatpush1.bf16.msra.mxu0 %v1212
      %1370 = vmatprep.subr.bf16.mxu0 0
      %1371 = vmatpush1.bf16.msra.mxu0 %v1213
      %1372 = vmatprep.subr.bf16.mxu0 0
      %1373 = vmatpush1.bf16.msra.mxu0 %v1214
      %1374 = vmatprep.subr.bf16.mxu0 0
      %1375 = vmatpush1.bf16.msra.mxu0 %v1215
      %1376 = vmatprep.mubr.bf16.mxu0 %v841
      %1377 = vmatmul.mubr.bf16.gmra.mrb[0].mxu0 %v840
      %v1378 = vpop.f32.mrb[0].mxu0
      %v1379 = vadd.f32 0.0, %v1378
      %v1380 = vpop.f32.mrb[0].mxu0
      %v1381 = vpop.f32.mrb[0].mxu0
      %v1382 = vadd.f32 0.0, %v1381
      %v1383 = vpop.f32.mrb[0].mxu0
      %1384 = vmatprep.mubr.bf16.mxu0 %v850
      %1385 = vmatmul.mubr.bf16.gmra.mrb[0].mxu0 %v849
      %v1386 = vpop.f32.mrb[0].mxu0
      %v1387 = vadd.f32 0.0, %v1386
      %v1388 = vpop.f32.mrb[0].mxu0
      %v1389 = vpop.f32.mrb[0].mxu0
      %v1390 = vadd.f32 0.0, %v1389
      %v1391 = vpop.f32.mrb[0].mxu0
      %1392 = vmatprep.mubr.bf16.mxu0 %v859
      %1393 = vmatmul.mubr.bf16.gmra.mrb[0].mxu0 %v858
      %v1394 = vpop.f32.mrb[0].mxu0
      %v1395 = vadd.f32 0.0, %v1394
      %v1396 = vpop.f32.mrb[0].mxu0
      %v1397 = vpop.f32.mrb[0].mxu0
      %v1398 = vadd.f32 0.0, %v1397
      %v1399 = vpop.f32.mrb[0].mxu0
      %1400 = vmatprep.mubr.bf16.mxu0 %v868
      %1401 = vmatmul.mubr.bf16.gmra.mrb[0].mxu0 %v867
      %v1402 = vpop.f32.mrb[0].mxu0
      %v1403 = vadd.f32 0.0, %v1402
      %v1404 = vpop.f32.mrb[0].mxu0
      %v1405 = vpop.f32.mrb[0].mxu0
      %v1406 = vadd.f32 0.0, %v1405
      %v1407 = vpop.f32.mrb[0].mxu0
      %1408 = vdwg.mxu0
      %1409 = vmatprep.subr.bf16.mxu0 0
      %1410 = vmatpush1.bf16.msra.mxu0 %v1216
      %1411 = vmatprep.subr.bf16.mxu0 0
      %1412 = vmatpush1.bf16.msra.mxu0 %v1217
      %1413 = vmatprep.subr.bf16.mxu0 0
      %1414 = vmatpush1.bf16.msra.mxu0 %v1218
      %1415 = vmatprep.subr.bf16.mxu0 0
      %1416 = vmatpush1.bf16.msra.mxu0 %v1219
      %1417 = vmatprep.subr.bf16.mxu0 0
      %1418 = vmatpush1.bf16.msra.mxu0 %v1220
      %1419 = vmatprep.subr.bf16.mxu0 0
      %1420 = vmatpush1.bf16.msra.mxu0 %v1221
      %1421 = vmatprep.subr.bf16.mxu0 0
      %1422 = vmatpush1.bf16.msra.mxu0 %v1222
      %1423 = vmatprep.subr.bf16.mxu0 0
      %1424 = vmatpush1.bf16.msra.mxu0 %v1223
      %1425 = vmatprep.subr.bf16.mxu0 0
      %1426 = vmatpush1.bf16.msra.mxu0 %v1224
      %1427 = vmatprep.subr.bf16.mxu0 0
      %1428 = vmatpush1.bf16.msra.mxu0 %v1225
      %1429 = vmatprep.subr.bf16.mxu0 0
      %1430 = vmatpush1.bf16.msra.mxu0 %v1226
      %1431 = vmatprep.subr.bf16.mxu0 0
      %1432 = vmatpush1.bf16.msra.mxu0 %v1227
      %1433 = vmatprep.subr.bf16.mxu0 0
      %1434 = vmatpush1.bf16.msra.mxu0 %v1228
      %1435 = vmatprep.subr.bf16.mxu0 0
      %1436 = vmatpush1.bf16.msra.mxu0 %v1229
      %1437 = vmatprep.subr.bf16.mxu0 0
      %1438 = vmatpush1.bf16.msra.mxu0 %v1230
      %1439 = vmatprep.subr.bf16.mxu0 0
      %1440 = vmatpush1.bf16.msra.mxu0 %v1231
      %1441 = vmatprep.mubr.bf16.mxu0 %v843
      %1442 = vmatmul.mubr.bf16.gmra.mrb[0].mxu0 %v842
      %v1443 = vpop.f32.mrb[0].mxu0
      %v1444 = vadd.f32 %v1379, %v1443
      %v1445 = vpop.f32.mrb[0].mxu0
      %v1446 = vpop.f32.mrb[0].mxu0
      %v1447 = vadd.f32 %v1382, %v1446
      %v1448 = vpop.f32.mrb[0].mxu0
      %1449 = vmatprep.mubr.bf16.mxu0 %v852
      %1450 = vmatmul.mubr.bf16.gmra.mrb[0].mxu0 %v851
      %v1451 = vpop.f32.mrb[0].mxu0
      %v1452 = vadd.f32 %v1387, %v1451
      %v1453 = vpop.f32.mrb[0].mxu0
      %v1454 = vpop.f32.mrb[0].mxu0
      %v1455 = vadd.f32 %v1390, %v1454
      %v1456 = vpop.f32.mrb[0].mxu0
      %1457 = vmatprep.mubr.bf16.mxu0 %v861
      %1458 = vmatmul.mubr.bf16.gmra.mrb[0].mxu0 %v860
      %v1459 = vpop.f32.mrb[0].mxu0
      %v1460 = vadd.f32 %v1395, %v1459
      %v1461 = vpop.f32.mrb[0].mxu0
      %v1462 = vpop.f32.mrb[0].mxu0
      %v1463 = vadd.f32 %v1398, %v1462
      %v1464 = vpop.f32.mrb[0].mxu0
      %1465 = vmatprep.mubr.bf16.mxu0 %v870
      %1466 = vmatmul.mubr.bf16.gmra.mrb[0].mxu0 %v869
      %v1467 = vpop.f32.mrb[0].mxu0
      %v1468 = vadd.f32 %v1403, %v1467
      %v1469 = vpop.f32.mrb[0].mxu0
      %v1470 = vpop.f32.mrb[0].mxu0
      %v1471 = vadd.f32 %v1406, %v1470
      %v1472 = vpop.f32.mrb[0].mxu0
      %1473 = vdwg.mxu0
      %1474 = vmatprep.subr.bf16.mxu0 0
      %1475 = vmatpush1.bf16.msra.mxu0 %v1232
      %1476 = vmatprep.subr.bf16.mxu0 0
      %1477 = vmatpush1.bf16.msra.mxu0 %v1233
      %1478 = vmatprep.subr.bf16.mxu0 0
      %1479 = vmatpush1.bf16.msra.mxu0 %v1234
      %1480 = vmatprep.subr.bf16.mxu0 0
      %1481 = vmatpush1.bf16.msra.mxu0 %v1235
      %1482 = vmatprep.subr.bf16.mxu0 0
      %1483 = vmatpush1.bf16.msra.mxu0 %v1236
      %1484 = vmatprep.subr.bf16.mxu0 0
      %1485 = vmatpush1.bf16.msra.mxu0 %v1237
      %1486 = vmatprep.subr.bf16.mxu0 0
      %1487 = vmatpush1.bf16.msra.mxu0 %v1238
      %1488 = vmatprep.subr.bf16.mxu0 0
      %1489 = vmatpush1.bf16.msra.mxu0 %v1239
      %1490 = vmatprep.subr.bf16.mxu0 0
      %1491 = vmatpush1.bf16.msra.mxu0 %v1240
      %1492 = vmatprep.subr.bf16.mxu0 0
      %1493 = vmatpush1.bf16.msra.mxu0 %v1241
      %1494 = vmatprep.subr.bf16.mxu0 0
      %1495 = vmatpush1.bf16.msra.mxu0 %v1242
      %1496 = vmatprep.subr.bf16.mxu0 0
      %1497 = vmatpush1.bf16.msra.mxu0 %v1243
      %1498 = vmatprep.subr.bf16.mxu0 0
      %1499 = vmatpush1.bf16.msra.mxu0 %v1244
      %1500 = vmatprep.subr.bf16.mxu0 0
      %1501 = vmatpush1.bf16.msra.mxu0 %v1245
      %1502 = vmatprep.subr.bf16.mxu0 0
      %1503 = vmatpush1.bf16.msra.mxu0 %v1246
      %1504 = vmatprep.subr.bf16.mxu0 0
      %1505 = vmatpush1.bf16.msra.mxu0 %v1247
      %1506 = vmatprep.mubr.bf16.mxu0 %v845
      %1507 = vmatmul.mubr.bf16.gmra.mrb[0].mxu0 %v844
      %v1508 = vpop.f32.mrb[0].mxu0
      %v1509 = vadd.f32 %v1444, %v1508
      %v1510 = vpop.f32.mrb[0].mxu0
      %v1511 = vpop.f32.mrb[0].mxu0
      %v1512 = vadd.f32 %v1447, %v1511
      %v1513 = vpop.f32.mrb[0].mxu0
      %1514 = vmatprep.mubr.bf16.mxu0 %v854
      %1515 = vmatmul.mubr.bf16.gmra.mrb[0].mxu0 %v853
      %v1516 = vpop.f32.mrb[0].mxu0
      %v1517 = vadd.f32 %v1452, %v1516
      %v1518 = vpop.f32.mrb[0].mxu0
      %v1519 = vpop.f32.mrb[0].mxu0
      %v1520 = vadd.f32 %v1455, %v1519
      %v1521 = vpop.f32.mrb[0].mxu0
      %1522 = vmatprep.mubr.bf16.mxu0 %v863
      %1523 = vmatmul.mubr.bf16.gmra.mrb[0].mxu0 %v862
      %v1524 = vpop.f32.mrb[0].mxu0
      %v1525 = vadd.f32 %v1460, %v1524
      %v1526 = vpop.f32.mrb[0].mxu0
      %v1527 = vpop.f32.mrb[0].mxu0
      %v1528 = vadd.f32 %v1463, %v1527
      %v1529 = vpop.f32.mrb[0].mxu0
      %1530 = vmatprep.mubr.bf16.mxu0 %v872
      %1531 = vmatmul.mubr.bf16.gmra.mrb[0].mxu0 %v871
      %v1532 = vpop.f32.mrb[0].mxu0
      %v1533 = vadd.f32 %v1468, %v1532
      %v1534 = vpop.f32.mrb[0].mxu0
      %v1535 = vpop.f32.mrb[0].mxu0
      %v1536 = vadd.f32 %v1471, %v1535
      %v1537 = vpop.f32.mrb[0].mxu0
      %1538 = vdwg.mxu0
      %1539 = vmatprep.subr.bf16.mxu0 0
      %1540 = vmatpush1.bf16.msra.mxu0 %v1248
      %1541 = vmatprep.subr.bf16.mxu0 0
      %1542 = vmatpush1.bf16.msra.mxu0 %v1249
      %1543 = vmatprep.subr.bf16.mxu0 0
      %1544 = vmatpush1.bf16.msra.mxu0 %v1250
      %1545 = vmatprep.subr.bf16.mxu0 0
      %1546 = vmatpush1.bf16.msra.mxu0 %v1251
      %1547 = vmatprep.subr.bf16.mxu0 0
      %1548 = vmatpush1.bf16.msra.mxu0 %v1252
      %1549 = vmatprep.subr.bf16.mxu0 0
      %1550 = vmatpush1.bf16.msra.mxu0 %v1253
      %1551 = vmatprep.subr.bf16.mxu0 0
      %1552 = vmatpush1.bf16.msra.mxu0 %v1254
      %1553 = vmatprep.subr.bf16.mxu0 0
      %1554 = vmatpush1.bf16.msra.mxu0 %v1255
      %1555 = vmatprep.subr.bf16.mxu0 0
      %1556 = vmatpush1.bf16.msra.mxu0 %v1256
      %1557 = vmatprep.subr.bf16.mxu0 0
      %1558 = vmatpush1.bf16.msra.mxu0 %v1257
      %1559 = vmatprep.subr.bf16.mxu0 0
      %1560 = vmatpush1.bf16.msra.mxu0 %v1258
      %1561 = vmatprep.subr.bf16.mxu0 0
      %1562 = vmatpush1.bf16.msra.mxu0 %v1259
      %1563 = vmatprep.subr.bf16.mxu0 0
      %1564 = vmatpush1.bf16.msra.mxu0 %v1260
      %1565 = vmatprep.subr.bf16.mxu0 0
      %1566 = vmatpush1.bf16.msra.mxu0 %v1261
      %1567 = vmatprep.subr.bf16.mxu0 0
      %1568 = vmatpush1.bf16.msra.mxu0 %v1262
      %1569 = vmatprep.subr.bf16.mxu0 0
      %1570 = vmatpush1.bf16.msra.mxu0 %v1263
      %1571 = vmatprep.mubr.bf16.mxu0 %v847
      %1572 = vmatmul.mubr.bf16.gmra.mrb[0].mxu0 %v846
      %v1573 = vpop.f32.mrb[0].mxu0
      %v1574 = vadd.f32 %v1509, %v1573
      %v1575 = vpop.f32.mrb[0].mxu0
      %v1576 = vpop.f32.mrb[0].mxu0
      %v1577 = vadd.f32 %v1512, %v1576
      %v1578 = vpop.f32.mrb[0].mxu0
      %1579 = vmatprep.mubr.bf16.mxu0 %v856
      %1580 = vmatmul.mubr.bf16.gmra.mrb[0].mxu0 %v855
      %v1581 = vpop.f32.mrb[0].mxu0
      %v1582 = vadd.f32 %v1517, %v1581
      %v1583 = vpop.f32.mrb[0].mxu0
      %v1584 = vpop.f32.mrb[0].mxu0
      %v1585 = vadd.f32 %v1520, %v1584
      %v1586 = vpop.f32.mrb[0].mxu0
      %1587 = vmatprep.mubr.bf16.mxu0 %v865
      %1588 = vmatmul.mubr.bf16.gmra.mrb[0].mxu0 %v864
      %v1589 = vpop.f32.mrb[0].mxu0
      %v1590 = vadd.f32 %v1525, %v1589
      %v1591 = vpop.f32.mrb[0].mxu0
      %v1592 = vpop.f32.mrb[0].mxu0
      %v1593 = vadd.f32 %v1528, %v1592
      %v1594 = vpop.f32.mrb[0].mxu0
      %1595 = vmatprep.mubr.bf16.mxu0 %v874
      %1596 = vmatmul.mubr.bf16.gmra.mrb[0].mxu0 %v873
      %v1597 = vpop.f32.mrb[0].mxu0
      %v1598 = vadd.f32 %v1533, %v1597
      %v1599 = vpop.f32.mrb[0].mxu0
      %v1600 = vpop.f32.mrb[0].mxu0
      %v1601 = vadd.f32 %v1536, %v1600
      %v1602 = vpop.f32.mrb[0].mxu0
      %1603 = vdwg.mxu0
      %1604 = vmatprep.subr.bf16.mxu0 0
      %1605 = vmatpush1.bf16.msra.mxu0 %v1264
      %1606 = vmatprep.subr.bf16.mxu0 0
      %1607 = vmatpush1.bf16.msra.mxu0 %v1265
      %1608 = vmatprep.subr.bf16.mxu0 0
      %1609 = vmatpush1.bf16.msra.mxu0 %v1266
      %1610 = vmatprep.subr.bf16.mxu0 0
      %1611 = vmatpush1.bf16.msra.mxu0 %v1267
      %1612 = vmatprep.subr.bf16.mxu0 0
      %1613 = vmatpush1.bf16.msra.mxu0 %v1268
      %1614 = vmatprep.subr.bf16.mxu0 0
      %1615 = vmatpush1.bf16.msra.mxu0 %v1269
      %1616 = vmatprep.subr.bf16.mxu0 0
      %1617 = vmatpush1.bf16.msra.mxu0 %v1270
      %1618 = vmatprep.subr.bf16.mxu0 0
      %1619 = vmatpush1.bf16.msra.mxu0 %v1271
      %1620 = vmatprep.subr.bf16.mxu0 0
      %1621 = vmatpush1.bf16.msra.mxu0 0
      %1622 = vmatprep.subr.bf16.mxu0 0
      %1623 = vmatpush1.bf16.msra.mxu0 0
      %1624 = vmatprep.subr.bf16.mxu0 0
      %1625 = vmatpush1.bf16.msra.mxu0 0
      %1626 = vmatprep.subr.bf16.mxu0 0
      %1627 = vmatpush1.bf16.msra.mxu0 0
      %1628 = vmatprep.subr.bf16.mxu0 0
      %1629 = vmatpush1.bf16.msra.mxu0 0
      %1630 = vmatprep.subr.bf16.mxu0 0
      %1631 = vmatpush1.bf16.msra.mxu0 0
      %1632 = vmatprep.subr.bf16.mxu0 0
      %1633 = vmatpush1.bf16.msra.mxu0 0
      %1634 = vmatprep.subr.bf16.mxu0 0
      %1635 = vmatpush1.bf16.msra.mxu0 0
      %1636 = vmatprep.mubr.bf16.mxu0 0
      %1637 = vmatmul.mubr.bf16.gmra.mrb[0].mxu0 %v848
      %v1638 = vpop.f32.mrb[0].mxu0
      %v1639 = vadd.f32 %v1574, %v1638
      %v1640 = vpop.f32.mrb[0].mxu0
      %v1641 = vpop.f32.mrb[0].mxu0
      %v1642 = vadd.f32 %v1577, %v1641
      %v1643 = vpop.f32.mrb[0].mxu0
      %1644 = vmatprep.mubr.bf16.mxu0 0
      %1645 = vmatmul.mubr.bf16.gmra.mrb[0].mxu0 %v857
      %v1646 = vpop.f32.mrb[0].mxu0
      %v1647 = vadd.f32 %v1582, %v1646
      %v1648 = vpop.f32.mrb[0].mxu0
      %v1649 = vpop.f32.mrb[0].mxu0
      %v1650 = vadd.f32 %v1585, %v1649
      %v1651 = vpop.f32.mrb[0].mxu0
      %1652 = vmatprep.mubr.bf16.mxu0 0
      %1653 = vmatmul.mubr.bf16.gmra.mrb[0].mxu0 %v866
      %v1654 = vpop.f32.mrb[0].mxu0
      %v1655 = vadd.f32 %v1590, %v1654
      %v1656 = vpop.f32.mrb[0].mxu0
      %v1657 = vpop.f32.mrb[0].mxu0
      %v1658 = vadd.f32 %v1593, %v1657
      %v1659 = vpop.f32.mrb[0].mxu0
      %1660 = vmatprep.mubr.bf16.mxu0 0
      %1661 = vmatmul.mubr.bf16.gmra.mrb[0].mxu0 %v875
      %v1662 = vpop.f32.mrb[0].mxu0
      %v1663 = vadd.f32 %v1598, %v1662
      %v1664 = vpop.f32.mrb[0].mxu0
      %v1665 = vpop.f32.mrb[0].mxu0
      %v1666 = vadd.f32 %v1601, %v1665
      %v1667 = vpop.f32.mrb[0].mxu0
      %1668 = vdwg.mxu0
      %v1669 = vadd.f32 %v536, %v1639
      %v1670 = vadd.f32 %v537, %v1642
      %v1671 = vadd.f32 %v538, %v1647
      %v1672 = vadd.f32 %v539, %v1650
      %v1673 = vadd.f32 %v540, %v1655
      %v1674 = vadd.f32 %v541, %v1658
      %v1675 = vadd.f32 %v542, %v1663
      %v1676 = vadd.f32 %v543, %v1666
      %1677 = vst [vmem:[#allocation2] sm:$0xff] %v1669
      %1678 = vst [vmem:[#allocation2 + $0x8] sm:$0xff] %v1670
      %1679 = vst [vmem:[#allocation2 + $0x10] sm:$0xff] %v1671
      %1680 = vst [vmem:[#allocation2 + $0x18] sm:$0xff] %v1672
      %1681 = vst [vmem:[#allocation2 + $0x20] sm:$0xff] %v1673
      %1682 = vst [vmem:[#allocation2 + $0x28] sm:$0xff] %v1674
      %1683 = vst [vmem:[#allocation2 + $0x30] sm:$0xff] %v1675
      %1684 = vst [vmem:[#allocation2 + $0x38] sm:$0xff] %v1676
      // Predicated region
      $region45: #{network_block_apply.4} parent=39 // pred_check
        %p1685 = pneg %p323
      $region46: #{network_block_apply.4} parent=39 // pred_check_branch
        %1687 = sbr.rel (%p1685) target = $region48
      $region47: #{network_block_apply.4} parent=39 // pred_region
        %v1688 = vld [vmem:[#allocation2] sm:$0xff]
        %v1689 = vld [vmem:[#allocation2 + $0x8] sm:$0xff]
        %v1690 = vld [vmem:[#allocation2 + $0x10] sm:$0xff]
        %v1691 = vld [vmem:[#allocation2 + $0x18] sm:$0xff]
        %v1692 = vld [vmem:[#allocation2 + $0x20] sm:$0xff]
        %v1693 = vld [vmem:[#allocation2 + $0x28] sm:$0xff]
        %v1694 = vld [vmem:[#allocation2 + $0x30] sm:$0xff]
        %v1695 = vld [vmem:[#allocation2 + $0x38] sm:$0xff]
        %v1696 = vld [vmem:[%s2] sm:$0x1]
        %v1698 = vlaneseq
        %v1699 = vshrl.u32 %v1698, 7
        %v1700 = vsub.s32 0, %v1699
        %v1701 = vrot.slane %v1696, %v1700
        %v1703 = vmul.f32 %v1688, %v1701
        %v1704 = vmul.f32 %v1689, %v1701
        %v1705 = vmul.f32 %v1690, %v1701
        %v1706 = vmul.f32 %v1691, %v1701
        %v1707 = vmul.f32 %v1692, %v1701
        %v1708 = vmul.f32 %v1693, %v1701
        %v1709 = vmul.f32 %v1694, %v1701
        %v1710 = vmul.f32 %v1695, %v1701
        %v1711 = vld [vmem:[%s3] sm:$0x1]
        %v1713 = vlaneseq
        %v1714 = vshrl.u32 %v1713, 7
        %v1715 = vsub.s32 0, %v1714
        %v1716 = vrot.slane %v1711, %v1715
        %v1718 = vadd.f32 %v1703, %v1716
        %v1719 = vadd.f32 %v1704, %v1716
        %v1720 = vadd.f32 %v1705, %v1716
        %v1721 = vadd.f32 %v1706, %v1716
        %v1722 = vadd.f32 %v1707, %v1716
        %v1723 = vadd.f32 %v1708, %v1716
        %v1724 = vadd.f32 %v1709, %v1716
        %v1725 = vadd.f32 %v1710, %v1716
        %v1726 = vmax.f32 %v1718, 0.0
        %v1727 = vmax.f32 %v1719, 0.0
        %v1728 = vmax.f32 %v1720, 0.0
        %v1729 = vmax.f32 %v1721, 0.0
        %v1730 = vmax.f32 %v1722, 0.0
        %v1731 = vmax.f32 %v1723, 0.0
        %v1732 = vmax.f32 %v1724, 0.0
        %v1733 = vmax.f32 %v1725, 0.0
        %v1734 = vpack.c.bf16 %v1727, %v1726
        %v1735 = vpack.c.bf16 %v1729, %v1728
        %v1736 = vpack.c.bf16 %v1731, %v1730
        %v1737 = vpack.c.bf16 %v1733, %v1732
        %v1742 = vunpack.c.l.b16 %v1734
        %v1743 = vunpack.c.h.b16 %v1734
        %v1744 = vunpack.c.l.b16 %v1735
        %v1745 = vunpack.c.h.b16 %v1735
        %v1746 = vunpack.c.l.b16 %v1736
        %v1747 = vunpack.c.h.b16 %v1736
        %v1748 = vunpack.c.l.b16 %v1737
        %v1749 = vunpack.c.h.b16 %v1737
        %v1750 = vpack.c.b16 %v1742, %v1742
        %v1751 = vpack.c.b16 %v1743, %v1743
        %v1752 = vpack.c.b16 %v1744, %v1744
        %v1753 = vpack.c.b16 %v1745, %v1745
        %v1754 = vpack.c.b16 %v1746, %v1746
        %v1755 = vpack.c.b16 %v1747, %v1747
        %v1756 = vpack.c.b16 %v1748, %v1748
        %v1757 = vpack.c.b16 %v1749, %v1749
        %1766 = vst [vmem:[%s314] sm:$0xf] %v1750
        %1767 = vst [vmem:[%s314 + $0x4] sm:$0xf] %v1751
        %1768 = vst [vmem:[%s314 + $0x8] sm:$0xf] %v1752
        %1769 = vst [vmem:[%s314 + $0xc] sm:$0xf] %v1753
        %1770 = vst [vmem:[%s314 + $0x10] sm:$0xf] %v1754
        %1771 = vst [vmem:[%s314 + $0x14] sm:$0xf] %v1755
        %1772 = vst [vmem:[%s314 + $0x18] sm:$0xf] %v1756
        %1773 = vst [vmem:[%s314 + $0x1c] sm:$0xf] %v1757
      $region48: #{network_block_apply.4} parent=39 // pred_fallthru
        _
      %s1774 = smul.u32 8, %s22
      %p1775 = scmp.lt.s32.totalorder %s1774, 15
      %s1776 = scalar_select %p1775, %s1774, 15
      %s1777 = smul.addr %s1776, 4
      %s1778 = scalar_lea.vmem %s5, %s1777
      %s1779 = smul.u32 8, %s22
      %p1780 = scmp.lt.s32.totalorder %s1779, 15
      %s1781 = scalar_select %p1780, %s1779, 15
      %s1782 = smul.addr %s1781, 4
      %s1783 = scalar_lea.vmem %s6, %s1782
      // Predicated region
      $region49: #{network_block_apply.4} parent=39 // pred_check
        %p1784 = pneg %p165
      $region50: #{network_block_apply.4} parent=39 // pred_check_branch
        %1786 = sbr.rel (%p1784) target = $region52
      $region51: #{network_block_apply.4} parent=39 // pred_region
        %s1787 = smul.u32 8, %s22
      $region52: #{network_block_apply.4} parent=39 // pred_fallthru
        _
      // Predicated region
      $region53: #{network_block_apply.4} parent=39 // pred_check
        %p1788 = pneg %p191
      $region54: #{network_block_apply.4} parent=39 // pred_check_branch
        %1790 = sbr.rel (%p1788) target = $region56
      $region55: #{network_block_apply.4} parent=39 // pred_region
        %s1791 = smul.u32 8, %s22
      $region56: #{network_block_apply.4} parent=39 // pred_fallthru
        _
    $region40: #{network_block_apply.4} parent=5 // pred_fallthru
      _
    %p1792 = scmp.le.s32.totalorder 2, %s13
    // Predicated region
    $region57: #{network_block_apply.4} parent=5 // pred_check
      %p1793 = pneg %p1792
    $region58: #{network_block_apply.4} parent=5 // pred_check_branch
      %1795 = sbr.rel (%p1793) target = $region60
    $region59: #{network_block_apply.4} parent=5 // pred_region
      %s1796 = ssub.s32 %s13, 2
      // Predicated region
      $region61: #{network_block_apply.4} parent=59 // pred_check
        %p1797 = pneg %p171
      $region62: #{network_block_apply.4} parent=59 // pred_check_branch
        %1799 = sbr.rel (%p1797) target = $region64
      $region63: #{network_block_apply.4} parent=59 // pred_region
        %s1800 = smul.u32 8, %s24
        %p1801 = scmp.lt.s32.totalorder %s1800, 15
        %s1802 = scalar_select %p1801, %s1800, 15
        %s1803 = smul.addr %s1802, 4
        %s1804 = scalar_lea.vmem %s5, %s1803
      $region64: #{network_block_apply.4} parent=59 // pred_fallthru
        _
      // Predicated region
      $region65: #{network_block_apply.4} parent=59 // pred_check
        %p1805 = pneg %p197
      $region66: #{network_block_apply.4} parent=59 // pred_check_branch
        %1807 = sbr.rel (%p1805) target = $region68
      $region67: #{network_block_apply.4} parent=59 // pred_region
        %s1808 = smul.u32 8, %s24
        %p1809 = scmp.lt.s32.totalorder %s1808, 15
        %s1810 = scalar_select %p1809, %s1808, 15
        %s1811 = smul.addr %s1810, 4
        %s1812 = scalar_lea.vmem %s6, %s1811
      $region68: #{network_block_apply.4} parent=59 // pred_fallthru
        _
    $region60: #{network_block_apply.4} parent=5 // pred_fallthru
      _
  $region6: #{network_block_apply.4} parent=0 // loop_footer
    %s17 = sadd.s32 1, %s13
  $region7: #{network_block_apply.4} parent=0 // loop_footer_branch
    %12 = sbr.rel target = $region3
  $region8: #{network_block_apply.4} parent=0 // loop_exit
    _

// kernel: network_block_apply.7
$region0: #{network_block_apply.7}
  #allocation0 [shape = 'u32[]', space=smem, size = 0x4, offset = 0x4, fixed_abs, tag = 'smem constant byte address 0x4 - core index']
  #allocation1 [shape = 'u32[144,128]{1,0:T(1,128)}', space=vmem, size = 0x12000, scoped, tag = 'internal scratch']
  #allocation2 [shape = 'f32[64,128]{1,0:T(8,128)}', space=vmem, size = 0x8000, scoped, tag = 'scratch operand']
  %s0 = inlined_call_operand.vmem [shape: bf16[128,1152], index: 0, kind: input, shape index: {}]
  %s1 = inlined_call_operand.vmem [shape: bf16[1152,128], index: 1, kind: input, shape index: {}]
  %s2 = inlined_call_operand.vmem [shape: f32[128,128], index: 2, kind: input, shape index: {}]
  %s3 = inlined_call_operand.vmem [shape: f32[128,128], index: 3, kind: output, shape index: {}]
  %s4 = sld [smem:[#allocation0]]
  $region53: #{network_block_apply.7} parent=0
    _
  %s6 = ssub.s32 1, %s4
  %s7 = scalar_select 0, %s6, %s4
  loop: start=0, step=1, limit=4
  $region2: #{network_block_apply.7} parent=0 // loop_pre_header
    _
  $region3: #{network_block_apply.7} parent=0 // loop_header
    %s9 = sphi 0, %s13
    %p10 = scmp.ge.s32.totalorder %s9, 4
    %s16 = sphi 0, %s28
    %s17 = sphi 0, %s24
    %s18 = sphi 0, %s16
    %s19 = sphi 0, %s17
    %s20 = sphi 0, %s18
    %s21 = sphi 0, %s19
    %s33 = sphi 0, %s35
    %s36 = sphi 0, %s33
    %s37 = sphi 0, %s36
    %s53 = sphi 0, %s37
    %s59 = sphi 0, %s61
    %s62 = sphi 0, %s59
    %s63 = sphi 0, %s62
    %s79 = sphi 0, %s63
    %s85 = sphi 0, %s87
    %s88 = sphi 0, %s85
    %s89 = sphi 0, %s88
    %s105 = sphi 0, %s89
    %s111 = sphi 0, %s113
    %s114 = sphi 0, %s111
    %s115 = sphi 0, %s114
    %s131 = sphi 0, %s115
  $region4: #{network_block_apply.7} parent=0 // loop_header_branch
    %12 = sbr.rel (%p10) target = $region8
  $region5: #{network_block_apply.7} parent=0 // loop_body
    %s14 = ssub.s32 %s9, 1
    %s15 = ssub.s32 %s9, 2
    %s22 = sadd.s32 1, %s17
    %p23 = scmp.ge.s32.totalorder %s22, 1
    %s24 = scalar_select %p23, 0, %s22
    %s25 = sadd.s32 1, %s16
    %s26 = scalar_select %p23, %s25, %s16
    %p27 = scmp.ge.s32.totalorder %s26, 2
    %s28 = scalar_select %p27, 0, %s26
    %s29 = ssub.s32 %s16, %s28
    %s30 = ssub.s32 %s17, %s24
    %s31 = sor.u32 %s29, %s30
    %p32 = scmp.eq.s32.totalorder %s31, 0
    %s34 = sadd.s32 %s33, 1
    %s35 = scalar_select %p32, %s33, %s34
    %p38 = pneg %p32
    %p39 = scmp.eq.s32.totalorder %s9, 1
    %p40 = por %p38, %p39
    %p41 = scmp.ne.s32.totalorder %s33, %s36
    %p42 = scmp.eq.s32.totalorder %s9, 0
    %p43 = por %p41, %p42
    %p44 = scmp.ne.s32.totalorder %s33, %s36
    %p45 = scmp.eq.s32.totalorder %s14, 1
    %p46 = por %p44, %p45
    %p47 = scmp.ne.s32.totalorder %s36, %s37
    %p48 = scmp.eq.s32.totalorder %s14, 0
    %p49 = por %p47, %p48
    %p50 = scmp.ne.s32.totalorder %s36, %s37
    %p51 = scmp.eq.s32.totalorder %s15, 1
    %p52 = por %p50, %p51
    %p54 = scmp.ne.s32.totalorder %s37, %s53
    %p55 = scmp.eq.s32.totalorder %s15, 0
    %p56 = por %p54, %p55
    %s57 = ssub.s32 %s17, %s24
    %p58 = scmp.eq.s32.totalorder %s57, 0
    %s60 = sadd.s32 %s59, 1
    %s61 = scalar_select %p58, %s59, %s60
    %p64 = pneg %p58
    %p65 = scmp.eq.s32.totalorder %s9, 1
    %p66 = por %p64, %p65
    %p67 = scmp.ne.s32.totalorder %s59, %s62
    %p68 = scmp.eq.s32.totalorder %s9, 0
    %p69 = por %p67, %p68
    %p70 = scmp.ne.s32.totalorder %s59, %s62
    %p71 = scmp.eq.s32.totalorder %s14, 1
    %p72 = por %p70, %p71
    %p73 = scmp.ne.s32.totalorder %s62, %s63
    %p74 = scmp.eq.s32.totalorder %s14, 0
    %p75 = por %p73, %p74
    %p76 = scmp.ne.s32.totalorder %s62, %s63
    %p77 = scmp.eq.s32.totalorder %s15, 1
    %p78 = por %p76, %p77
    %p80 = scmp.ne.s32.totalorder %s63, %s79
    %p81 = scmp.eq.s32.totalorder %s15, 0
    %p82 = por %p80, %p81
    %s83 = ssub.s32 %s16, %s28
    %p84 = scmp.eq.s32.totalorder %s83, 0
    %s86 = sadd.s32 %s85, 1
    %s87 = scalar_select %p84, %s85, %s86
    %p90 = pneg %p84
    %p91 = scmp.eq.s32.totalorder %s9, 1
    %p92 = por %p90, %p91
    %p93 = scmp.ne.s32.totalorder %s85, %s88
    %p94 = scmp.eq.s32.totalorder %s9, 0
    %p95 = por %p93, %p94
    %p96 = scmp.ne.s32.totalorder %s85, %s88
    %p97 = scmp.eq.s32.totalorder %s14, 1
    %p98 = por %p96, %p97
    %p99 = scmp.ne.s32.totalorder %s88, %s89
    %p100 = scmp.eq.s32.totalorder %s14, 0
    %p101 = por %p99, %p100
    %p102 = scmp.ne.s32.totalorder %s88, %s89
    %p103 = scmp.eq.s32.totalorder %s15, 1
    %p104 = por %p102, %p103
    %p106 = scmp.ne.s32.totalorder %s89, %s105
    %p107 = scmp.eq.s32.totalorder %s15, 0
    %p108 = por %p106, %p107
    %s109 = ssub.s32 %s16, %s28
    %p110 = scmp.eq.s32.totalorder %s109, 0
    %s112 = sadd.s32 %s111, 1
    %s113 = scalar_select %p110, %s111, %s112
    %p116 = pneg %p110
    %p117 = scmp.eq.s32.totalorder %s9, 1
    %p118 = por %p116, %p117
    %p119 = scmp.ne.s32.totalorder %s111, %s114
    %p120 = scmp.eq.s32.totalorder %s9, 0
    %p121 = por %p119, %p120
    %p122 = scmp.ne.s32.totalorder %s111, %s114
    %p123 = scmp.eq.s32.totalorder %s14, 1
    %p124 = por %p122, %p123
    %p125 = scmp.ne.s32.totalorder %s114, %s115
    %p126 = scmp.eq.s32.totalorder %s14, 0
    %p127 = por %p125, %p126
    %p128 = scmp.ne.s32.totalorder %s114, %s115
    %p129 = scmp.eq.s32.totalorder %s15, 1
    %p130 = por %p128, %p129
    %p132 = scmp.ne.s32.totalorder %s115, %s131
    %p133 = scmp.eq.s32.totalorder %s15, 0
    %p134 = por %p132, %p133
    %p135 = scmp.le.s32.totalorder 1, %s9
    %p136 = scmp.lt.s32.totalorder %s9, 3
    %p137 = pnand %p135, %p136
    %p138 = pneg %p137
    // Predicated region
    $region9: #{network_block_apply.7} parent=5 // pred_check
      _
    $region10: #{network_block_apply.7} parent=5 // pred_check_branch
      %140 = sbr.rel (%p137) target = $region12
    $region11: #{network_block_apply.7} parent=5 // pred_region
      %s141 = ssub.s32 %s9, 1
      // Predicated region
      $region13: #{network_block_apply.7} parent=11 // pred_check
        %p142 = pneg %p75
      $region14: #{network_block_apply.7} parent=11 // pred_check_branch
        %144 = sbr.rel (%p142) target = $region16
      $region15: #{network_block_apply.7} parent=11 // pred_region
        %s145 = smul.u32 144, %s19
        %p146 = scmp.lt.s32.totalorder %s145, 143
        %s147 = scalar_select %p146, %s145, 143
        %s148 = smul.addr %s147, 4
        %s149 = scalar_lea.vmem %s1, %s148
        %s150 = smul.u32 144, %s19
      $region16: #{network_block_apply.7} parent=11 // pred_fallthru
        _
    $region12: #{network_block_apply.7} parent=5 // pred_fallthru
      _
    %p151 = scmp.lt.s32.totalorder %s9, 2
    // Predicated region
    $region17: #{network_block_apply.7} parent=5 // pred_check
      %p152 = pneg %p151
    $region18: #{network_block_apply.7} parent=5 // pred_check_branch
      %154 = sbr.rel (%p152) target = $region20
    $region19: #{network_block_apply.7} parent=5 // pred_region
      // Predicated region
      $region21: #{network_block_apply.7} parent=19 // pred_check
        %p155 = pneg %p43
      $region22: #{network_block_apply.7} parent=19 // pred_check_branch
        %157 = sbr.rel (%p155) target = $region24
      $region23: #{network_block_apply.7} parent=19 // pred_region
        %s158 = smul.u32 8, %s16
        %s159 = smul.u32 9, %s17
        %p160 = scmp.lt.s32.totalorder %s158, 15
        %s161 = scalar_select %p160, %s158, 15
        %p162 = scmp.lt.s32.totalorder %s159, 8
        %s163 = scalar_select %p162, %s159, 8
        %s164 = smul.addr %s161, 9
        %s165 = sadd.s32 %s163, %s164
        %s166 = smul.addr %s165, 4
        %s167 = scalar_lea.vmem %s0, %s166
        %s168 = smul.u32 8, %s16
        %s169 = smul.u32 9, %s17
      $region24: #{network_block_apply.7} parent=19 // pred_fallthru
        _
      // Predicated region
      $region25: #{network_block_apply.7} parent=19 // pred_check
        %p170 = pneg %p95
      $region26: #{network_block_apply.7} parent=19 // pred_check_branch
        %172 = sbr.rel (%p170) target = $region28
      $region27: #{network_block_apply.7} parent=19 // pred_region
        %s173 = smul.u32 8, %s16
        %p174 = scmp.lt.s32.totalorder %s173, 15
        %s175 = scalar_select %p174, %s173, 15
        %s176 = smul.addr %s175, 8
        %s177 = scalar_lea.vmem %s2, %s176
        %s178 = smul.u32 8, %s16
      $region28: #{network_block_apply.7} parent=19 // pred_fallthru
        _
    $region20: #{network_block_apply.7} parent=5 // pred_fallthru
      _
    %p179 = scmp.le.s32.totalorder 1, %s9
    %p180 = scmp.lt.s32.totalorder %s9, 3
    %p181 = pnand %p179, %p180
    %p182 = pneg %p181
    // Predicated region
    $region29: #{network_block_apply.7} parent=5 // pred_check
      _
    $region30: #{network_block_apply.7} parent=5 // pred_check_branch
      %184 = sbr.rel (%p181) target = $region32
    $region31: #{network_block_apply.7} parent=5 // pred_region
      %s185 = ssub.s32 %s9, 1
      %s186 = smul.u32 8, %s18
      %s187 = smul.u32 9, %s19
      %p188 = scmp.lt.s32.totalorder %s186, 15
      %s189 = scalar_select %p188, %s186, 15
      %p190 = scmp.lt.s32.totalorder %s187, 8
      %s191 = scalar_select %p190, %s187, 8
      %s192 = smul.addr %s189, 9
      %s193 = sadd.s32 %s191, %s192
      %s194 = smul.addr %s193, 4
      %s195 = scalar_lea.vmem %s0, %s194
      %p196 = pneg %p49
      %p197 = pneg %p46
      %s198 = smul.u32 144, %s19
      %p199 = scmp.lt.s32.totalorder %s198, 143
      %s200 = scalar_select %p199, %s198, 143
      %s201 = smul.addr %s200, 4
      %s202 = scalar_lea.vmem %s1, %s201
      %p203 = pneg %p75
      %p204 = pneg %p72
      %s205 = smul.u32 8, %s18
      %p206 = scmp.lt.s32.totalorder %s205, 15
      %s207 = scalar_select %p206, %s205, 15
      %s208 = smul.addr %s207, 8
      %s209 = scalar_lea.vmem %s2, %s208
      %p210 = pneg %p101
      %p211 = pneg %p98
      %p212 = pneg %p127
      %p213 = pneg %p124
      %s214 = smul.u32 8, %s18
      %p215 = scmp.lt.s32.totalorder %s214, 15
      %s216 = scalar_select %p215, %s214, 15
      %s217 = smul.addr %s216, 8
      %s218 = scalar_lea.vmem %s3, %s217
      %s219 = smul.u32 8, %s18
      %s220 = smul.u32 9, %s19
      %p221 = scmp.lt.s32.totalorder %s219, 15
      %s222 = scalar_select %p221, %s219, 15
      %p223 = scmp.lt.s32.totalorder %s220, 8
      %s224 = scalar_select %p223, %s220, 8
      %s225 = smul.addr %s222, 9
      %s226 = sadd.s32 %s224, %s225
      %s227 = smul.addr %s226, 4
      %s228 = scalar_lea.vmem %s0, %s227
      %s229 = smul.u32 8, %s18
      %s230 = smul.u32 9, %s19
      %s231 = smul.u32 144, %s19
      %p232 = scmp.lt.s32.totalorder %s231, 143
      %s233 = scalar_select %p232, %s231, 143
      %s234 = smul.addr %s233, 4
      %s235 = scalar_lea.vmem %s1, %s234
      %s236 = smul.u32 144, %s19
      %s237 = smul.u32 8, %s18
      %p238 = scmp.lt.s32.totalorder %s237, 15
      %s239 = scalar_select %p238, %s237, 15
      %s240 = smul.addr %s239, 8
      %s241 = scalar_lea.vmem %s2, %s240
      %s242 = smul.u32 8, %s18
      %s243 = smul.u32 8, %s18
      %p244 = scmp.lt.s32.totalorder %s243, 15
      %s245 = scalar_select %p244, %s243, 15
      %s246 = smul.addr %s245, 8
      %s247 = scalar_lea.vmem %s3, %s246
      %s248 = smul.u32 8, %s18
      %p250 = scmp.eq.s32.totalorder %s19, 0
      // Predicated region
      $region33: #{network_block_apply.7} parent=31 // pred_check
        %p251 = pneg %p250
      $region34: #{network_block_apply.7} parent=31 // pred_check_branch
        %253 = sbr.rel (%p251) target = $region36
      $region35: #{network_block_apply.7} parent=31 // pred_region
        %254 = vst [vmem:[#allocation2] sm:$0xff] 0.0
        %255 = vst [vmem:[#allocation2 + $0x8] sm:$0xff] 0.0
        %256 = vst [vmem:[#allocation2 + $0x10] sm:$0xff] 0.0
        %257 = vst [vmem:[#allocation2 + $0x18] sm:$0xff] 0.0
        %258 = vst [vmem:[#allocation2 + $0x20] sm:$0xff] 0.0
        %259 = vst [vmem:[#allocation2 + $0x28] sm:$0xff] 0.0
        %260 = vst [vmem:[#allocation2 + $0x30] sm:$0xff] 0.0
        %261 = vst [vmem:[#allocation2 + $0x38] sm:$0xff] 0.0
      $region36: #{network_block_apply.7} parent=31 // pred_fallthru
        _
      %v262 = vld [vmem:[#allocation2] sm:$0xff]
      %v263 = vld [vmem:[#allocation2 + $0x8] sm:$0xff]
      %v264 = vld [vmem:[#allocation2 + $0x10] sm:$0xff]
      %v265 = vld [vmem:[#allocation2 + $0x18] sm:$0xff]
      %v266 = vld [vmem:[#allocation2 + $0x20] sm:$0xff]
      %v267 = vld [vmem:[#allocation2 + $0x28] sm:$0xff]
      %v268 = vld [vmem:[#allocation2 + $0x30] sm:$0xff]
      %v269 = vld [vmem:[#allocation2 + $0x38] sm:$0xff]
      %v270 = vld [vmem:[%s228] sm:$0xff]
      %v271 = vld [vmem:[%s228 + $0x8] sm:$0xff]
      %v272 = vld [vmem:[%s228 + $0x10] sm:$0xff]
      %v273 = vld [vmem:[%s228 + $0x18] sm:$0xff]
      %v274 = vld [vmem:[%s228 + $0x20] sm:$0xf]
      %v275 = vld [vmem:[%s228 + $0x24] sm:$0xff]
      %v276 = vld [vmem:[%s228 + $0x2c] sm:$0xff]
      %v277 = vld [vmem:[%s228 + $0x34] sm:$0xff]
      %v278 = vld [vmem:[%s228 + $0x3c] sm:$0xff]
      %v279 = vld [vmem:[%s228 + $0x44] sm:$0xf]
      %v280 = vld [vmem:[%s228 + $0x48] sm:$0xff]
      %v281 = vld [vmem:[%s228 + $0x50] sm:$0xff]
      %v282 = vld [vmem:[%s228 + $0x58] sm:$0xff]
      %v283 = vld [vmem:[%s228 + $0x60] sm:$0xff]
      %v284 = vld [vmem:[%s228 + $0x68] sm:$0xf]
      %v285 = vld [vmem:[%s228 + $0x6c] sm:$0xff]
      %v286 = vld [vmem:[%s228 + $0x74] sm:$0xff]
      %v287 = vld [vmem:[%s228 + $0x7c] sm:$0xff]
      %v288 = vld [vmem:[%s228 + $0x84] sm:$0xff]
      %v289 = vld [vmem:[%s228 + $0x8c] sm:$0xf]
      %v290 = vld [vmem:[%s228 + $0x90] sm:$0xff]
      %v291 = vld [vmem:[%s228 + $0x98] sm:$0xff]
      %v292 = vld [vmem:[%s228 + $0xa0] sm:$0xff]
      %v293 = vld [vmem:[%s228 + $0xa8] sm:$0xff]
      %v294 = vld [vmem:[%s228 + $0xb0] sm:$0xf]
      %v295 = vld [vmem:[%s228 + $0xb4] sm:$0xff]
      %v296 = vld [vmem:[%s228 + $0xbc] sm:$0xff]
      %v297 = vld [vmem:[%s228 + $0xc4] sm:$0xff]
      %v298 = vld [vmem:[%s228 + $0xcc] sm:$0xff]
      %v299 = vld [vmem:[%s228 + $0xd4] sm:$0xf]
      %v300 = vld [vmem:[%s228 + $0xd8] sm:$0xff]
      %v301 = vld [vmem:[%s228 + $0xe0] sm:$0xff]
      %v302 = vld [vmem:[%s228 + $0xe8] sm:$0xff]
      %v303 = vld [vmem:[%s228 + $0xf0] sm:$0xff]
      %v304 = vld [vmem:[%s228 + $0xf8] sm:$0xf]
      %v305 = vld [vmem:[%s228 + $0xfc] sm:$0xff]
      %v306 = vld [vmem:[%s228 + $0x104] sm:$0xff]
      %v307 = vld [vmem:[%s228 + $0x10c] sm:$0xff]
      %v308 = vld [vmem:[%s228 + $0x114] sm:$0xff]
      %v309 = vld [vmem:[%s228 + $0x11c] sm:$0xf]
      %v310 = vld [vmem:[%s235] sm:$0xf]
      %v311 = vld [vmem:[%s235 + $0x4] sm:$0xf]
      %v312 = vld [vmem:[%s235 + $0x8] sm:$0xf]
      %v313 = vld [vmem:[%s235 + $0xc] sm:$0xf]
      %v314 = vld [vmem:[%s235 + $0x10] sm:$0xf]
      %v315 = vld [vmem:[%s235 + $0x14] sm:$0xf]
      %v316 = vld [vmem:[%s235 + $0x18] sm:$0xf]
      %v317 = vld [vmem:[%s235 + $0x1c] sm:$0xf]
      %v318 = vld [vmem:[%s235 + $0x20] sm:$0xf]
      %v319 = vld [vmem:[%s235 + $0x24] sm:$0xf]
      %v320 = vld [vmem:[%s235 + $0x28] sm:$0xf]
      %v321 = vld [vmem:[%s235 + $0x2c] sm:$0xf]
      %v322 = vld [vmem:[%s235 + $0x30] sm:$0xf]
      %v323 = vld [vmem:[%s235 + $0x34] sm:$0xf]
      %v324 = vld [vmem:[%s235 + $0x38] sm:$0xf]
      %v325 = vld [vmem:[%s235 + $0x3c] sm:$0xf]
      %v326 = vld [vmem:[%s235 + $0x40] sm:$0xf]
      %v327 = vld [vmem:[%s235 + $0x44] sm:$0xf]
      %v328 = vld [vmem:[%s235 + $0x48] sm:$0xf]
      %v329 = vld [vmem:[%s235 + $0x4c] sm:$0xf]
      %v330 = vld [vmem:[%s235 + $0x50] sm:$0xf]
      %v331 = vld [vmem:[%s235 + $0x54] sm:$0xf]
      %v332 = vld [vmem:[%s235 + $0x58] sm:$0xf]
      %v333 = vld [vmem:[%s235 + $0x5c] sm:$0xf]
      %v334 = vld [vmem:[%s235 + $0x60] sm:$0xf]
      %v335 = vld [vmem:[%s235 + $0x64] sm:$0xf]
      %v336 = vld [vmem:[%s235 + $0x68] sm:$0xf]
      %v337 = vld [vmem:[%s235 + $0x6c] sm:$0xf]
      %v338 = vld [vmem:[%s235 + $0x70] sm:$0xf]
      %v339 = vld [vmem:[%s235 + $0x74] sm:$0xf]
      %v340 = vld [vmem:[%s235 + $0x78] sm:$0xf]
      %v341 = vld [vmem:[%s235 + $0x7c] sm:$0xf]
      %v342 = vld [vmem:[%s235 + $0x80] sm:$0xf]
      %v343 = vld [vmem:[%s235 + $0x84] sm:$0xf]
      %v344 = vld [vmem:[%s235 + $0x88] sm:$0xf]
      %v345 = vld [vmem:[%s235 + $0x8c] sm:$0xf]
      %v346 = vld [vmem:[%s235 + $0x90] sm:$0xf]
      %v347 = vld [vmem:[%s235 + $0x94] sm:$0xf]
      %v348 = vld [vmem:[%s235 + $0x98] sm:$0xf]
      %v349 = vld [vmem:[%s235 + $0x9c] sm:$0xf]
      %v350 = vld [vmem:[%s235 + $0xa0] sm:$0xf]
      %v351 = vld [vmem:[%s235 + $0xa4] sm:$0xf]
      %v352 = vld [vmem:[%s235 + $0xa8] sm:$0xf]
      %v353 = vld [vmem:[%s235 + $0xac] sm:$0xf]
      %v354 = vld [vmem:[%s235 + $0xb0] sm:$0xf]
      %v355 = vld [vmem:[%s235 + $0xb4] sm:$0xf]
      %v356 = vld [vmem:[%s235 + $0xb8] sm:$0xf]
      %v357 = vld [vmem:[%s235 + $0xbc] sm:$0xf]
      %v358 = vld [vmem:[%s235 + $0xc0] sm:$0xf]
      %v359 = vld [vmem:[%s235 + $0xc4] sm:$0xf]
      %v360 = vld [vmem:[%s235 + $0xc8] sm:$0xf]
      %v361 = vld [vmem:[%s235 + $0xcc] sm:$0xf]
      %v362 = vld [vmem:[%s235 + $0xd0] sm:$0xf]
      %v363 = vld [vmem:[%s235 + $0xd4] sm:$0xf]
      %v364 = vld [vmem:[%s235 + $0xd8] sm:$0xf]
      %v365 = vld [vmem:[%s235 + $0xdc] sm:$0xf]
      %v366 = vld [vmem:[%s235 + $0xe0] sm:$0xf]
      %v367 = vld [vmem:[%s235 + $0xe4] sm:$0xf]
      %v368 = vld [vmem:[%s235 + $0xe8] sm:$0xf]
      %v369 = vld [vmem:[%s235 + $0xec] sm:$0xf]
      %v370 = vld [vmem:[%s235 + $0xf0] sm:$0xf]
      %v371 = vld [vmem:[%s235 + $0xf4] sm:$0xf]
      %v372 = vld [vmem:[%s235 + $0xf8] sm:$0xf]
      %v373 = vld [vmem:[%s235 + $0xfc] sm:$0xf]
      %v374 = vld [vmem:[%s235 + $0x100] sm:$0xf]
      %v375 = vld [vmem:[%s235 + $0x104] sm:$0xf]
      %v376 = vld [vmem:[%s235 + $0x108] sm:$0xf]
      %v377 = vld [vmem:[%s235 + $0x10c] sm:$0xf]
      %v378 = vld [vmem:[%s235 + $0x110] sm:$0xf]
      %v379 = vld [vmem:[%s235 + $0x114] sm:$0xf]
      %v380 = vld [vmem:[%s235 + $0x118] sm:$0xf]
      %v381 = vld [vmem:[%s235 + $0x11c] sm:$0xf]
      %v382 = vld [vmem:[%s235 + $0x120] sm:$0xf]
      %v383 = vld [vmem:[%s235 + $0x124] sm:$0xf]
      %v384 = vld [vmem:[%s235 + $0x128] sm:$0xf]
      %v385 = vld [vmem:[%s235 + $0x12c] sm:$0xf]
      %v386 = vld [vmem:[%s235 + $0x130] sm:$0xf]
      %v387 = vld [vmem:[%s235 + $0x134] sm:$0xf]
      %v388 = vld [vmem:[%s235 + $0x138] sm:$0xf]
      %v389 = vld [vmem:[%s235 + $0x13c] sm:$0xf]
      %v390 = vld [vmem:[%s235 + $0x140] sm:$0xf]
      %v391 = vld [vmem:[%s235 + $0x144] sm:$0xf]
      %v392 = vld [vmem:[%s235 + $0x148] sm:$0xf]
      %v393 = vld [vmem:[%s235 + $0x14c] sm:$0xf]
      %v394 = vld [vmem:[%s235 + $0x150] sm:$0xf]
      %v395 = vld [vmem:[%s235 + $0x154] sm:$0xf]
      %v396 = vld [vmem:[%s235 + $0x158] sm:$0xf]
      %v397 = vld [vmem:[%s235 + $0x15c] sm:$0xf]
      %v398 = vld [vmem:[%s235 + $0x160] sm:$0xf]
      %v399 = vld [vmem:[%s235 + $0x164] sm:$0xf]
      %v400 = vld [vmem:[%s235 + $0x168] sm:$0xf]
      %v401 = vld [vmem:[%s235 + $0x16c] sm:$0xf]
      %v402 = vld [vmem:[%s235 + $0x170] sm:$0xf]
      %v403 = vld [vmem:[%s235 + $0x174] sm:$0xf]
      %v404 = vld [vmem:[%s235 + $0x178] sm:$0xf]
      %v405 = vld [vmem:[%s235 + $0x17c] sm:$0xf]
      %v406 = vld [vmem:[%s235 + $0x180] sm:$0xf]
      %v407 = vld [vmem:[%s235 + $0x184] sm:$0xf]
      %v408 = vld [vmem:[%s235 + $0x188] sm:$0xf]
      %v409 = vld [vmem:[%s235 + $0x18c] sm:$0xf]
      %v410 = vld [vmem:[%s235 + $0x190] sm:$0xf]
      %v411 = vld [vmem:[%s235 + $0x194] sm:$0xf]
      %v412 = vld [vmem:[%s235 + $0x198] sm:$0xf]
      %v413 = vld [vmem:[%s235 + $0x19c] sm:$0xf]
      %v414 = vld [vmem:[%s235 + $0x1a0] sm:$0xf]
      %v415 = vld [vmem:[%s235 + $0x1a4] sm:$0xf]
      %v416 = vld [vmem:[%s235 + $0x1a8] sm:$0xf]
      %v417 = vld [vmem:[%s235 + $0x1ac] sm:$0xf]
      %v418 = vld [vmem:[%s235 + $0x1b0] sm:$0xf]
      %v419 = vld [vmem:[%s235 + $0x1b4] sm:$0xf]
      %v420 = vld [vmem:[%s235 + $0x1b8] sm:$0xf]
      %v421 = vld [vmem:[%s235 + $0x1bc] sm:$0xf]
      %v422 = vld [vmem:[%s235 + $0x1c0] sm:$0xf]
      %v423 = vld [vmem:[%s235 + $0x1c4] sm:$0xf]
      %v424 = vld [vmem:[%s235 + $0x1c8] sm:$0xf]
      %v425 = vld [vmem:[%s235 + $0x1cc] sm:$0xf]
      %v426 = vld [vmem:[%s235 + $0x1d0] sm:$0xf]
      %v427 = vld [vmem:[%s235 + $0x1d4] sm:$0xf]
      %v428 = vld [vmem:[%s235 + $0x1d8] sm:$0xf]
      %v429 = vld [vmem:[%s235 + $0x1dc] sm:$0xf]
      %v430 = vld [vmem:[%s235 + $0x1e0] sm:$0xf]
      %v431 = vld [vmem:[%s235 + $0x1e4] sm:$0xf]
      %v432 = vld [vmem:[%s235 + $0x1e8] sm:$0xf]
      %v433 = vld [vmem:[%s235 + $0x1ec] sm:$0xf]
      %v434 = vld [vmem:[%s235 + $0x1f0] sm:$0xf]
      %v435 = vld [vmem:[%s235 + $0x1f4] sm:$0xf]
      %v436 = vld [vmem:[%s235 + $0x1f8] sm:$0xf]
      %v437 = vld [vmem:[%s235 + $0x1fc] sm:$0xf]
      %v438 = vld [vmem:[%s235 + $0x200] sm:$0xf]
      %v439 = vld [vmem:[%s235 + $0x204] sm:$0xf]
      %v440 = vld [vmem:[%s235 + $0x208] sm:$0xf]
      %v441 = vld [vmem:[%s235 + $0x20c] sm:$0xf]
      %v442 = vld [vmem:[%s235 + $0x210] sm:$0xf]
      %v443 = vld [vmem:[%s235 + $0x214] sm:$0xf]
      %v444 = vld [vmem:[%s235 + $0x218] sm:$0xf]
      %v445 = vld [vmem:[%s235 + $0x21c] sm:$0xf]
      %v446 = vld [vmem:[%s235 + $0x220] sm:$0xf]
      %v447 = vld [vmem:[%s235 + $0x224] sm:$0xf]
      %v448 = vld [vmem:[%s235 + $0x228] sm:$0xf]
      %v449 = vld [vmem:[%s235 + $0x22c] sm:$0xf]
      %v450 = vld [vmem:[%s235 + $0x230] sm:$0xf]
      %v451 = vld [vmem:[%s235 + $0x234] sm:$0xf]
      %v452 = vld [vmem:[%s235 + $0x238] sm:$0xf]
      %v453 = vld [vmem:[%s235 + $0x23c] sm:$0xf]
      %v494 = vunpack.c.l.b16 %v270
      %v495 = vunpack.c.h.b16 %v270
      %v496 = vunpack.c.l.b16 %v271
      %v497 = vunpack.c.h.b16 %v271
      %v498 = vunpack.c.l.b16 %v272
      %v499 = vunpack.c.h.b16 %v272
      %v500 = vunpack.c.l.b16 %v273
      %v501 = vunpack.c.h.b16 %v273
      %v502 = vunpack.c.l.b16 %v274
      %v503 = vunpack.c.l.b16 %v275
      %v504 = vunpack.c.h.b16 %v275
      %v505 = vunpack.c.l.b16 %v276
      %v506 = vunpack.c.h.b16 %v276
      %v507 = vunpack.c.l.b16 %v277
      %v508 = vunpack.c.h.b16 %v277
      %v509 = vunpack.c.l.b16 %v278
      %v510 = vunpack.c.h.b16 %v278
      %v511 = vunpack.c.l.b16 %v279
      %v512 = vunpack.c.l.b16 %v280
      %v513 = vunpack.c.h.b16 %v280
      %v514 = vunpack.c.l.b16 %v281
      %v515 = vunpack.c.h.b16 %v281
      %v516 = vunpack.c.l.b16 %v282
      %v517 = vunpack.c.h.b16 %v282
      %v518 = vunpack.c.l.b16 %v283
      %v519 = vunpack.c.h.b16 %v283
      %v520 = vunpack.c.l.b16 %v284
      %v521 = vunpack.c.l.b16 %v285
      %v522 = vunpack.c.h.b16 %v285
      %v523 = vunpack.c.l.b16 %v286
      %v524 = vunpack.c.h.b16 %v286
      %v525 = vunpack.c.l.b16 %v287
      %v526 = vunpack.c.h.b16 %v287
      %v527 = vunpack.c.l.b16 %v288
      %v528 = vunpack.c.h.b16 %v288
      %v529 = vunpack.c.l.b16 %v289
      %v530 = vunpack.c.l.b16 %v290
      %v531 = vunpack.c.h.b16 %v290
      %v532 = vunpack.c.l.b16 %v291
      %v533 = vunpack.c.h.b16 %v291
      %v534 = vunpack.c.l.b16 %v292
      %v535 = vunpack.c.h.b16 %v292
      %v536 = vunpack.c.l.b16 %v293
      %v537 = vunpack.c.h.b16 %v293
      %v538 = vunpack.c.l.b16 %v294
      %v539 = vunpack.c.l.b16 %v295
      %v540 = vunpack.c.h.b16 %v295
      %v541 = vunpack.c.l.b16 %v296
      %v542 = vunpack.c.h.b16 %v296
      %v543 = vunpack.c.l.b16 %v297
      %v544 = vunpack.c.h.b16 %v297
      %v545 = vunpack.c.l.b16 %v298
      %v546 = vunpack.c.h.b16 %v298
      %v547 = vunpack.c.l.b16 %v299
      %v548 = vunpack.c.l.b16 %v300
      %v549 = vunpack.c.h.b16 %v300
      %v550 = vunpack.c.l.b16 %v301
      %v551 = vunpack.c.h.b16 %v301
      %v552 = vunpack.c.l.b16 %v302
      %v553 = vunpack.c.h.b16 %v302
      %v554 = vunpack.c.l.b16 %v303
      %v555 = vunpack.c.h.b16 %v303
      %v556 = vunpack.c.l.b16 %v304
      %v557 = vunpack.c.l.b16 %v305
      %v558 = vunpack.c.h.b16 %v305
      %v559 = vunpack.c.l.b16 %v306
      %v560 = vunpack.c.h.b16 %v306
      %v561 = vunpack.c.l.b16 %v307
      %v562 = vunpack.c.h.b16 %v307
      %v563 = vunpack.c.l.b16 %v308
      %v564 = vunpack.c.h.b16 %v308
      %v565 = vunpack.c.l.b16 %v309
      %v566 = vpack.c.b16 %v503, %v494
      %v567 = vpack.c.b16 %v504, %v495
      %v568 = vpack.c.b16 %v505, %v496
      %v569 = vpack.c.b16 %v506, %v497
      %v570 = vpack.c.b16 %v507, %v498
      %v571 = vpack.c.b16 %v508, %v499
      %v572 = vpack.c.b16 %v509, %v500
      %v573 = vpack.c.b16 %v510, %v501
      %v574 = vpack.c.b16 %v511, %v502
      %v575 = vpack.c.b16 %v521, %v512
      %v576 = vpack.c.b16 %v522, %v513
      %v577 = vpack.c.b16 %v523, %v514
      %v578 = vpack.c.b16 %v524, %v515
      %v579 = vpack.c.b16 %v525, %v516
      %v580 = vpack.c.b16 %v526, %v517
      %v581 = vpack.c.b16 %v527, %v518
      %v582 = vpack.c.b16 %v528, %v519
      %v583 = vpack.c.b16 %v529, %v520
      %v584 = vpack.c.b16 %v539, %v530
      %v585 = vpack.c.b16 %v540, %v531
      %v586 = vpack.c.b16 %v541, %v532
      %v587 = vpack.c.b16 %v542, %v533
      %v588 = vpack.c.b16 %v543, %v534
      %v589 = vpack.c.b16 %v544, %v535
      %v590 = vpack.c.b16 %v545, %v536
      %v591 = vpack.c.b16 %v546, %v537
      %v592 = vpack.c.b16 %v547, %v538
      %v593 = vpack.c.b16 %v557, %v548
      %v594 = vpack.c.b16 %v558, %v549
      %v595 = vpack.c.b16 %v559, %v550
      %v596 = vpack.c.b16 %v560, %v551
      %v597 = vpack.c.b16 %v561, %v552
      %v598 = vpack.c.b16 %v562, %v553
      %v599 = vpack.c.b16 %v563, %v554
      %v600 = vpack.c.b16 %v564, %v555
      %v601 = vpack.c.b16 %v565, %v556
      %v782 = vunpack.c.l.b16 %v310
      %v783 = vunpack.c.l.b16 %v311
      %v784 = vunpack.c.l.b16 %v312
      %v785 = vunpack.c.l.b16 %v313
      %v786 = vunpack.c.l.b16 %v314
      %v787 = vunpack.c.l.b16 %v315
      %v788 = vunpack.c.l.b16 %v316
      %v789 = vunpack.c.l.b16 %v317
      %v790 = vunpack.c.l.b16 %v318
      %v791 = vunpack.c.l.b16 %v319
      %v792 = vunpack.c.l.b16 %v320
      %v793 = vunpack.c.l.b16 %v321
      %v794 = vunpack.c.l.b16 %v322
      %v795 = vunpack.c.l.b16 %v323
      %v796 = vunpack.c.l.b16 %v324
      %v797 = vunpack.c.l.b16 %v325
      %v798 = vunpack.c.l.b16 %v326
      %v799 = vunpack.c.l.b16 %v327
      %v800 = vunpack.c.l.b16 %v328
      %v801 = vunpack.c.l.b16 %v329
      %v802 = vunpack.c.l.b16 %v330
      %v803 = vunpack.c.l.b16 %v331
      %v804 = vunpack.c.l.b16 %v332
      %v805 = vunpack.c.l.b16 %v333
      %v806 = vunpack.c.l.b16 %v334
      %v807 = vunpack.c.l.b16 %v335
      %v808 = vunpack.c.l.b16 %v336
      %v809 = vunpack.c.l.b16 %v337
      %v810 = vunpack.c.l.b16 %v338
      %v811 = vunpack.c.l.b16 %v339
      %v812 = vunpack.c.l.b16 %v340
      %v813 = vunpack.c.l.b16 %v341
      %v814 = vunpack.c.l.b16 %v342
      %v815 = vunpack.c.l.b16 %v343
      %v816 = vunpack.c.l.b16 %v344
      %v817 = vunpack.c.l.b16 %v345
      %v818 = vunpack.c.l.b16 %v346
      %v819 = vunpack.c.l.b16 %v347
      %v820 = vunpack.c.l.b16 %v348
      %v821 = vunpack.c.l.b16 %v349
      %v822 = vunpack.c.l.b16 %v350
      %v823 = vunpack.c.l.b16 %v351
      %v824 = vunpack.c.l.b16 %v352
      %v825 = vunpack.c.l.b16 %v353
      %v826 = vunpack.c.l.b16 %v354
      %v827 = vunpack.c.l.b16 %v355
      %v828 = vunpack.c.l.b16 %v356
      %v829 = vunpack.c.l.b16 %v357
      %v830 = vunpack.c.l.b16 %v358
      %v831 = vunpack.c.l.b16 %v359
      %v832 = vunpack.c.l.b16 %v360
      %v833 = vunpack.c.l.b16 %v361
      %v834 = vunpack.c.l.b16 %v362
      %v835 = vunpack.c.l.b16 %v363
      %v836 = vunpack.c.l.b16 %v364
      %v837 = vunpack.c.l.b16 %v365
      %v838 = vunpack.c.l.b16 %v366
      %v839 = vunpack.c.l.b16 %v367
      %v840 = vunpack.c.l.b16 %v368
      %v841 = vunpack.c.l.b16 %v369
      %v842 = vunpack.c.l.b16 %v370
      %v843 = vunpack.c.l.b16 %v371
      %v844 = vunpack.c.l.b16 %v372
      %v845 = vunpack.c.l.b16 %v373
      %v846 = vunpack.c.l.b16 %v374
      %v847 = vunpack.c.l.b16 %v375
      %v848 = vunpack.c.l.b16 %v376
      %v849 = vunpack.c.l.b16 %v377
      %v850 = vunpack.c.l.b16 %v378
      %v851 = vunpack.c.l.b16 %v379
      %v852 = vunpack.c.l.b16 %v380
      %v853 = vunpack.c.l.b16 %v381
      %v854 = vunpack.c.l.b16 %v382
      %v855 = vunpack.c.l.b16 %v383
      %v856 = vunpack.c.l.b16 %v384
      %v857 = vunpack.c.l.b16 %v385
      %v858 = vunpack.c.l.b16 %v386
      %v859 = vunpack.c.l.b16 %v387
      %v860 = vunpack.c.l.b16 %v388
      %v861 = vunpack.c.l.b16 %v389
      %v862 = vunpack.c.l.b16 %v390
      %v863 = vunpack.c.l.b16 %v391
      %v864 = vunpack.c.l.b16 %v392
      %v865 = vunpack.c.l.b16 %v393
      %v866 = vunpack.c.l.b16 %v394
      %v867 = vunpack.c.l.b16 %v395
      %v868 = vunpack.c.l.b16 %v396
      %v869 = vunpack.c.l.b16 %v397
      %v870 = vunpack.c.l.b16 %v398
      %v871 = vunpack.c.l.b16 %v399
      %v872 = vunpack.c.l.b16 %v400
      %v873 = vunpack.c.l.b16 %v401
      %v874 = vunpack.c.l.b16 %v402
      %v875 = vunpack.c.l.b16 %v403
      %v876 = vunpack.c.l.b16 %v404
      %v877 = vunpack.c.l.b16 %v405
      %v878 = vunpack.c.l.b16 %v406
      %v879 = vunpack.c.l.b16 %v407
      %v880 = vunpack.c.l.b16 %v408
      %v881 = vunpack.c.l.b16 %v409
      %v882 = vunpack.c.l.b16 %v410
      %v883 = vunpack.c.l.b16 %v411
      %v884 = vunpack.c.l.b16 %v412
      %v885 = vunpack.c.l.b16 %v413
      %v886 = vunpack.c.l.b16 %v414
      %v887 = vunpack.c.l.b16 %v415
      %v888 = vunpack.c.l.b16 %v416
      %v889 = vunpack.c.l.b16 %v417
      %v890 = vunpack.c.l.b16 %v418
      %v891 = vunpack.c.l.b16 %v419
      %v892 = vunpack.c.l.b16 %v420
      %v893 = vunpack.c.l.b16 %v421
      %v894 = vunpack.c.l.b16 %v422
      %v895 = vunpack.c.l.b16 %v423
      %v896 = vunpack.c.l.b16 %v424
      %v897 = vunpack.c.l.b16 %v425
      %v898 = vunpack.c.l.b16 %v426
      %v899 = vunpack.c.l.b16 %v427
      %v900 = vunpack.c.l.b16 %v428
      %v901 = vunpack.c.l.b16 %v429
      %v902 = vunpack.c.l.b16 %v430
      %v903 = vunpack.c.l.b16 %v431
      %v904 = vunpack.c.l.b16 %v432
      %v905 = vunpack.c.l.b16 %v433
      %v906 = vunpack.c.l.b16 %v434
      %v907 = vunpack.c.l.b16 %v435
      %v908 = vunpack.c.l.b16 %v436
      %v909 = vunpack.c.l.b16 %v437
      %v910 = vunpack.c.l.b16 %v438
      %v911 = vunpack.c.l.b16 %v439
      %v912 = vunpack.c.l.b16 %v440
      %v913 = vunpack.c.l.b16 %v441
      %v914 = vunpack.c.l.b16 %v442
      %v915 = vunpack.c.l.b16 %v443
      %v916 = vunpack.c.l.b16 %v444
      %v917 = vunpack.c.l.b16 %v445
      %v918 = vunpack.c.l.b16 %v446
      %v919 = vunpack.c.l.b16 %v447
      %v920 = vunpack.c.l.b16 %v448
      %v921 = vunpack.c.l.b16 %v449
      %v922 = vunpack.c.l.b16 %v450
      %v923 = vunpack.c.l.b16 %v451
      %v924 = vunpack.c.l.b16 %v452
      %v925 = vunpack.c.l.b16 %v453
      %v926 = vpack.c.b16 %v783, %v782
      %v927 = vpack.c.b16 %v785, %v784
      %v928 = vpack.c.b16 %v787, %v786
      %v929 = vpack.c.b16 %v789, %v788
      %v930 = vpack.c.b16 %v791, %v790
      %v931 = vpack.c.b16 %v793, %v792
      %v932 = vpack.c.b16 %v795, %v794
      %v933 = vpack.c.b16 %v797, %v796
      %v934 = vpack.c.b16 %v799, %v798
      %v935 = vpack.c.b16 %v801, %v800
      %v936 = vpack.c.b16 %v803, %v802
      %v937 = vpack.c.b16 %v805, %v804
      %v938 = vpack.c.b16 %v807, %v806
      %v939 = vpack.c.b16 %v809, %v808
      %v940 = vpack.c.b16 %v811, %v810
      %v941 = vpack.c.b16 %v813, %v812
      %v942 = vpack.c.b16 %v815, %v814
      %v943 = vpack.c.b16 %v817, %v816
      %v944 = vpack.c.b16 %v819, %v818
      %v945 = vpack.c.b16 %v821, %v820
      %v946 = vpack.c.b16 %v823, %v822
      %v947 = vpack.c.b16 %v825, %v824
      %v948 = vpack.c.b16 %v827, %v826
      %v949 = vpack.c.b16 %v829, %v828
      %v950 = vpack.c.b16 %v831, %v830
      %v951 = vpack.c.b16 %v833, %v832
      %v952 = vpack.c.b16 %v835, %v834
      %v953 = vpack.c.b16 %v837, %v836
      %v954 = vpack.c.b16 %v839, %v838
      %v955 = vpack.c.b16 %v841, %v840
      %v956 = vpack.c.b16 %v843, %v842
      %v957 = vpack.c.b16 %v845, %v844
      %v958 = vpack.c.b16 %v847, %v846
      %v959 = vpack.c.b16 %v849, %v848
      %v960 = vpack.c.b16 %v851, %v850
      %v961 = vpack.c.b16 %v853, %v852
      %v962 = vpack.c.b16 %v855, %v854
      %v963 = vpack.c.b16 %v857, %v856
      %v964 = vpack.c.b16 %v859, %v858
      %v965 = vpack.c.b16 %v861, %v860
      %v966 = vpack.c.b16 %v863, %v862
      %v967 = vpack.c.b16 %v865, %v864
      %v968 = vpack.c.b16 %v867, %v866
      %v969 = vpack.c.b16 %v869, %v868
      %v970 = vpack.c.b16 %v871, %v870
      %v971 = vpack.c.b16 %v873, %v872
      %v972 = vpack.c.b16 %v875, %v874
      %v973 = vpack.c.b16 %v877, %v876
      %v974 = vpack.c.b16 %v879, %v878
      %v975 = vpack.c.b16 %v881, %v880
      %v976 = vpack.c.b16 %v883, %v882
      %v977 = vpack.c.b16 %v885, %v884
      %v978 = vpack.c.b16 %v887, %v886
      %v979 = vpack.c.b16 %v889, %v888
      %v980 = vpack.c.b16 %v891, %v890
      %v981 = vpack.c.b16 %v893, %v892
      %v982 = vpack.c.b16 %v895, %v894
      %v983 = vpack.c.b16 %v897, %v896
      %v984 = vpack.c.b16 %v899, %v898
      %v985 = vpack.c.b16 %v901, %v900
      %v986 = vpack.c.b16 %v903, %v902
      %v987 = vpack.c.b16 %v905, %v904
      %v988 = vpack.c.b16 %v907, %v906
      %v989 = vpack.c.b16 %v909, %v908
      %v990 = vpack.c.b16 %v911, %v910
      %v991 = vpack.c.b16 %v913, %v912
      %v992 = vpack.c.b16 %v915, %v914
      %v993 = vpack.c.b16 %v917, %v916
      %v994 = vpack.c.b16 %v919, %v918
      %v995 = vpack.c.b16 %v921, %v920
      %v996 = vpack.c.b16 %v923, %v922
      %v997 = vpack.c.b16 %v925, %v924
      %1070 = vmatprep.subr.bf16.mxu0 0
      %1071 = vmatpush1.bf16.msra.mxu0 %v926
      %1072 = vmatprep.subr.bf16.mxu0 0
      %1073 = vmatpush1.bf16.msra.mxu0 %v927
      %1074 = vmatprep.subr.bf16.mxu0 0
      %1075 = vmatpush1.bf16.msra.mxu0 %v928
      %1076 = vmatprep.subr.bf16.mxu0 0
      %1077 = vmatpush1.bf16.msra.mxu0 %v929
      %1078 = vmatprep.subr.bf16.mxu0 0
      %1079 = vmatpush1.bf16.msra.mxu0 %v930
      %1080 = vmatprep.subr.bf16.mxu0 0
      %1081 = vmatpush1.bf16.msra.mxu0 %v931
      %1082 = vmatprep.subr.bf16.mxu0 0
      %1083 = vmatpush1.bf16.msra.mxu0 %v932
      %1084 = vmatprep.subr.bf16.mxu0 0
      %1085 = vmatpush1.bf16.msra.mxu0 %v933
      %1086 = vmatprep.subr.bf16.mxu0 0
      %1087 = vmatpush1.bf16.msra.mxu0 %v934
      %1088 = vmatprep.subr.bf16.mxu0 0
      %1089 = vmatpush1.bf16.msra.mxu0 %v935
      %1090 = vmatprep.subr.bf16.mxu0 0
      %1091 = vmatpush1.bf16.msra.mxu0 %v936
      %1092 = vmatprep.subr.bf16.mxu0 0
      %1093 = vmatpush1.bf16.msra.mxu0 %v937
      %1094 = vmatprep.subr.bf16.mxu0 0
      %1095 = vmatpush1.bf16.msra.mxu0 %v938
      %1096 = vmatprep.subr.bf16.mxu0 0
      %1097 = vmatpush1.bf16.msra.mxu0 %v939
      %1098 = vmatprep.subr.bf16.mxu0 0
      %1099 = vmatpush1.bf16.msra.mxu0 %v940
      %1100 = vmatprep.subr.bf16.mxu0 0
      %1101 = vmatpush1.bf16.msra.mxu0 %v941
      %1102 = vmatprep.mubr.bf16.mxu0 %v567
      %1103 = vmatmul.mubr.bf16.gmra.mrb[0].mxu0 %v566
      %v1104 = vpop.f32.mrb[0].mxu0
      %v1105 = vadd.f32 0.0, %v1104
      %v1106 = vpop.f32.mrb[0].mxu0
      %v1107 = vpop.f32.mrb[0].mxu0
      %v1108 = vadd.f32 0.0, %v1107
      %v1109 = vpop.f32.mrb[0].mxu0
      %1110 = vmatprep.mubr.bf16.mxu0 %v576
      %1111 = vmatmul.mubr.bf16.gmra.mrb[0].mxu0 %v575
      %v1112 = vpop.f32.mrb[0].mxu0
      %v1113 = vadd.f32 0.0, %v1112
      %v1114 = vpop.f32.mrb[0].mxu0
      %v1115 = vpop.f32.mrb[0].mxu0
      %v1116 = vadd.f32 0.0, %v1115
      %v1117 = vpop.f32.mrb[0].mxu0
      %1118 = vmatprep.mubr.bf16.mxu0 %v585
      %1119 = vmatmul.mubr.bf16.gmra.mrb[0].mxu0 %v584
      %v1120 = vpop.f32.mrb[0].mxu0
      %v1121 = vadd.f32 0.0, %v1120
      %v1122 = vpop.f32.mrb[0].mxu0
      %v1123 = vpop.f32.mrb[0].mxu0
      %v1124 = vadd.f32 0.0, %v1123
      %v1125 = vpop.f32.mrb[0].mxu0
      %1126 = vmatprep.mubr.bf16.mxu0 %v594
      %1127 = vmatmul.mubr.bf16.gmra.mrb[0].mxu0 %v593
      %v1128 = vpop.f32.mrb[0].mxu0
      %v1129 = vadd.f32 0.0, %v1128
      %v1130 = vpop.f32.mrb[0].mxu0
      %v1131 = vpop.f32.mrb[0].mxu0
      %v1132 = vadd.f32 0.0, %v1131
      %v1133 = vpop.f32.mrb[0].mxu0
      %1134 = vdwg.mxu0
      %1135 = vmatprep.subr.bf16.mxu0 0
      %1136 = vmatpush1.bf16.msra.mxu0 %v942
      %1137 = vmatprep.subr.bf16.mxu0 0
      %1138 = vmatpush1.bf16.msra.mxu0 %v943
      %1139 = vmatprep.subr.bf16.mxu0 0
      %1140 = vmatpush1.bf16.msra.mxu0 %v944
      %1141 = vmatprep.subr.bf16.mxu0 0
      %1142 = vmatpush1.bf16.msra.mxu0 %v945
      %1143 = vmatprep.subr.bf16.mxu0 0
      %1144 = vmatpush1.bf16.msra.mxu0 %v946
      %1145 = vmatprep.subr.bf16.mxu0 0
      %1146 = vmatpush1.bf16.msra.mxu0 %v947
      %1147 = vmatprep.subr.bf16.mxu0 0
      %1148 = vmatpush1.bf16.msra.mxu0 %v948
      %1149 = vmatprep.subr.bf16.mxu0 0
      %1150 = vmatpush1.bf16.msra.mxu0 %v949
      %1151 = vmatprep.subr.bf16.mxu0 0
      %1152 = vmatpush1.bf16.msra.mxu0 %v950
      %1153 = vmatprep.subr.bf16.mxu0 0
      %1154 = vmatpush1.bf16.msra.mxu0 %v951
      %1155 = vmatprep.subr.bf16.mxu0 0
      %1156 = vmatpush1.bf16.msra.mxu0 %v952
      %1157 = vmatprep.subr.bf16.mxu0 0
      %1158 = vmatpush1.bf16.msra.mxu0 %v953
      %1159 = vmatprep.subr.bf16.mxu0 0
      %1160 = vmatpush1.bf16.msra.mxu0 %v954
      %1161 = vmatprep.subr.bf16.mxu0 0
      %1162 = vmatpush1.bf16.msra.mxu0 %v955
      %1163 = vmatprep.subr.bf16.mxu0 0
      %1164 = vmatpush1.bf16.msra.mxu0 %v956
      %1165 = vmatprep.subr.bf16.mxu0 0
      %1166 = vmatpush1.bf16.msra.mxu0 %v957
      %1167 = vmatprep.mubr.bf16.mxu0 %v569
      %1168 = vmatmul.mubr.bf16.gmra.mrb[0].mxu0 %v568
      %v1169 = vpop.f32.mrb[0].mxu0
      %v1170 = vadd.f32 %v1105, %v1169
      %v1171 = vpop.f32.mrb[0].mxu0
      %v1172 = vpop.f32.mrb[0].mxu0
      %v1173 = vadd.f32 %v1108, %v1172
      %v1174 = vpop.f32.mrb[0].mxu0
      %1175 = vmatprep.mubr.bf16.mxu0 %v578
      %1176 = vmatmul.mubr.bf16.gmra.mrb[0].mxu0 %v577
      %v1177 = vpop.f32.mrb[0].mxu0
      %v1178 = vadd.f32 %v1113, %v1177
      %v1179 = vpop.f32.mrb[0].mxu0
      %v1180 = vpop.f32.mrb[0].mxu0
      %v1181 = vadd.f32 %v1116, %v1180
      %v1182 = vpop.f32.mrb[0].mxu0
      %1183 = vmatprep.mubr.bf16.mxu0 %v587
      %1184 = vmatmul.mubr.bf16.gmra.mrb[0].mxu0 %v586
      %v1185 = vpop.f32.mrb[0].mxu0
      %v1186 = vadd.f32 %v1121, %v1185
      %v1187 = vpop.f32.mrb[0].mxu0
      %v1188 = vpop.f32.mrb[0].mxu0
      %v1189 = vadd.f32 %v1124, %v1188
      %v1190 = vpop.f32.mrb[0].mxu0
      %1191 = vmatprep.mubr.bf16.mxu0 %v596
      %1192 = vmatmul.mubr.bf16.gmra.mrb[0].mxu0 %v595
      %v1193 = vpop.f32.mrb[0].mxu0
      %v1194 = vadd.f32 %v1129, %v1193
      %v1195 = vpop.f32.mrb[0].mxu0
      %v1196 = vpop.f32.mrb[0].mxu0
      %v1197 = vadd.f32 %v1132, %v1196
      %v1198 = vpop.f32.mrb[0].mxu0
      %1199 = vdwg.mxu0
      %1200 = vmatprep.subr.bf16.mxu0 0
      %1201 = vmatpush1.bf16.msra.mxu0 %v958
      %1202 = vmatprep.subr.bf16.mxu0 0
      %1203 = vmatpush1.bf16.msra.mxu0 %v959
      %1204 = vmatprep.subr.bf16.mxu0 0
      %1205 = vmatpush1.bf16.msra.mxu0 %v960
      %1206 = vmatprep.subr.bf16.mxu0 0
      %1207 = vmatpush1.bf16.msra.mxu0 %v961
      %1208 = vmatprep.subr.bf16.mxu0 0
      %1209 = vmatpush1.bf16.msra.mxu0 %v962
      %1210 = vmatprep.subr.bf16.mxu0 0
      %1211 = vmatpush1.bf16.msra.mxu0 %v963
      %1212 = vmatprep.subr.bf16.mxu0 0
      %1213 = vmatpush1.bf16.msra.mxu0 %v964
      %1214 = vmatprep.subr.bf16.mxu0 0
      %1215 = vmatpush1.bf16.msra.mxu0 %v965
      %1216 = vmatprep.subr.bf16.mxu0 0
      %1217 = vmatpush1.bf16.msra.mxu0 %v966
      %1218 = vmatprep.subr.bf16.mxu0 0
      %1219 = vmatpush1.bf16.msra.mxu0 %v967
      %1220 = vmatprep.subr.bf16.mxu0 0
      %1221 = vmatpush1.bf16.msra.mxu0 %v968
      %1222 = vmatprep.subr.bf16.mxu0 0
      %1223 = vmatpush1.bf16.msra.mxu0 %v969
      %1224 = vmatprep.subr.bf16.mxu0 0
      %1225 = vmatpush1.bf16.msra.mxu0 %v970
      %1226 = vmatprep.subr.bf16.mxu0 0
      %1227 = vmatpush1.bf16.msra.mxu0 %v971
      %1228 = vmatprep.subr.bf16.mxu0 0
      %1229 = vmatpush1.bf16.msra.mxu0 %v972
      %1230 = vmatprep.subr.bf16.mxu0 0
      %1231 = vmatpush1.bf16.msra.mxu0 %v973
      %1232 = vmatprep.mubr.bf16.mxu0 %v571
      %1233 = vmatmul.mubr.bf16.gmra.mrb[0].mxu0 %v570
      %v1234 = vpop.f32.mrb[0].mxu0
      %v1235 = vadd.f32 %v1170, %v1234
      %v1236 = vpop.f32.mrb[0].mxu0
      %v1237 = vpop.f32.mrb[0].mxu0
      %v1238 = vadd.f32 %v1173, %v1237
      %v1239 = vpop.f32.mrb[0].mxu0
      %1240 = vmatprep.mubr.bf16.mxu0 %v580
      %1241 = vmatmul.mubr.bf16.gmra.mrb[0].mxu0 %v579
      %v1242 = vpop.f32.mrb[0].mxu0
      %v1243 = vadd.f32 %v1178, %v1242
      %v1244 = vpop.f32.mrb[0].mxu0
      %v1245 = vpop.f32.mrb[0].mxu0
      %v1246 = vadd.f32 %v1181, %v1245
      %v1247 = vpop.f32.mrb[0].mxu0
      %1248 = vmatprep.mubr.bf16.mxu0 %v589
      %1249 = vmatmul.mubr.bf16.gmra.mrb[0].mxu0 %v588
      %v1250 = vpop.f32.mrb[0].mxu0
      %v1251 = vadd.f32 %v1186, %v1250
      %v1252 = vpop.f32.mrb[0].mxu0
      %v1253 = vpop.f32.mrb[0].mxu0
      %v1254 = vadd.f32 %v1189, %v1253
      %v1255 = vpop.f32.mrb[0].mxu0
      %1256 = vmatprep.mubr.bf16.mxu0 %v598
      %1257 = vmatmul.mubr.bf16.gmra.mrb[0].mxu0 %v597
      %v1258 = vpop.f32.mrb[0].mxu0
      %v1259 = vadd.f32 %v1194, %v1258
      %v1260 = vpop.f32.mrb[0].mxu0
      %v1261 = vpop.f32.mrb[0].mxu0
      %v1262 = vadd.f32 %v1197, %v1261
      %v1263 = vpop.f32.mrb[0].mxu0
      %1264 = vdwg.mxu0
      %1265 = vmatprep.subr.bf16.mxu0 0
      %1266 = vmatpush1.bf16.msra.mxu0 %v974
      %1267 = vmatprep.subr.bf16.mxu0 0
      %1268 = vmatpush1.bf16.msra.mxu0 %v975
      %1269 = vmatprep.subr.bf16.mxu0 0
      %1270 = vmatpush1.bf16.msra.mxu0 %v976
      %1271 = vmatprep.subr.bf16.mxu0 0
      %1272 = vmatpush1.bf16.msra.mxu0 %v977
      %1273 = vmatprep.subr.bf16.mxu0 0
      %1274 = vmatpush1.bf16.msra.mxu0 %v978
      %1275 = vmatprep.subr.bf16.mxu0 0
      %1276 = vmatpush1.bf16.msra.mxu0 %v979
      %1277 = vmatprep.subr.bf16.mxu0 0
      %1278 = vmatpush1.bf16.msra.mxu0 %v980
      %1279 = vmatprep.subr.bf16.mxu0 0
      %1280 = vmatpush1.bf16.msra.mxu0 %v981
      %1281 = vmatprep.subr.bf16.mxu0 0
      %1282 = vmatpush1.bf16.msra.mxu0 %v982
      %1283 = vmatprep.subr.bf16.mxu0 0
      %1284 = vmatpush1.bf16.msra.mxu0 %v983
      %1285 = vmatprep.subr.bf16.mxu0 0
      %1286 = vmatpush1.bf16.msra.mxu0 %v984
      %1287 = vmatprep.subr.bf16.mxu0 0
      %1288 = vmatpush1.bf16.msra.mxu0 %v985
      %1289 = vmatprep.subr.bf16.mxu0 0
      %1290 = vmatpush1.bf16.msra.mxu0 %v986
      %1291 = vmatprep.subr.bf16.mxu0 0
      %1292 = vmatpush1.bf16.msra.mxu0 %v987
      %1293 = vmatprep.subr.bf16.mxu0 0
      %1294 = vmatpush1.bf16.msra.mxu0 %v988
      %1295 = vmatprep.subr.bf16.mxu0 0
      %1296 = vmatpush1.bf16.msra.mxu0 %v989
      %1297 = vmatprep.mubr.bf16.mxu0 %v573
      %1298 = vmatmul.mubr.bf16.gmra.mrb[0].mxu0 %v572
      %v1299 = vpop.f32.mrb[0].mxu0
      %v1300 = vadd.f32 %v1235, %v1299
      %v1301 = vpop.f32.mrb[0].mxu0
      %v1302 = vpop.f32.mrb[0].mxu0
      %v1303 = vadd.f32 %v1238, %v1302
      %v1304 = vpop.f32.mrb[0].mxu0
      %1305 = vmatprep.mubr.bf16.mxu0 %v582
      %1306 = vmatmul.mubr.bf16.gmra.mrb[0].mxu0 %v581
      %v1307 = vpop.f32.mrb[0].mxu0
      %v1308 = vadd.f32 %v1243, %v1307
      %v1309 = vpop.f32.mrb[0].mxu0
      %v1310 = vpop.f32.mrb[0].mxu0
      %v1311 = vadd.f32 %v1246, %v1310
      %v1312 = vpop.f32.mrb[0].mxu0
      %1313 = vmatprep.mubr.bf16.mxu0 %v591
      %1314 = vmatmul.mubr.bf16.gmra.mrb[0].mxu0 %v590
      %v1315 = vpop.f32.mrb[0].mxu0
      %v1316 = vadd.f32 %v1251, %v1315
      %v1317 = vpop.f32.mrb[0].mxu0
      %v1318 = vpop.f32.mrb[0].mxu0
      %v1319 = vadd.f32 %v1254, %v1318
      %v1320 = vpop.f32.mrb[0].mxu0
      %1321 = vmatprep.mubr.bf16.mxu0 %v600
      %1322 = vmatmul.mubr.bf16.gmra.mrb[0].mxu0 %v599
      %v1323 = vpop.f32.mrb[0].mxu0
      %v1324 = vadd.f32 %v1259, %v1323
      %v1325 = vpop.f32.mrb[0].mxu0
      %v1326 = vpop.f32.mrb[0].mxu0
      %v1327 = vadd.f32 %v1262, %v1326
      %v1328 = vpop.f32.mrb[0].mxu0
      %1329 = vdwg.mxu0
      %1330 = vmatprep.subr.bf16.mxu0 0
      %1331 = vmatpush1.bf16.msra.mxu0 %v990
      %1332 = vmatprep.subr.bf16.mxu0 0
      %1333 = vmatpush1.bf16.msra.mxu0 %v991
      %1334 = vmatprep.subr.bf16.mxu0 0
      %1335 = vmatpush1.bf16.msra.mxu0 %v992
      %1336 = vmatprep.subr.bf16.mxu0 0
      %1337 = vmatpush1.bf16.msra.mxu0 %v993
      %1338 = vmatprep.subr.bf16.mxu0 0
      %1339 = vmatpush1.bf16.msra.mxu0 %v994
      %1340 = vmatprep.subr.bf16.mxu0 0
      %1341 = vmatpush1.bf16.msra.mxu0 %v995
      %1342 = vmatprep.subr.bf16.mxu0 0
      %1343 = vmatpush1.bf16.msra.mxu0 %v996
      %1344 = vmatprep.subr.bf16.mxu0 0
      %1345 = vmatpush1.bf16.msra.mxu0 %v997
      %1346 = vmatprep.subr.bf16.mxu0 0
      %1347 = vmatpush1.bf16.msra.mxu0 0
      %1348 = vmatprep.subr.bf16.mxu0 0
      %1349 = vmatpush1.bf16.msra.mxu0 0
      %1350 = vmatprep.subr.bf16.mxu0 0
      %1351 = vmatpush1.bf16.msra.mxu0 0
      %1352 = vmatprep.subr.bf16.mxu0 0
      %1353 = vmatpush1.bf16.msra.mxu0 0
      %1354 = vmatprep.subr.bf16.mxu0 0
      %1355 = vmatpush1.bf16.msra.mxu0 0
      %1356 = vmatprep.subr.bf16.mxu0 0
      %1357 = vmatpush1.bf16.msra.mxu0 0
      %1358 = vmatprep.subr.bf16.mxu0 0
      %1359 = vmatpush1.bf16.msra.mxu0 0
      %1360 = vmatprep.subr.bf16.mxu0 0
      %1361 = vmatpush1.bf16.msra.mxu0 0
      %1362 = vmatprep.mubr.bf16.mxu0 0
      %1363 = vmatmul.mubr.bf16.gmra.mrb[0].mxu0 %v574
      %v1364 = vpop.f32.mrb[0].mxu0
      %v1365 = vadd.f32 %v1300, %v1364
      %v1366 = vpop.f32.mrb[0].mxu0
      %v1367 = vpop.f32.mrb[0].mxu0
      %v1368 = vadd.f32 %v1303, %v1367
      %v1369 = vpop.f32.mrb[0].mxu0
      %1370 = vmatprep.mubr.bf16.mxu0 0
      %1371 = vmatmul.mubr.bf16.gmra.mrb[0].mxu0 %v583
      %v1372 = vpop.f32.mrb[0].mxu0
      %v1373 = vadd.f32 %v1308, %v1372
      %v1374 = vpop.f32.mrb[0].mxu0
      %v1375 = vpop.f32.mrb[0].mxu0
      %v1376 = vadd.f32 %v1311, %v1375
      %v1377 = vpop.f32.mrb[0].mxu0
      %1378 = vmatprep.mubr.bf16.mxu0 0
      %1379 = vmatmul.mubr.bf16.gmra.mrb[0].mxu0 %v592
      %v1380 = vpop.f32.mrb[0].mxu0
      %v1381 = vadd.f32 %v1316, %v1380
      %v1382 = vpop.f32.mrb[0].mxu0
      %v1383 = vpop.f32.mrb[0].mxu0
      %v1384 = vadd.f32 %v1319, %v1383
      %v1385 = vpop.f32.mrb[0].mxu0
      %1386 = vmatprep.mubr.bf16.mxu0 0
      %1387 = vmatmul.mubr.bf16.gmra.mrb[0].mxu0 %v601
      %v1388 = vpop.f32.mrb[0].mxu0
      %v1389 = vadd.f32 %v1324, %v1388
      %v1390 = vpop.f32.mrb[0].mxu0
      %v1391 = vpop.f32.mrb[0].mxu0
      %v1392 = vadd.f32 %v1327, %v1391
      %v1393 = vpop.f32.mrb[0].mxu0
      %1394 = vdwg.mxu0
      %v1395 = vadd.f32 %v262, %v1365
      %v1396 = vadd.f32 %v263, %v1368
      %v1397 = vadd.f32 %v264, %v1373
      %v1398 = vadd.f32 %v265, %v1376
      %v1399 = vadd.f32 %v266, %v1381
      %v1400 = vadd.f32 %v267, %v1384
      %v1401 = vadd.f32 %v268, %v1389
      %v1402 = vadd.f32 %v269, %v1392
      %1403 = vst [vmem:[#allocation2] sm:$0xff] %v1395
      %1404 = vst [vmem:[#allocation2 + $0x8] sm:$0xff] %v1396
      %1405 = vst [vmem:[#allocation2 + $0x10] sm:$0xff] %v1397
      %1406 = vst [vmem:[#allocation2 + $0x18] sm:$0xff] %v1398
      %1407 = vst [vmem:[#allocation2 + $0x20] sm:$0xff] %v1399
      %1408 = vst [vmem:[#allocation2 + $0x28] sm:$0xff] %v1400
      %1409 = vst [vmem:[#allocation2 + $0x30] sm:$0xff] %v1401
      %1410 = vst [vmem:[#allocation2 + $0x38] sm:$0xff] %v1402
      // Predicated region
      $region37: #{network_block_apply.7} parent=31 // pred_check
        %p1411 = pneg %p250
      $region38: #{network_block_apply.7} parent=31 // pred_check_branch
        %1413 = sbr.rel (%p1411) target = $region40
      $region39: #{network_block_apply.7} parent=31 // pred_region
        %v1414 = vld [vmem:[#allocation2] sm:$0xff]
        %v1415 = vld [vmem:[#allocation2 + $0x8] sm:$0xff]
        %v1416 = vld [vmem:[#allocation2 + $0x10] sm:$0xff]
        %v1417 = vld [vmem:[#allocation2 + $0x18] sm:$0xff]
        %v1418 = vld [vmem:[#allocation2 + $0x20] sm:$0xff]
        %v1419 = vld [vmem:[#allocation2 + $0x28] sm:$0xff]
        %v1420 = vld [vmem:[#allocation2 + $0x30] sm:$0xff]
        %v1421 = vld [vmem:[#allocation2 + $0x38] sm:$0xff]
        %v1422 = vld [vmem:[%s241] sm:$0xff]
        %v1423 = vld [vmem:[%s241 + $0x8] sm:$0xff]
        %v1424 = vld [vmem:[%s241 + $0x10] sm:$0xff]
        %v1425 = vld [vmem:[%s241 + $0x18] sm:$0xff]
        %v1426 = vld [vmem:[%s241 + $0x20] sm:$0xff]
        %v1427 = vld [vmem:[%s241 + $0x28] sm:$0xff]
        %v1428 = vld [vmem:[%s241 + $0x30] sm:$0xff]
        %v1429 = vld [vmem:[%s241 + $0x38] sm:$0xff]
        %v1430 = vadd.f32 %v1414, %v1422
        %v1431 = vadd.f32 %v1415, %v1423
        %v1432 = vadd.f32 %v1416, %v1424
        %v1433 = vadd.f32 %v1417, %v1425
        %v1434 = vadd.f32 %v1418, %v1426
        %v1435 = vadd.f32 %v1419, %v1427
        %v1436 = vadd.f32 %v1420, %v1428
        %v1437 = vadd.f32 %v1421, %v1429
        %1438 = vst [vmem:[%s247] sm:$0xff] %v1430
        %1439 = vst [vmem:[%s247 + $0x8] sm:$0xff] %v1431
        %1440 = vst [vmem:[%s247 + $0x10] sm:$0xff] %v1432
        %1441 = vst [vmem:[%s247 + $0x18] sm:$0xff] %v1433
        %1442 = vst [vmem:[%s247 + $0x20] sm:$0xff] %v1434
        %1443 = vst [vmem:[%s247 + $0x28] sm:$0xff] %v1435
        %1444 = vst [vmem:[%s247 + $0x30] sm:$0xff] %v1436
        %1445 = vst [vmem:[%s247 + $0x38] sm:$0xff] %v1437
      $region40: #{network_block_apply.7} parent=31 // pred_fallthru
        _
      %s1446 = smul.u32 8, %s18
      %p1447 = scmp.lt.s32.totalorder %s1446, 15
      %s1448 = scalar_select %p1447, %s1446, 15
      %s1449 = smul.addr %s1448, 8
      %s1450 = scalar_lea.vmem %s3, %s1449
      // Predicated region
      $region41: #{network_block_apply.7} parent=31 // pred_check
        %p1451 = pneg %p124
      $region42: #{network_block_apply.7} parent=31 // pred_check_branch
        %1453 = sbr.rel (%p1451) target = $region44
      $region43: #{network_block_apply.7} parent=31 // pred_region
        %s1454 = smul.u32 8, %s18
      $region44: #{network_block_apply.7} parent=31 // pred_fallthru
        _
    $region32: #{network_block_apply.7} parent=5 // pred_fallthru
      _
    %p1455 = scmp.le.s32.totalorder 2, %s9
    // Predicated region
    $region45: #{network_block_apply.7} parent=5 // pred_check
      %p1456 = pneg %p1455
    $region46: #{network_block_apply.7} parent=5 // pred_check_branch
      %1458 = sbr.rel (%p1456) target = $region48
    $region47: #{network_block_apply.7} parent=5 // pred_region
      %s1459 = ssub.s32 %s9, 2
      // Predicated region
      $region49: #{network_block_apply.7} parent=47 // pred_check
        %p1460 = pneg %p130
      $region50: #{network_block_apply.7} parent=47 // pred_check_branch
        %1462 = sbr.rel (%p1460) target = $region52
      $region51: #{network_block_apply.7} parent=47 // pred_region
        %s1463 = smul.u32 8, %s20
        %p1464 = scmp.lt.s32.totalorder %s1463, 15
        %s1465 = scalar_select %p1464, %s1463, 15
        %s1466 = smul.addr %s1465, 8
        %s1467 = scalar_lea.vmem %s3, %s1466
      $region52: #{network_block_apply.7} parent=47 // pred_fallthru
        _
    $region48: #{network_block_apply.7} parent=5 // pred_fallthru
      _
  $region6: #{network_block_apply.7} parent=0 // loop_footer
    %s13 = sadd.s32 1, %s9
  $region7: #{network_block_apply.7} parent=0 // loop_footer_branch
    %8 = sbr.rel target = $region3
  $region8: #{network_block_apply.7} parent=0 // loop_exit
    _

// kernel: network_block_apply.6
$region0: #{network_block_apply.6}
  #allocation0 [shape = 'u32[]', space=smem, size = 0x4, offset = 0x4, fixed_abs, tag = 'smem constant byte address 0x4 - core index']
  #allocation1 [shape = 'u32[144,128]{1,0:T(1,128)}', space=vmem, size = 0x12000, scoped, tag = 'internal scratch']
  #allocation2 [shape = 'f32[64,128]{1,0:T(8,128)}', space=vmem, size = 0x8000, scoped, tag = 'scratch operand']
  %s0 = inlined_call_operand.vmem [shape: bf16[128,1152], index: 0, kind: input, shape index: {}]
  %s1 = inlined_call_operand.vmem [shape: bf16[1152,128], index: 1, kind: input, shape index: {}]
  %s2 = inlined_call_operand.vmem [shape: f32[1,128], index: 2, kind: input, shape index: {}]
  %s3 = inlined_call_operand.vmem [shape: f32[1,128], index: 3, kind: input, shape index: {}]
  %s4 = inlined_call_operand.vmem [shape: bf16[128,128], index: 4, kind: output, shape index: {}]
  %s5 = sld [smem:[#allocation0]]
  $region57: #{network_block_apply.6} parent=0
    _
  %s7 = ssub.s32 1, %s5
  %s8 = scalar_select 0, %s7, %s5
  loop: start=0, step=1, limit=4
  $region2: #{network_block_apply.6} parent=0 // loop_pre_header
    _
  $region3: #{network_block_apply.6} parent=0 // loop_header
    %s10 = sphi 0, %s14
    %p11 = scmp.ge.s32.totalorder %s10, 4
    %s17 = sphi 0, %s29
    %s18 = sphi 0, %s25
    %s19 = sphi 0, %s17
    %s20 = sphi 0, %s18
    %s21 = sphi 0, %s19
    %s22 = sphi 0, %s20
    %s34 = sphi 0, %s36
    %s37 = sphi 0, %s34
    %s38 = sphi 0, %s37
    %s54 = sphi 0, %s38
    %s60 = sphi 0, %s62
    %s63 = sphi 0, %s60
    %s64 = sphi 0, %s63
    %s80 = sphi 0, %s64
    %s84 = sphi 0, %s84
    %s86 = sphi 0, %s84
    %s87 = sphi 0, %s86
    %s101 = sphi 0, %s87
    %s105 = sphi 0, %s105
    %s107 = sphi 0, %s105
    %s108 = sphi 0, %s107
    %s122 = sphi 0, %s108
    %s128 = sphi 0, %s130
    %s131 = sphi 0, %s128
    %s132 = sphi 0, %s131
    %s148 = sphi 0, %s132
  $region4: #{network_block_apply.6} parent=0 // loop_header_branch
    %13 = sbr.rel (%p11) target = $region8
  $region5: #{network_block_apply.6} parent=0 // loop_body
    %s15 = ssub.s32 %s10, 1
    %s16 = ssub.s32 %s10, 2
    %s23 = sadd.s32 1, %s18
    %p24 = scmp.ge.s32.totalorder %s23, 1
    %s25 = scalar_select %p24, 0, %s23
    %s26 = sadd.s32 1, %s17
    %s27 = scalar_select %p24, %s26, %s17
    %p28 = scmp.ge.s32.totalorder %s27, 2
    %s29 = scalar_select %p28, 0, %s27
    %s30 = ssub.s32 %s17, %s29
    %s31 = ssub.s32 %s18, %s25
    %s32 = sor.u32 %s30, %s31
    %p33 = scmp.eq.s32.totalorder %s32, 0
    %s35 = sadd.s32 %s34, 1
    %s36 = scalar_select %p33, %s34, %s35
    %p39 = pneg %p33
    %p40 = scmp.eq.s32.totalorder %s10, 1
    %p41 = por %p39, %p40
    %p42 = scmp.ne.s32.totalorder %s34, %s37
    %p43 = scmp.eq.s32.totalorder %s10, 0
    %p44 = por %p42, %p43
    %p45 = scmp.ne.s32.totalorder %s34, %s37
    %p46 = scmp.eq.s32.totalorder %s15, 1
    %p47 = por %p45, %p46
    %p48 = scmp.ne.s32.totalorder %s37, %s38
    %p49 = scmp.eq.s32.totalorder %s15, 0
    %p50 = por %p48, %p49
    %p51 = scmp.ne.s32.totalorder %s37, %s38
    %p52 = scmp.eq.s32.totalorder %s16, 1
    %p53 = por %p51, %p52
    %p55 = scmp.ne.s32.totalorder %s38, %s54
    %p56 = scmp.eq.s32.totalorder %s16, 0
    %p57 = por %p55, %p56
    %s58 = ssub.s32 %s18, %s25
    %p59 = scmp.eq.s32.totalorder %s58, 0
    %s61 = sadd.s32 %s60, 1
    %s62 = scalar_select %p59, %s60, %s61
    %p65 = pneg %p59
    %p66 = scmp.eq.s32.totalorder %s10, 1
    %p67 = por %p65, %p66
    %p68 = scmp.ne.s32.totalorder %s60, %s63
    %p69 = scmp.eq.s32.totalorder %s10, 0
    %p70 = por %p68, %p69
    %p71 = scmp.ne.s32.totalorder %s60, %s63
    %p72 = scmp.eq.s32.totalorder %s15, 1
    %p73 = por %p71, %p72
    %p74 = scmp.ne.s32.totalorder %s63, %s64
    %p75 = scmp.eq.s32.totalorder %s15, 0
    %p76 = por %p74, %p75
    %p77 = scmp.ne.s32.totalorder %s63, %s64
    %p78 = scmp.eq.s32.totalorder %s16, 1
    %p79 = por %p77, %p78
    %p81 = scmp.ne.s32.totalorder %s64, %s80
    %p82 = scmp.eq.s32.totalorder %s16, 0
    %p83 = por %p81, %p82
    %s85 = sadd.s32 %s84, 1
    %p88 = scmp.eq.s32.totalorder %s10, 1
    %p89 = scmp.ne.s32.totalorder %s84, %s86
    %p90 = scmp.eq.s32.totalorder %s10, 0
    %p91 = por %p89, %p90
    %p92 = scmp.ne.s32.totalorder %s84, %s86
    %p93 = scmp.eq.s32.totalorder %s15, 1
    %p94 = por %p92, %p93
    %p95 = scmp.ne.s32.totalorder %s86, %s87
    %p96 = scmp.eq.s32.totalorder %s15, 0
    %p97 = por %p95, %p96
    %p98 = scmp.ne.s32.totalorder %s86, %s87
    %p99 = scmp.eq.s32.totalorder %s16, 1
    %p100 = por %p98, %p99
    %p102 = scmp.ne.s32.totalorder %s87, %s101
    %p103 = scmp.eq.s32.totalorder %s16, 0
    %p104 = por %p102, %p103
    %s106 = sadd.s32 %s105, 1
    %p109 = scmp.eq.s32.totalorder %s10, 1
    %p110 = scmp.ne.s32.totalorder %s105, %s107
    %p111 = scmp.eq.s32.totalorder %s10, 0
    %p112 = por %p110, %p111
    %p113 = scmp.ne.s32.totalorder %s105, %s107
    %p114 = scmp.eq.s32.totalorder %s15, 1
    %p115 = por %p113, %p114
    %p116 = scmp.ne.s32.totalorder %s107, %s108
    %p117 = scmp.eq.s32.totalorder %s15, 0
    %p118 = por %p116, %p117
    %p119 = scmp.ne.s32.totalorder %s107, %s108
    %p120 = scmp.eq.s32.totalorder %s16, 1
    %p121 = por %p119, %p120
    %p123 = scmp.ne.s32.totalorder %s108, %s122
    %p124 = scmp.eq.s32.totalorder %s16, 0
    %p125 = por %p123, %p124
    %s126 = ssub.s32 %s17, %s29
    %p127 = scmp.eq.s32.totalorder %s126, 0
    %s129 = sadd.s32 %s128, 1
    %s130 = scalar_select %p127, %s128, %s129
    %p133 = pneg %p127
    %p134 = scmp.eq.s32.totalorder %s10, 1
    %p135 = por %p133, %p134
    %p136 = scmp.ne.s32.totalorder %s128, %s131
    %p137 = scmp.eq.s32.totalorder %s10, 0
    %p138 = por %p136, %p137
    %p139 = scmp.ne.s32.totalorder %s128, %s131
    %p140 = scmp.eq.s32.totalorder %s15, 1
    %p141 = por %p139, %p140
    %p142 = scmp.ne.s32.totalorder %s131, %s132
    %p143 = scmp.eq.s32.totalorder %s15, 0
    %p144 = por %p142, %p143
    %p145 = scmp.ne.s32.totalorder %s131, %s132
    %p146 = scmp.eq.s32.totalorder %s16, 1
    %p147 = por %p145, %p146
    %p149 = scmp.ne.s32.totalorder %s132, %s148
    %p150 = scmp.eq.s32.totalorder %s16, 0
    %p151 = por %p149, %p150
    %p152 = scmp.le.s32.totalorder 1, %s10
    %p153 = scmp.lt.s32.totalorder %s10, 3
    %p154 = pnand %p152, %p153
    %p155 = pneg %p154
    // Predicated region
    $region9: #{network_block_apply.6} parent=5 // pred_check
      _
    $region10: #{network_block_apply.6} parent=5 // pred_check_branch
      %157 = sbr.rel (%p154) target = $region12
    $region11: #{network_block_apply.6} parent=5 // pred_region
      %s158 = ssub.s32 %s10, 1
      // Predicated region
      $region13: #{network_block_apply.6} parent=11 // pred_check
        %p159 = pneg %p76
      $region14: #{network_block_apply.6} parent=11 // pred_check_branch
        %161 = sbr.rel (%p159) target = $region16
      $region15: #{network_block_apply.6} parent=11 // pred_region
        %s162 = smul.u32 144, %s20
        %p163 = scmp.lt.s32.totalorder %s162, 143
        %s164 = scalar_select %p163, %s162, 143
        %s165 = smul.addr %s164, 4
        %s166 = scalar_lea.vmem %s1, %s165
        %s167 = smul.u32 144, %s20
      $region16: #{network_block_apply.6} parent=11 // pred_fallthru
        _
      // Predicated region
      $region17: #{network_block_apply.6} parent=11 // pred_check
        %p168 = pneg %p97
      $region18: #{network_block_apply.6} parent=11 // pred_check_branch
        %170 = sbr.rel (%p168) target = $region20
      $region19: #{network_block_apply.6} parent=11 // pred_region
        _
      $region20: #{network_block_apply.6} parent=11 // pred_fallthru
        _
      // Predicated region
      $region21: #{network_block_apply.6} parent=11 // pred_check
        %p171 = pneg %p118
      $region22: #{network_block_apply.6} parent=11 // pred_check_branch
        %173 = sbr.rel (%p171) target = $region24
      $region23: #{network_block_apply.6} parent=11 // pred_region
        _
      $region24: #{network_block_apply.6} parent=11 // pred_fallthru
        _
    $region12: #{network_block_apply.6} parent=5 // pred_fallthru
      _
    %p174 = scmp.lt.s32.totalorder %s10, 2
    // Predicated region
    $region25: #{network_block_apply.6} parent=5 // pred_check
      %p175 = pneg %p174
    $region26: #{network_block_apply.6} parent=5 // pred_check_branch
      %177 = sbr.rel (%p175) target = $region28
    $region27: #{network_block_apply.6} parent=5 // pred_region
      // Predicated region
      $region29: #{network_block_apply.6} parent=27 // pred_check
        %p178 = pneg %p44
      $region30: #{network_block_apply.6} parent=27 // pred_check_branch
        %180 = sbr.rel (%p178) target = $region32
      $region31: #{network_block_apply.6} parent=27 // pred_region
        %s181 = smul.u32 8, %s17
        %s182 = smul.u32 9, %s18
        %p183 = scmp.lt.s32.totalorder %s181, 15
        %s184 = scalar_select %p183, %s181, 15
        %p185 = scmp.lt.s32.totalorder %s182, 8
        %s186 = scalar_select %p185, %s182, 8
        %s187 = smul.addr %s184, 9
        %s188 = sadd.s32 %s186, %s187
        %s189 = smul.addr %s188, 4
        %s190 = scalar_lea.vmem %s0, %s189
        %s191 = smul.u32 8, %s17
        %s192 = smul.u32 9, %s18
      $region32: #{network_block_apply.6} parent=27 // pred_fallthru
        _
    $region28: #{network_block_apply.6} parent=5 // pred_fallthru
      _
    %p193 = scmp.le.s32.totalorder 1, %s10
    %p194 = scmp.lt.s32.totalorder %s10, 3
    %p195 = pnand %p193, %p194
    %p196 = pneg %p195
    // Predicated region
    $region33: #{network_block_apply.6} parent=5 // pred_check
      _
    $region34: #{network_block_apply.6} parent=5 // pred_check_branch
      %198 = sbr.rel (%p195) target = $region36
    $region35: #{network_block_apply.6} parent=5 // pred_region
      %s199 = ssub.s32 %s10, 1
      %s200 = smul.u32 8, %s19
      %s201 = smul.u32 9, %s20
      %p202 = scmp.lt.s32.totalorder %s200, 15
      %s203 = scalar_select %p202, %s200, 15
      %p204 = scmp.lt.s32.totalorder %s201, 8
      %s205 = scalar_select %p204, %s201, 8
      %s206 = smul.addr %s203, 9
      %s207 = sadd.s32 %s205, %s206
      %s208 = smul.addr %s207, 4
      %s209 = scalar_lea.vmem %s0, %s208
      %p210 = pneg %p50
      %p211 = pneg %p47
      %s212 = smul.u32 144, %s20
      %p213 = scmp.lt.s32.totalorder %s212, 143
      %s214 = scalar_select %p213, %s212, 143
      %s215 = smul.addr %s214, 4
      %s216 = scalar_lea.vmem %s1, %s215
      %p217 = pneg %p76
      %p218 = pneg %p73
      %p219 = pneg %p97
      %p220 = pneg %p94
      %p221 = pneg %p118
      %p222 = pneg %p115
      %p223 = pneg %p144
      %p224 = pneg %p141
      %s225 = smul.u32 8, %s19
      %p226 = scmp.lt.s32.totalorder %s225, 15
      %s227 = scalar_select %p226, %s225, 15
      %s228 = smul.addr %s227, 4
      %s229 = scalar_lea.vmem %s4, %s228
      %s230 = smul.u32 8, %s19
      %s231 = smul.u32 9, %s20
      %p232 = scmp.lt.s32.totalorder %s230, 15
      %s233 = scalar_select %p232, %s230, 15
      %p234 = scmp.lt.s32.totalorder %s231, 8
      %s235 = scalar_select %p234, %s231, 8
      %s236 = smul.addr %s233, 9
      %s237 = sadd.s32 %s235, %s236
      %s238 = smul.addr %s237, 4
      %s239 = scalar_lea.vmem %s0, %s238
      %s240 = smul.u32 8, %s19
      %s241 = smul.u32 9, %s20
      %s242 = smul.u32 144, %s20
      %p243 = scmp.lt.s32.totalorder %s242, 143
      %s244 = scalar_select %p243, %s242, 143
      %s245 = smul.addr %s244, 4
      %s246 = scalar_lea.vmem %s1, %s245
      %s247 = smul.u32 144, %s20
      %s248 = smul.u32 8, %s19
      %p249 = scmp.lt.s32.totalorder %s248, 15
      %s250 = scalar_select %p249, %s248, 15
      %s251 = smul.addr %s250, 4
      %s252 = scalar_lea.vmem %s4, %s251
      %s253 = smul.u32 8, %s19
      %p255 = scmp.eq.s32.totalorder %s20, 0
      // Predicated region
      $region37: #{network_block_apply.6} parent=35 // pred_check
        %p256 = pneg %p255
      $region38: #{network_block_apply.6} parent=35 // pred_check_branch
        %258 = sbr.rel (%p256) target = $region40
      $region39: #{network_block_apply.6} parent=35 // pred_region
        %259 = vst [vmem:[#allocation2] sm:$0xff] 0.0
        %260 = vst [vmem:[#allocation2 + $0x8] sm:$0xff] 0.0
        %261 = vst [vmem:[#allocation2 + $0x10] sm:$0xff] 0.0
        %262 = vst [vmem:[#allocation2 + $0x18] sm:$0xff] 0.0
        %263 = vst [vmem:[#allocation2 + $0x20] sm:$0xff] 0.0
        %264 = vst [vmem:[#allocation2 + $0x28] sm:$0xff] 0.0
        %265 = vst [vmem:[#allocation2 + $0x30] sm:$0xff] 0.0
        %266 = vst [vmem:[#allocation2 + $0x38] sm:$0xff] 0.0
      $region40: #{network_block_apply.6} parent=35 // pred_fallthru
        _
      %v267 = vld [vmem:[#allocation2] sm:$0xff]
      %v268 = vld [vmem:[#allocation2 + $0x8] sm:$0xff]
      %v269 = vld [vmem:[#allocation2 + $0x10] sm:$0xff]
      %v270 = vld [vmem:[#allocation2 + $0x18] sm:$0xff]
      %v271 = vld [vmem:[#allocation2 + $0x20] sm:$0xff]
      %v272 = vld [vmem:[#allocation2 + $0x28] sm:$0xff]
      %v273 = vld [vmem:[#allocation2 + $0x30] sm:$0xff]
      %v274 = vld [vmem:[#allocation2 + $0x38] sm:$0xff]
      %v275 = vld [vmem:[%s239] sm:$0xff]
      %v276 = vld [vmem:[%s239 + $0x8] sm:$0xff]
      %v277 = vld [vmem:[%s239 + $0x10] sm:$0xff]
      %v278 = vld [vmem:[%s239 + $0x18] sm:$0xff]
      %v279 = vld [vmem:[%s239 + $0x20] sm:$0xf]
      %v280 = vld [vmem:[%s239 + $0x24] sm:$0xff]
      %v281 = vld [vmem:[%s239 + $0x2c] sm:$0xff]
      %v282 = vld [vmem:[%s239 + $0x34] sm:$0xff]
      %v283 = vld [vmem:[%s239 + $0x3c] sm:$0xff]
      %v284 = vld [vmem:[%s239 + $0x44] sm:$0xf]
      %v285 = vld [vmem:[%s239 + $0x48] sm:$0xff]
      %v286 = vld [vmem:[%s239 + $0x50] sm:$0xff]
      %v287 = vld [vmem:[%s239 + $0x58] sm:$0xff]
      %v288 = vld [vmem:[%s239 + $0x60] sm:$0xff]
      %v289 = vld [vmem:[%s239 + $0x68] sm:$0xf]
      %v290 = vld [vmem:[%s239 + $0x6c] sm:$0xff]
      %v291 = vld [vmem:[%s239 + $0x74] sm:$0xff]
      %v292 = vld [vmem:[%s239 + $0x7c] sm:$0xff]
      %v293 = vld [vmem:[%s239 + $0x84] sm:$0xff]
      %v294 = vld [vmem:[%s239 + $0x8c] sm:$0xf]
      %v295 = vld [vmem:[%s239 + $0x90] sm:$0xff]
      %v296 = vld [vmem:[%s239 + $0x98] sm:$0xff]
      %v297 = vld [vmem:[%s239 + $0xa0] sm:$0xff]
      %v298 = vld [vmem:[%s239 + $0xa8] sm:$0xff]
      %v299 = vld [vmem:[%s239 + $0xb0] sm:$0xf]
      %v300 = vld [vmem:[%s239 + $0xb4] sm:$0xff]
      %v301 = vld [vmem:[%s239 + $0xbc] sm:$0xff]
      %v302 = vld [vmem:[%s239 + $0xc4] sm:$0xff]
      %v303 = vld [vmem:[%s239 + $0xcc] sm:$0xff]
      %v304 = vld [vmem:[%s239 + $0xd4] sm:$0xf]
      %v305 = vld [vmem:[%s239 + $0xd8] sm:$0xff]
      %v306 = vld [vmem:[%s239 + $0xe0] sm:$0xff]
      %v307 = vld [vmem:[%s239 + $0xe8] sm:$0xff]
      %v308 = vld [vmem:[%s239 + $0xf0] sm:$0xff]
      %v309 = vld [vmem:[%s239 + $0xf8] sm:$0xf]
      %v310 = vld [vmem:[%s239 + $0xfc] sm:$0xff]
      %v311 = vld [vmem:[%s239 + $0x104] sm:$0xff]
      %v312 = vld [vmem:[%s239 + $0x10c] sm:$0xff]
      %v313 = vld [vmem:[%s239 + $0x114] sm:$0xff]
      %v314 = vld [vmem:[%s239 + $0x11c] sm:$0xf]
      %v315 = vld [vmem:[%s246] sm:$0xf]
      %v316 = vld [vmem:[%s246 + $0x4] sm:$0xf]
      %v317 = vld [vmem:[%s246 + $0x8] sm:$0xf]
      %v318 = vld [vmem:[%s246 + $0xc] sm:$0xf]
      %v319 = vld [vmem:[%s246 + $0x10] sm:$0xf]
      %v320 = vld [vmem:[%s246 + $0x14] sm:$0xf]
      %v321 = vld [vmem:[%s246 + $0x18] sm:$0xf]
      %v322 = vld [vmem:[%s246 + $0x1c] sm:$0xf]
      %v323 = vld [vmem:[%s246 + $0x20] sm:$0xf]
      %v324 = vld [vmem:[%s246 + $0x24] sm:$0xf]
      %v325 = vld [vmem:[%s246 + $0x28] sm:$0xf]
      %v326 = vld [vmem:[%s246 + $0x2c] sm:$0xf]
      %v327 = vld [vmem:[%s246 + $0x30] sm:$0xf]
      %v328 = vld [vmem:[%s246 + $0x34] sm:$0xf]
      %v329 = vld [vmem:[%s246 + $0x38] sm:$0xf]
      %v330 = vld [vmem:[%s246 + $0x3c] sm:$0xf]
      %v331 = vld [vmem:[%s246 + $0x40] sm:$0xf]
      %v332 = vld [vmem:[%s246 + $0x44] sm:$0xf]
      %v333 = vld [vmem:[%s246 + $0x48] sm:$0xf]
      %v334 = vld [vmem:[%s246 + $0x4c] sm:$0xf]
      %v335 = vld [vmem:[%s246 + $0x50] sm:$0xf]
      %v336 = vld [vmem:[%s246 + $0x54] sm:$0xf]
      %v337 = vld [vmem:[%s246 + $0x58] sm:$0xf]
      %v338 = vld [vmem:[%s246 + $0x5c] sm:$0xf]
      %v339 = vld [vmem:[%s246 + $0x60] sm:$0xf]
      %v340 = vld [vmem:[%s246 + $0x64] sm:$0xf]
      %v341 = vld [vmem:[%s246 + $0x68] sm:$0xf]
      %v342 = vld [vmem:[%s246 + $0x6c] sm:$0xf]
      %v343 = vld [vmem:[%s246 + $0x70] sm:$0xf]
      %v344 = vld [vmem:[%s246 + $0x74] sm:$0xf]
      %v345 = vld [vmem:[%s246 + $0x78] sm:$0xf]
      %v346 = vld [vmem:[%s246 + $0x7c] sm:$0xf]
      %v347 = vld [vmem:[%s246 + $0x80] sm:$0xf]
      %v348 = vld [vmem:[%s246 + $0x84] sm:$0xf]
      %v349 = vld [vmem:[%s246 + $0x88] sm:$0xf]
      %v350 = vld [vmem:[%s246 + $0x8c] sm:$0xf]
      %v351 = vld [vmem:[%s246 + $0x90] sm:$0xf]
      %v352 = vld [vmem:[%s246 + $0x94] sm:$0xf]
      %v353 = vld [vmem:[%s246 + $0x98] sm:$0xf]
      %v354 = vld [vmem:[%s246 + $0x9c] sm:$0xf]
      %v355 = vld [vmem:[%s246 + $0xa0] sm:$0xf]
      %v356 = vld [vmem:[%s246 + $0xa4] sm:$0xf]
      %v357 = vld [vmem:[%s246 + $0xa8] sm:$0xf]
      %v358 = vld [vmem:[%s246 + $0xac] sm:$0xf]
      %v359 = vld [vmem:[%s246 + $0xb0] sm:$0xf]
      %v360 = vld [vmem:[%s246 + $0xb4] sm:$0xf]
      %v361 = vld [vmem:[%s246 + $0xb8] sm:$0xf]
      %v362 = vld [vmem:[%s246 + $0xbc] sm:$0xf]
      %v363 = vld [vmem:[%s246 + $0xc0] sm:$0xf]
      %v364 = vld [vmem:[%s246 + $0xc4] sm:$0xf]
      %v365 = vld [vmem:[%s246 + $0xc8] sm:$0xf]
      %v366 = vld [vmem:[%s246 + $0xcc] sm:$0xf]
      %v367 = vld [vmem:[%s246 + $0xd0] sm:$0xf]
      %v368 = vld [vmem:[%s246 + $0xd4] sm:$0xf]
      %v369 = vld [vmem:[%s246 + $0xd8] sm:$0xf]
      %v370 = vld [vmem:[%s246 + $0xdc] sm:$0xf]
      %v371 = vld [vmem:[%s246 + $0xe0] sm:$0xf]
      %v372 = vld [vmem:[%s246 + $0xe4] sm:$0xf]
      %v373 = vld [vmem:[%s246 + $0xe8] sm:$0xf]
      %v374 = vld [vmem:[%s246 + $0xec] sm:$0xf]
      %v375 = vld [vmem:[%s246 + $0xf0] sm:$0xf]
      %v376 = vld [vmem:[%s246 + $0xf4] sm:$0xf]
      %v377 = vld [vmem:[%s246 + $0xf8] sm:$0xf]
      %v378 = vld [vmem:[%s246 + $0xfc] sm:$0xf]
      %v379 = vld [vmem:[%s246 + $0x100] sm:$0xf]
      %v380 = vld [vmem:[%s246 + $0x104] sm:$0xf]
      %v381 = vld [vmem:[%s246 + $0x108] sm:$0xf]
      %v382 = vld [vmem:[%s246 + $0x10c] sm:$0xf]
      %v383 = vld [vmem:[%s246 + $0x110] sm:$0xf]
      %v384 = vld [vmem:[%s246 + $0x114] sm:$0xf]
      %v385 = vld [vmem:[%s246 + $0x118] sm:$0xf]
      %v386 = vld [vmem:[%s246 + $0x11c] sm:$0xf]
      %v387 = vld [vmem:[%s246 + $0x120] sm:$0xf]
      %v388 = vld [vmem:[%s246 + $0x124] sm:$0xf]
      %v389 = vld [vmem:[%s246 + $0x128] sm:$0xf]
      %v390 = vld [vmem:[%s246 + $0x12c] sm:$0xf]
      %v391 = vld [vmem:[%s246 + $0x130] sm:$0xf]
      %v392 = vld [vmem:[%s246 + $0x134] sm:$0xf]
      %v393 = vld [vmem:[%s246 + $0x138] sm:$0xf]
      %v394 = vld [vmem:[%s246 + $0x13c] sm:$0xf]
      %v395 = vld [vmem:[%s246 + $0x140] sm:$0xf]
      %v396 = vld [vmem:[%s246 + $0x144] sm:$0xf]
      %v397 = vld [vmem:[%s246 + $0x148] sm:$0xf]
      %v398 = vld [vmem:[%s246 + $0x14c] sm:$0xf]
      %v399 = vld [vmem:[%s246 + $0x150] sm:$0xf]
      %v400 = vld [vmem:[%s246 + $0x154] sm:$0xf]
      %v401 = vld [vmem:[%s246 + $0x158] sm:$0xf]
      %v402 = vld [vmem:[%s246 + $0x15c] sm:$0xf]
      %v403 = vld [vmem:[%s246 + $0x160] sm:$0xf]
      %v404 = vld [vmem:[%s246 + $0x164] sm:$0xf]
      %v405 = vld [vmem:[%s246 + $0x168] sm:$0xf]
      %v406 = vld [vmem:[%s246 + $0x16c] sm:$0xf]
      %v407 = vld [vmem:[%s246 + $0x170] sm:$0xf]
      %v408 = vld [vmem:[%s246 + $0x174] sm:$0xf]
      %v409 = vld [vmem:[%s246 + $0x178] sm:$0xf]
      %v410 = vld [vmem:[%s246 + $0x17c] sm:$0xf]
      %v411 = vld [vmem:[%s246 + $0x180] sm:$0xf]
      %v412 = vld [vmem:[%s246 + $0x184] sm:$0xf]
      %v413 = vld [vmem:[%s246 + $0x188] sm:$0xf]
      %v414 = vld [vmem:[%s246 + $0x18c] sm:$0xf]
      %v415 = vld [vmem:[%s246 + $0x190] sm:$0xf]
      %v416 = vld [vmem:[%s246 + $0x194] sm:$0xf]
      %v417 = vld [vmem:[%s246 + $0x198] sm:$0xf]
      %v418 = vld [vmem:[%s246 + $0x19c] sm:$0xf]
      %v419 = vld [vmem:[%s246 + $0x1a0] sm:$0xf]
      %v420 = vld [vmem:[%s246 + $0x1a4] sm:$0xf]
      %v421 = vld [vmem:[%s246 + $0x1a8] sm:$0xf]
      %v422 = vld [vmem:[%s246 + $0x1ac] sm:$0xf]
      %v423 = vld [vmem:[%s246 + $0x1b0] sm:$0xf]
      %v424 = vld [vmem:[%s246 + $0x1b4] sm:$0xf]
      %v425 = vld [vmem:[%s246 + $0x1b8] sm:$0xf]
      %v426 = vld [vmem:[%s246 + $0x1bc] sm:$0xf]
      %v427 = vld [vmem:[%s246 + $0x1c0] sm:$0xf]
      %v428 = vld [vmem:[%s246 + $0x1c4] sm:$0xf]
      %v429 = vld [vmem:[%s246 + $0x1c8] sm:$0xf]
      %v430 = vld [vmem:[%s246 + $0x1cc] sm:$0xf]
      %v431 = vld [vmem:[%s246 + $0x1d0] sm:$0xf]
      %v432 = vld [vmem:[%s246 + $0x1d4] sm:$0xf]
      %v433 = vld [vmem:[%s246 + $0x1d8] sm:$0xf]
      %v434 = vld [vmem:[%s246 + $0x1dc] sm:$0xf]
      %v435 = vld [vmem:[%s246 + $0x1e0] sm:$0xf]
      %v436 = vld [vmem:[%s246 + $0x1e4] sm:$0xf]
      %v437 = vld [vmem:[%s246 + $0x1e8] sm:$0xf]
      %v438 = vld [vmem:[%s246 + $0x1ec] sm:$0xf]
      %v439 = vld [vmem:[%s246 + $0x1f0] sm:$0xf]
      %v440 = vld [vmem:[%s246 + $0x1f4] sm:$0xf]
      %v441 = vld [vmem:[%s246 + $0x1f8] sm:$0xf]
      %v442 = vld [vmem:[%s246 + $0x1fc] sm:$0xf]
      %v443 = vld [vmem:[%s246 + $0x200] sm:$0xf]
      %v444 = vld [vmem:[%s246 + $0x204] sm:$0xf]
      %v445 = vld [vmem:[%s246 + $0x208] sm:$0xf]
      %v446 = vld [vmem:[%s246 + $0x20c] sm:$0xf]
      %v447 = vld [vmem:[%s246 + $0x210] sm:$0xf]
      %v448 = vld [vmem:[%s246 + $0x214] sm:$0xf]
      %v449 = vld [vmem:[%s246 + $0x218] sm:$0xf]
      %v450 = vld [vmem:[%s246 + $0x21c] sm:$0xf]
      %v451 = vld [vmem:[%s246 + $0x220] sm:$0xf]
      %v452 = vld [vmem:[%s246 + $0x224] sm:$0xf]
      %v453 = vld [vmem:[%s246 + $0x228] sm:$0xf]
      %v454 = vld [vmem:[%s246 + $0x22c] sm:$0xf]
      %v455 = vld [vmem:[%s246 + $0x230] sm:$0xf]
      %v456 = vld [vmem:[%s246 + $0x234] sm:$0xf]
      %v457 = vld [vmem:[%s246 + $0x238] sm:$0xf]
      %v458 = vld [vmem:[%s246 + $0x23c] sm:$0xf]
      %v499 = vunpack.c.l.b16 %v275
      %v500 = vunpack.c.h.b16 %v275
      %v501 = vunpack.c.l.b16 %v276
      %v502 = vunpack.c.h.b16 %v276
      %v503 = vunpack.c.l.b16 %v277
      %v504 = vunpack.c.h.b16 %v277
      %v505 = vunpack.c.l.b16 %v278
      %v506 = vunpack.c.h.b16 %v278
      %v507 = vunpack.c.l.b16 %v279
      %v508 = vunpack.c.l.b16 %v280
      %v509 = vunpack.c.h.b16 %v280
      %v510 = vunpack.c.l.b16 %v281
      %v511 = vunpack.c.h.b16 %v281
      %v512 = vunpack.c.l.b16 %v282
      %v513 = vunpack.c.h.b16 %v282
      %v514 = vunpack.c.l.b16 %v283
      %v515 = vunpack.c.h.b16 %v283
      %v516 = vunpack.c.l.b16 %v284
      %v517 = vunpack.c.l.b16 %v285
      %v518 = vunpack.c.h.b16 %v285
      %v519 = vunpack.c.l.b16 %v286
      %v520 = vunpack.c.h.b16 %v286
      %v521 = vunpack.c.l.b16 %v287
      %v522 = vunpack.c.h.b16 %v287
      %v523 = vunpack.c.l.b16 %v288
      %v524 = vunpack.c.h.b16 %v288
      %v525 = vunpack.c.l.b16 %v289
      %v526 = vunpack.c.l.b16 %v290
      %v527 = vunpack.c.h.b16 %v290
      %v528 = vunpack.c.l.b16 %v291
      %v529 = vunpack.c.h.b16 %v291
      %v530 = vunpack.c.l.b16 %v292
      %v531 = vunpack.c.h.b16 %v292
      %v532 = vunpack.c.l.b16 %v293
      %v533 = vunpack.c.h.b16 %v293
      %v534 = vunpack.c.l.b16 %v294
      %v535 = vunpack.c.l.b16 %v295
      %v536 = vunpack.c.h.b16 %v295
      %v537 = vunpack.c.l.b16 %v296
      %v538 = vunpack.c.h.b16 %v296
      %v539 = vunpack.c.l.b16 %v297
      %v540 = vunpack.c.h.b16 %v297
      %v541 = vunpack.c.l.b16 %v298
      %v542 = vunpack.c.h.b16 %v298
      %v543 = vunpack.c.l.b16 %v299
      %v544 = vunpack.c.l.b16 %v300
      %v545 = vunpack.c.h.b16 %v300
      %v546 = vunpack.c.l.b16 %v301
      %v547 = vunpack.c.h.b16 %v301
      %v548 = vunpack.c.l.b16 %v302
      %v549 = vunpack.c.h.b16 %v302
      %v550 = vunpack.c.l.b16 %v303
      %v551 = vunpack.c.h.b16 %v303
      %v552 = vunpack.c.l.b16 %v304
      %v553 = vunpack.c.l.b16 %v305
      %v554 = vunpack.c.h.b16 %v305
      %v555 = vunpack.c.l.b16 %v306
      %v556 = vunpack.c.h.b16 %v306
      %v557 = vunpack.c.l.b16 %v307
      %v558 = vunpack.c.h.b16 %v307
      %v559 = vunpack.c.l.b16 %v308
      %v560 = vunpack.c.h.b16 %v308
      %v561 = vunpack.c.l.b16 %v309
      %v562 = vunpack.c.l.b16 %v310
      %v563 = vunpack.c.h.b16 %v310
      %v564 = vunpack.c.l.b16 %v311
      %v565 = vunpack.c.h.b16 %v311
      %v566 = vunpack.c.l.b16 %v312
      %v567 = vunpack.c.h.b16 %v312
      %v568 = vunpack.c.l.b16 %v313
      %v569 = vunpack.c.h.b16 %v313
      %v570 = vunpack.c.l.b16 %v314
      %v571 = vpack.c.b16 %v508, %v499
      %v572 = vpack.c.b16 %v509, %v500
      %v573 = vpack.c.b16 %v510, %v501
      %v574 = vpack.c.b16 %v511, %v502
      %v575 = vpack.c.b16 %v512, %v503
      %v576 = vpack.c.b16 %v513, %v504
      %v577 = vpack.c.b16 %v514, %v505
      %v578 = vpack.c.b16 %v515, %v506
      %v579 = vpack.c.b16 %v516, %v507
      %v580 = vpack.c.b16 %v526, %v517
      %v581 = vpack.c.b16 %v527, %v518
      %v582 = vpack.c.b16 %v528, %v519
      %v583 = vpack.c.b16 %v529, %v520
      %v584 = vpack.c.b16 %v530, %v521
      %v585 = vpack.c.b16 %v531, %v522
      %v586 = vpack.c.b16 %v532, %v523
      %v587 = vpack.c.b16 %v533, %v524
      %v588 = vpack.c.b16 %v534, %v525
      %v589 = vpack.c.b16 %v544, %v535
      %v590 = vpack.c.b16 %v545, %v536
      %v591 = vpack.c.b16 %v546, %v537
      %v592 = vpack.c.b16 %v547, %v538
      %v593 = vpack.c.b16 %v548, %v539
      %v594 = vpack.c.b16 %v549, %v540
      %v595 = vpack.c.b16 %v550, %v541
      %v596 = vpack.c.b16 %v551, %v542
      %v597 = vpack.c.b16 %v552, %v543
      %v598 = vpack.c.b16 %v562, %v553
      %v599 = vpack.c.b16 %v563, %v554
      %v600 = vpack.c.b16 %v564, %v555
      %v601 = vpack.c.b16 %v565, %v556
      %v602 = vpack.c.b16 %v566, %v557
      %v603 = vpack.c.b16 %v567, %v558
      %v604 = vpack.c.b16 %v568, %v559
      %v605 = vpack.c.b16 %v569, %v560
      %v606 = vpack.c.b16 %v570, %v561
      %v787 = vunpack.c.l.b16 %v315
      %v788 = vunpack.c.l.b16 %v316
      %v789 = vunpack.c.l.b16 %v317
      %v790 = vunpack.c.l.b16 %v318
      %v791 = vunpack.c.l.b16 %v319
      %v792 = vunpack.c.l.b16 %v320
      %v793 = vunpack.c.l.b16 %v321
      %v794 = vunpack.c.l.b16 %v322
      %v795 = vunpack.c.l.b16 %v323
      %v796 = vunpack.c.l.b16 %v324
      %v797 = vunpack.c.l.b16 %v325
      %v798 = vunpack.c.l.b16 %v326
      %v799 = vunpack.c.l.b16 %v327
      %v800 = vunpack.c.l.b16 %v328
      %v801 = vunpack.c.l.b16 %v329
      %v802 = vunpack.c.l.b16 %v330
      %v803 = vunpack.c.l.b16 %v331
      %v804 = vunpack.c.l.b16 %v332
      %v805 = vunpack.c.l.b16 %v333
      %v806 = vunpack.c.l.b16 %v334
      %v807 = vunpack.c.l.b16 %v335
      %v808 = vunpack.c.l.b16 %v336
      %v809 = vunpack.c.l.b16 %v337
      %v810 = vunpack.c.l.b16 %v338
      %v811 = vunpack.c.l.b16 %v339
      %v812 = vunpack.c.l.b16 %v340
      %v813 = vunpack.c.l.b16 %v341
      %v814 = vunpack.c.l.b16 %v342
      %v815 = vunpack.c.l.b16 %v343
      %v816 = vunpack.c.l.b16 %v344
      %v817 = vunpack.c.l.b16 %v345
      %v818 = vunpack.c.l.b16 %v346
      %v819 = vunpack.c.l.b16 %v347
      %v820 = vunpack.c.l.b16 %v348
      %v821 = vunpack.c.l.b16 %v349
      %v822 = vunpack.c.l.b16 %v350
      %v823 = vunpack.c.l.b16 %v351
      %v824 = vunpack.c.l.b16 %v352
      %v825 = vunpack.c.l.b16 %v353
      %v826 = vunpack.c.l.b16 %v354
      %v827 = vunpack.c.l.b16 %v355
      %v828 = vunpack.c.l.b16 %v356
      %v829 = vunpack.c.l.b16 %v357
      %v830 = vunpack.c.l.b16 %v358
      %v831 = vunpack.c.l.b16 %v359
      %v832 = vunpack.c.l.b16 %v360
      %v833 = vunpack.c.l.b16 %v361
      %v834 = vunpack.c.l.b16 %v362
      %v835 = vunpack.c.l.b16 %v363
      %v836 = vunpack.c.l.b16 %v364
      %v837 = vunpack.c.l.b16 %v365
      %v838 = vunpack.c.l.b16 %v366
      %v839 = vunpack.c.l.b16 %v367
      %v840 = vunpack.c.l.b16 %v368
      %v841 = vunpack.c.l.b16 %v369
      %v842 = vunpack.c.l.b16 %v370
      %v843 = vunpack.c.l.b16 %v371
      %v844 = vunpack.c.l.b16 %v372
      %v845 = vunpack.c.l.b16 %v373
      %v846 = vunpack.c.l.b16 %v374
      %v847 = vunpack.c.l.b16 %v375
      %v848 = vunpack.c.l.b16 %v376
      %v849 = vunpack.c.l.b16 %v377
      %v850 = vunpack.c.l.b16 %v378
      %v851 = vunpack.c.l.b16 %v379
      %v852 = vunpack.c.l.b16 %v380
      %v853 = vunpack.c.l.b16 %v381
      %v854 = vunpack.c.l.b16 %v382
      %v855 = vunpack.c.l.b16 %v383
      %v856 = vunpack.c.l.b16 %v384
      %v857 = vunpack.c.l.b16 %v385
      %v858 = vunpack.c.l.b16 %v386
      %v859 = vunpack.c.l.b16 %v387
      %v860 = vunpack.c.l.b16 %v388
      %v861 = vunpack.c.l.b16 %v389
      %v862 = vunpack.c.l.b16 %v390
      %v863 = vunpack.c.l.b16 %v391
      %v864 = vunpack.c.l.b16 %v392
      %v865 = vunpack.c.l.b16 %v393
      %v866 = vunpack.c.l.b16 %v394
      %v867 = vunpack.c.l.b16 %v395
      %v868 = vunpack.c.l.b16 %v396
      %v869 = vunpack.c.l.b16 %v397
      %v870 = vunpack.c.l.b16 %v398
      %v871 = vunpack.c.l.b16 %v399
      %v872 = vunpack.c.l.b16 %v400
      %v873 = vunpack.c.l.b16 %v401
      %v874 = vunpack.c.l.b16 %v402
      %v875 = vunpack.c.l.b16 %v403
      %v876 = vunpack.c.l.b16 %v404
      %v877 = vunpack.c.l.b16 %v405
      %v878 = vunpack.c.l.b16 %v406
      %v879 = vunpack.c.l.b16 %v407
      %v880 = vunpack.c.l.b16 %v408
      %v881 = vunpack.c.l.b16 %v409
      %v882 = vunpack.c.l.b16 %v410
      %v883 = vunpack.c.l.b16 %v411
      %v884 = vunpack.c.l.b16 %v412
      %v885 = vunpack.c.l.b16 %v413
      %v886 = vunpack.c.l.b16 %v414
      %v887 = vunpack.c.l.b16 %v415
      %v888 = vunpack.c.l.b16 %v416
      %v889 = vunpack.c.l.b16 %v417
      %v890 = vunpack.c.l.b16 %v418
      %v891 = vunpack.c.l.b16 %v419
      %v892 = vunpack.c.l.b16 %v420
      %v893 = vunpack.c.l.b16 %v421
      %v894 = vunpack.c.l.b16 %v422
      %v895 = vunpack.c.l.b16 %v423
      %v896 = vunpack.c.l.b16 %v424
      %v897 = vunpack.c.l.b16 %v425
      %v898 = vunpack.c.l.b16 %v426
      %v899 = vunpack.c.l.b16 %v427
      %v900 = vunpack.c.l.b16 %v428
      %v901 = vunpack.c.l.b16 %v429
      %v902 = vunpack.c.l.b16 %v430
      %v903 = vunpack.c.l.b16 %v431
      %v904 = vunpack.c.l.b16 %v432
      %v905 = vunpack.c.l.b16 %v433
      %v906 = vunpack.c.l.b16 %v434
      %v907 = vunpack.c.l.b16 %v435
      %v908 = vunpack.c.l.b16 %v436
      %v909 = vunpack.c.l.b16 %v437
      %v910 = vunpack.c.l.b16 %v438
      %v911 = vunpack.c.l.b16 %v439
      %v912 = vunpack.c.l.b16 %v440
      %v913 = vunpack.c.l.b16 %v441
      %v914 = vunpack.c.l.b16 %v442
      %v915 = vunpack.c.l.b16 %v443
      %v916 = vunpack.c.l.b16 %v444
      %v917 = vunpack.c.l.b16 %v445
      %v918 = vunpack.c.l.b16 %v446
      %v919 = vunpack.c.l.b16 %v447
      %v920 = vunpack.c.l.b16 %v448
      %v921 = vunpack.c.l.b16 %v449
      %v922 = vunpack.c.l.b16 %v450
      %v923 = vunpack.c.l.b16 %v451
      %v924 = vunpack.c.l.b16 %v452
      %v925 = vunpack.c.l.b16 %v453
      %v926 = vunpack.c.l.b16 %v454
      %v927 = vunpack.c.l.b16 %v455
      %v928 = vunpack.c.l.b16 %v456
      %v929 = vunpack.c.l.b16 %v457
      %v930 = vunpack.c.l.b16 %v458
      %v931 = vpack.c.b16 %v788, %v787
      %v932 = vpack.c.b16 %v790, %v789
      %v933 = vpack.c.b16 %v792, %v791
      %v934 = vpack.c.b16 %v794, %v793
      %v935 = vpack.c.b16 %v796, %v795
      %v936 = vpack.c.b16 %v798, %v797
      %v937 = vpack.c.b16 %v800, %v799
      %v938 = vpack.c.b16 %v802, %v801
      %v939 = vpack.c.b16 %v804, %v803
      %v940 = vpack.c.b16 %v806, %v805
      %v941 = vpack.c.b16 %v808, %v807
      %v942 = vpack.c.b16 %v810, %v809
      %v943 = vpack.c.b16 %v812, %v811
      %v944 = vpack.c.b16 %v814, %v813
      %v945 = vpack.c.b16 %v816, %v815
      %v946 = vpack.c.b16 %v818, %v817
      %v947 = vpack.c.b16 %v820, %v819
      %v948 = vpack.c.b16 %v822, %v821
      %v949 = vpack.c.b16 %v824, %v823
      %v950 = vpack.c.b16 %v826, %v825
      %v951 = vpack.c.b16 %v828, %v827
      %v952 = vpack.c.b16 %v830, %v829
      %v953 = vpack.c.b16 %v832, %v831
      %v954 = vpack.c.b16 %v834, %v833
      %v955 = vpack.c.b16 %v836, %v835
      %v956 = vpack.c.b16 %v838, %v837
      %v957 = vpack.c.b16 %v840, %v839
      %v958 = vpack.c.b16 %v842, %v841
      %v959 = vpack.c.b16 %v844, %v843
      %v960 = vpack.c.b16 %v846, %v845
      %v961 = vpack.c.b16 %v848, %v847
      %v962 = vpack.c.b16 %v850, %v849
      %v963 = vpack.c.b16 %v852, %v851
      %v964 = vpack.c.b16 %v854, %v853
      %v965 = vpack.c.b16 %v856, %v855
      %v966 = vpack.c.b16 %v858, %v857
      %v967 = vpack.c.b16 %v860, %v859
      %v968 = vpack.c.b16 %v862, %v861
      %v969 = vpack.c.b16 %v864, %v863
      %v970 = vpack.c.b16 %v866, %v865
      %v971 = vpack.c.b16 %v868, %v867
      %v972 = vpack.c.b16 %v870, %v869
      %v973 = vpack.c.b16 %v872, %v871
      %v974 = vpack.c.b16 %v874, %v873
      %v975 = vpack.c.b16 %v876, %v875
      %v976 = vpack.c.b16 %v878, %v877
      %v977 = vpack.c.b16 %v880, %v879
      %v978 = vpack.c.b16 %v882, %v881
      %v979 = vpack.c.b16 %v884, %v883
      %v980 = vpack.c.b16 %v886, %v885
      %v981 = vpack.c.b16 %v888, %v887
      %v982 = vpack.c.b16 %v890, %v889
      %v983 = vpack.c.b16 %v892, %v891
      %v984 = vpack.c.b16 %v894, %v893
      %v985 = vpack.c.b16 %v896, %v895
      %v986 = vpack.c.b16 %v898, %v897
      %v987 = vpack.c.b16 %v900, %v899
      %v988 = vpack.c.b16 %v902, %v901
      %v989 = vpack.c.b16 %v904, %v903
      %v990 = vpack.c.b16 %v906, %v905
      %v991 = vpack.c.b16 %v908, %v907
      %v992 = vpack.c.b16 %v910, %v909
      %v993 = vpack.c.b16 %v912, %v911
      %v994 = vpack.c.b16 %v914, %v913
      %v995 = vpack.c.b16 %v916, %v915
      %v996 = vpack.c.b16 %v918, %v917
      %v997 = vpack.c.b16 %v920, %v919
      %v998 = vpack.c.b16 %v922, %v921
      %v999 = vpack.c.b16 %v924, %v923
      %v1000 = vpack.c.b16 %v926, %v925
      %v1001 = vpack.c.b16 %v928, %v927
      %v1002 = vpack.c.b16 %v930, %v929
      %1075 = vmatprep.subr.bf16.mxu0 0
      %1076 = vmatpush1.bf16.msra.mxu0 %v931
      %1077 = vmatprep.subr.bf16.mxu0 0
      %1078 = vmatpush1.bf16.msra.mxu0 %v932
      %1079 = vmatprep.subr.bf16.mxu0 0
      %1080 = vmatpush1.bf16.msra.mxu0 %v933
      %1081 = vmatprep.subr.bf16.mxu0 0
      %1082 = vmatpush1.bf16.msra.mxu0 %v934
      %1083 = vmatprep.subr.bf16.mxu0 0
      %1084 = vmatpush1.bf16.msra.mxu0 %v935
      %1085 = vmatprep.subr.bf16.mxu0 0
      %1086 = vmatpush1.bf16.msra.mxu0 %v936
      %1087 = vmatprep.subr.bf16.mxu0 0
      %1088 = vmatpush1.bf16.msra.mxu0 %v937
      %1089 = vmatprep.subr.bf16.mxu0 0
      %1090 = vmatpush1.bf16.msra.mxu0 %v938
      %1091 = vmatprep.subr.bf16.mxu0 0
      %1092 = vmatpush1.bf16.msra.mxu0 %v939
      %1093 = vmatprep.subr.bf16.mxu0 0
      %1094 = vmatpush1.bf16.msra.mxu0 %v940
      %1095 = vmatprep.subr.bf16.mxu0 0
      %1096 = vmatpush1.bf16.msra.mxu0 %v941
      %1097 = vmatprep.subr.bf16.mxu0 0
      %1098 = vmatpush1.bf16.msra.mxu0 %v942
      %1099 = vmatprep.subr.bf16.mxu0 0
      %1100 = vmatpush1.bf16.msra.mxu0 %v943
      %1101 = vmatprep.subr.bf16.mxu0 0
      %1102 = vmatpush1.bf16.msra.mxu0 %v944
      %1103 = vmatprep.subr.bf16.mxu0 0
      %1104 = vmatpush1.bf16.msra.mxu0 %v945
      %1105 = vmatprep.subr.bf16.mxu0 0
      %1106 = vmatpush1.bf16.msra.mxu0 %v946
      %1107 = vmatprep.mubr.bf16.mxu0 %v572
      %1108 = vmatmul.mubr.bf16.gmra.mrb[0].mxu0 %v571
      %v1109 = vpop.f32.mrb[0].mxu0
      %v1110 = vadd.f32 0.0, %v1109
      %v1111 = vpop.f32.mrb[0].mxu0
      %v1112 = vpop.f32.mrb[0].mxu0
      %v1113 = vadd.f32 0.0, %v1112
      %v1114 = vpop.f32.mrb[0].mxu0
      %1115 = vmatprep.mubr.bf16.mxu0 %v581
      %1116 = vmatmul.mubr.bf16.gmra.mrb[0].mxu0 %v580
      %v1117 = vpop.f32.mrb[0].mxu0
      %v1118 = vadd.f32 0.0, %v1117
      %v1119 = vpop.f32.mrb[0].mxu0
      %v1120 = vpop.f32.mrb[0].mxu0
      %v1121 = vadd.f32 0.0, %v1120
      %v1122 = vpop.f32.mrb[0].mxu0
      %1123 = vmatprep.mubr.bf16.mxu0 %v590
      %1124 = vmatmul.mubr.bf16.gmra.mrb[0].mxu0 %v589
      %v1125 = vpop.f32.mrb[0].mxu0
      %v1126 = vadd.f32 0.0, %v1125
      %v1127 = vpop.f32.mrb[0].mxu0
      %v1128 = vpop.f32.mrb[0].mxu0
      %v1129 = vadd.f32 0.0, %v1128
      %v1130 = vpop.f32.mrb[0].mxu0
      %1131 = vmatprep.mubr.bf16.mxu0 %v599
      %1132 = vmatmul.mubr.bf16.gmra.mrb[0].mxu0 %v598
      %v1133 = vpop.f32.mrb[0].mxu0
      %v1134 = vadd.f32 0.0, %v1133
      %v1135 = vpop.f32.mrb[0].mxu0
      %v1136 = vpop.f32.mrb[0].mxu0
      %v1137 = vadd.f32 0.0, %v1136
      %v1138 = vpop.f32.mrb[0].mxu0
      %1139 = vdwg.mxu0
      %1140 = vmatprep.subr.bf16.mxu0 0
      %1141 = vmatpush1.bf16.msra.mxu0 %v947
      %1142 = vmatprep.subr.bf16.mxu0 0
      %1143 = vmatpush1.bf16.msra.mxu0 %v948
      %1144 = vmatprep.subr.bf16.mxu0 0
      %1145 = vmatpush1.bf16.msra.mxu0 %v949
      %1146 = vmatprep.subr.bf16.mxu0 0
      %1147 = vmatpush1.bf16.msra.mxu0 %v950
      %1148 = vmatprep.subr.bf16.mxu0 0
      %1149 = vmatpush1.bf16.msra.mxu0 %v951
      %1150 = vmatprep.subr.bf16.mxu0 0
      %1151 = vmatpush1.bf16.msra.mxu0 %v952
      %1152 = vmatprep.subr.bf16.mxu0 0
      %1153 = vmatpush1.bf16.msra.mxu0 %v953
      %1154 = vmatprep.subr.bf16.mxu0 0
      %1155 = vmatpush1.bf16.msra.mxu0 %v954
      %1156 = vmatprep.subr.bf16.mxu0 0
      %1157 = vmatpush1.bf16.msra.mxu0 %v955
      %1158 = vmatprep.subr.bf16.mxu0 0
      %1159 = vmatpush1.bf16.msra.mxu0 %v956
      %1160 = vmatprep.subr.bf16.mxu0 0
      %1161 = vmatpush1.bf16.msra.mxu0 %v957
      %1162 = vmatprep.subr.bf16.mxu0 0
      %1163 = vmatpush1.bf16.msra.mxu0 %v958
      %1164 = vmatprep.subr.bf16.mxu0 0
      %1165 = vmatpush1.bf16.msra.mxu0 %v959
      %1166 = vmatprep.subr.bf16.mxu0 0
      %1167 = vmatpush1.bf16.msra.mxu0 %v960
      %1168 = vmatprep.subr.bf16.mxu0 0
      %1169 = vmatpush1.bf16.msra.mxu0 %v961
      %1170 = vmatprep.subr.bf16.mxu0 0
      %1171 = vmatpush1.bf16.msra.mxu0 %v962
      %1172 = vmatprep.mubr.bf16.mxu0 %v574
      %1173 = vmatmul.mubr.bf16.gmra.mrb[0].mxu0 %v573
      %v1174 = vpop.f32.mrb[0].mxu0
      %v1175 = vadd.f32 %v1110, %v1174
      %v1176 = vpop.f32.mrb[0].mxu0
      %v1177 = vpop.f32.mrb[0].mxu0
      %v1178 = vadd.f32 %v1113, %v1177
      %v1179 = vpop.f32.mrb[0].mxu0
      %1180 = vmatprep.mubr.bf16.mxu0 %v583
      %1181 = vmatmul.mubr.bf16.gmra.mrb[0].mxu0 %v582
      %v1182 = vpop.f32.mrb[0].mxu0
      %v1183 = vadd.f32 %v1118, %v1182
      %v1184 = vpop.f32.mrb[0].mxu0
      %v1185 = vpop.f32.mrb[0].mxu0
      %v1186 = vadd.f32 %v1121, %v1185
      %v1187 = vpop.f32.mrb[0].mxu0
      %1188 = vmatprep.mubr.bf16.mxu0 %v592
      %1189 = vmatmul.mubr.bf16.gmra.mrb[0].mxu0 %v591
      %v1190 = vpop.f32.mrb[0].mxu0
      %v1191 = vadd.f32 %v1126, %v1190
      %v1192 = vpop.f32.mrb[0].mxu0
      %v1193 = vpop.f32.mrb[0].mxu0
      %v1194 = vadd.f32 %v1129, %v1193
      %v1195 = vpop.f32.mrb[0].mxu0
      %1196 = vmatprep.mubr.bf16.mxu0 %v601
      %1197 = vmatmul.mubr.bf16.gmra.mrb[0].mxu0 %v600
      %v1198 = vpop.f32.mrb[0].mxu0
      %v1199 = vadd.f32 %v1134, %v1198
      %v1200 = vpop.f32.mrb[0].mxu0
      %v1201 = vpop.f32.mrb[0].mxu0
      %v1202 = vadd.f32 %v1137, %v1201
      %v1203 = vpop.f32.mrb[0].mxu0
      %1204 = vdwg.mxu0
      %1205 = vmatprep.subr.bf16.mxu0 0
      %1206 = vmatpush1.bf16.msra.mxu0 %v963
      %1207 = vmatprep.subr.bf16.mxu0 0
      %1208 = vmatpush1.bf16.msra.mxu0 %v964
      %1209 = vmatprep.subr.bf16.mxu0 0
      %1210 = vmatpush1.bf16.msra.mxu0 %v965
      %1211 = vmatprep.subr.bf16.mxu0 0
      %1212 = vmatpush1.bf16.msra.mxu0 %v966
      %1213 = vmatprep.subr.bf16.mxu0 0
      %1214 = vmatpush1.bf16.msra.mxu0 %v967
      %1215 = vmatprep.subr.bf16.mxu0 0
      %1216 = vmatpush1.bf16.msra.mxu0 %v968
      %1217 = vmatprep.subr.bf16.mxu0 0
      %1218 = vmatpush1.bf16.msra.mxu0 %v969
      %1219 = vmatprep.subr.bf16.mxu0 0
      %1220 = vmatpush1.bf16.msra.mxu0 %v970
      %1221 = vmatprep.subr.bf16.mxu0 0
      %1222 = vmatpush1.bf16.msra.mxu0 %v971
      %1223 = vmatprep.subr.bf16.mxu0 0
      %1224 = vmatpush1.bf16.msra.mxu0 %v972
      %1225 = vmatprep.subr.bf16.mxu0 0
      %1226 = vmatpush1.bf16.msra.mxu0 %v973
      %1227 = vmatprep.subr.bf16.mxu0 0
      %1228 = vmatpush1.bf16.msra.mxu0 %v974
      %1229 = vmatprep.subr.bf16.mxu0 0
      %1230 = vmatpush1.bf16.msra.mxu0 %v975
      %1231 = vmatprep.subr.bf16.mxu0 0
      %1232 = vmatpush1.bf16.msra.mxu0 %v976
      %1233 = vmatprep.subr.bf16.mxu0 0
      %1234 = vmatpush1.bf16.msra.mxu0 %v977
      %1235 = vmatprep.subr.bf16.mxu0 0
      %1236 = vmatpush1.bf16.msra.mxu0 %v978
      %1237 = vmatprep.mubr.bf16.mxu0 %v576
      %1238 = vmatmul.mubr.bf16.gmra.mrb[0].mxu0 %v575
      %v1239 = vpop.f32.mrb[0].mxu0
      %v1240 = vadd.f32 %v1175, %v1239
      %v1241 = vpop.f32.mrb[0].mxu0
      %v1242 = vpop.f32.mrb[0].mxu0
      %v1243 = vadd.f32 %v1178, %v1242
      %v1244 = vpop.f32.mrb[0].mxu0
      %1245 = vmatprep.mubr.bf16.mxu0 %v585
      %1246 = vmatmul.mubr.bf16.gmra.mrb[0].mxu0 %v584
      %v1247 = vpop.f32.mrb[0].mxu0
      %v1248 = vadd.f32 %v1183, %v1247
      %v1249 = vpop.f32.mrb[0].mxu0
      %v1250 = vpop.f32.mrb[0].mxu0
      %v1251 = vadd.f32 %v1186, %v1250
      %v1252 = vpop.f32.mrb[0].mxu0
      %1253 = vmatprep.mubr.bf16.mxu0 %v594
      %1254 = vmatmul.mubr.bf16.gmra.mrb[0].mxu0 %v593
      %v1255 = vpop.f32.mrb[0].mxu0
      %v1256 = vadd.f32 %v1191, %v1255
      %v1257 = vpop.f32.mrb[0].mxu0
      %v1258 = vpop.f32.mrb[0].mxu0
      %v1259 = vadd.f32 %v1194, %v1258
      %v1260 = vpop.f32.mrb[0].mxu0
      %1261 = vmatprep.mubr.bf16.mxu0 %v603
      %1262 = vmatmul.mubr.bf16.gmra.mrb[0].mxu0 %v602
      %v1263 = vpop.f32.mrb[0].mxu0
      %v1264 = vadd.f32 %v1199, %v1263
      %v1265 = vpop.f32.mrb[0].mxu0
      %v1266 = vpop.f32.mrb[0].mxu0
      %v1267 = vadd.f32 %v1202, %v1266
      %v1268 = vpop.f32.mrb[0].mxu0
      %1269 = vdwg.mxu0
      %1270 = vmatprep.subr.bf16.mxu0 0
      %1271 = vmatpush1.bf16.msra.mxu0 %v979
      %1272 = vmatprep.subr.bf16.mxu0 0
      %1273 = vmatpush1.bf16.msra.mxu0 %v980
      %1274 = vmatprep.subr.bf16.mxu0 0
      %1275 = vmatpush1.bf16.msra.mxu0 %v981
      %1276 = vmatprep.subr.bf16.mxu0 0
      %1277 = vmatpush1.bf16.msra.mxu0 %v982
      %1278 = vmatprep.subr.bf16.mxu0 0
      %1279 = vmatpush1.bf16.msra.mxu0 %v983
      %1280 = vmatprep.subr.bf16.mxu0 0
      %1281 = vmatpush1.bf16.msra.mxu0 %v984
      %1282 = vmatprep.subr.bf16.mxu0 0
      %1283 = vmatpush1.bf16.msra.mxu0 %v985
      %1284 = vmatprep.subr.bf16.mxu0 0
      %1285 = vmatpush1.bf16.msra.mxu0 %v986
      %1286 = vmatprep.subr.bf16.mxu0 0
      %1287 = vmatpush1.bf16.msra.mxu0 %v987
      %1288 = vmatprep.subr.bf16.mxu0 0
      %1289 = vmatpush1.bf16.msra.mxu0 %v988
      %1290 = vmatprep.subr.bf16.mxu0 0
      %1291 = vmatpush1.bf16.msra.mxu0 %v989
      %1292 = vmatprep.subr.bf16.mxu0 0
      %1293 = vmatpush1.bf16.msra.mxu0 %v990
      %1294 = vmatprep.subr.bf16.mxu0 0
      %1295 = vmatpush1.bf16.msra.mxu0 %v991
      %1296 = vmatprep.subr.bf16.mxu0 0
      %1297 = vmatpush1.bf16.msra.mxu0 %v992
      %1298 = vmatprep.subr.bf16.mxu0 0
      %1299 = vmatpush1.bf16.msra.mxu0 %v993
      %1300 = vmatprep.subr.bf16.mxu0 0
      %1301 = vmatpush1.bf16.msra.mxu0 %v994
      %1302 = vmatprep.mubr.bf16.mxu0 %v578
      %1303 = vmatmul.mubr.bf16.gmra.mrb[0].mxu0 %v577
      %v1304 = vpop.f32.mrb[0].mxu0
      %v1305 = vadd.f32 %v1240, %v1304
      %v1306 = vpop.f32.mrb[0].mxu0
      %v1307 = vpop.f32.mrb[0].mxu0
      %v1308 = vadd.f32 %v1243, %v1307
      %v1309 = vpop.f32.mrb[0].mxu0
      %1310 = vmatprep.mubr.bf16.mxu0 %v587
      %1311 = vmatmul.mubr.bf16.gmra.mrb[0].mxu0 %v586
      %v1312 = vpop.f32.mrb[0].mxu0
      %v1313 = vadd.f32 %v1248, %v1312
      %v1314 = vpop.f32.mrb[0].mxu0
      %v1315 = vpop.f32.mrb[0].mxu0
      %v1316 = vadd.f32 %v1251, %v1315
      %v1317 = vpop.f32.mrb[0].mxu0
      %1318 = vmatprep.mubr.bf16.mxu0 %v596
      %1319 = vmatmul.mubr.bf16.gmra.mrb[0].mxu0 %v595
      %v1320 = vpop.f32.mrb[0].mxu0
      %v1321 = vadd.f32 %v1256, %v1320
      %v1322 = vpop.f32.mrb[0].mxu0
      %v1323 = vpop.f32.mrb[0].mxu0
      %v1324 = vadd.f32 %v1259, %v1323
      %v1325 = vpop.f32.mrb[0].mxu0
      %1326 = vmatprep.mubr.bf16.mxu0 %v605
      %1327 = vmatmul.mubr.bf16.gmra.mrb[0].mxu0 %v604
      %v1328 = vpop.f32.mrb[0].mxu0
      %v1329 = vadd.f32 %v1264, %v1328
      %v1330 = vpop.f32.mrb[0].mxu0
      %v1331 = vpop.f32.mrb[0].mxu0
      %v1332 = vadd.f32 %v1267, %v1331
      %v1333 = vpop.f32.mrb[0].mxu0
      %1334 = vdwg.mxu0
      %1335 = vmatprep.subr.bf16.mxu0 0
      %1336 = vmatpush1.bf16.msra.mxu0 %v995
      %1337 = vmatprep.subr.bf16.mxu0 0
      %1338 = vmatpush1.bf16.msra.mxu0 %v996
      %1339 = vmatprep.subr.bf16.mxu0 0
      %1340 = vmatpush1.bf16.msra.mxu0 %v997
      %1341 = vmatprep.subr.bf16.mxu0 0
      %1342 = vmatpush1.bf16.msra.mxu0 %v998
      %1343 = vmatprep.subr.bf16.mxu0 0
      %1344 = vmatpush1.bf16.msra.mxu0 %v999
      %1345 = vmatprep.subr.bf16.mxu0 0
      %1346 = vmatpush1.bf16.msra.mxu0 %v1000
      %1347 = vmatprep.subr.bf16.mxu0 0
      %1348 = vmatpush1.bf16.msra.mxu0 %v1001
      %1349 = vmatprep.subr.bf16.mxu0 0
      %1350 = vmatpush1.bf16.msra.mxu0 %v1002
      %1351 = vmatprep.subr.bf16.mxu0 0
      %1352 = vmatpush1.bf16.msra.mxu0 0
      %1353 = vmatprep.subr.bf16.mxu0 0
      %1354 = vmatpush1.bf16.msra.mxu0 0
      %1355 = vmatprep.subr.bf16.mxu0 0
      %1356 = vmatpush1.bf16.msra.mxu0 0
      %1357 = vmatprep.subr.bf16.mxu0 0
      %1358 = vmatpush1.bf16.msra.mxu0 0
      %1359 = vmatprep.subr.bf16.mxu0 0
      %1360 = vmatpush1.bf16.msra.mxu0 0
      %1361 = vmatprep.subr.bf16.mxu0 0
      %1362 = vmatpush1.bf16.msra.mxu0 0
      %1363 = vmatprep.subr.bf16.mxu0 0
      %1364 = vmatpush1.bf16.msra.mxu0 0
      %1365 = vmatprep.subr.bf16.mxu0 0
      %1366 = vmatpush1.bf16.msra.mxu0 0
      %1367 = vmatprep.mubr.bf16.mxu0 0
      %1368 = vmatmul.mubr.bf16.gmra.mrb[0].mxu0 %v579
      %v1369 = vpop.f32.mrb[0].mxu0
      %v1370 = vadd.f32 %v1305, %v1369
      %v1371 = vpop.f32.mrb[0].mxu0
      %v1372 = vpop.f32.mrb[0].mxu0
      %v1373 = vadd.f32 %v1308, %v1372
      %v1374 = vpop.f32.mrb[0].mxu0
      %1375 = vmatprep.mubr.bf16.mxu0 0
      %1376 = vmatmul.mubr.bf16.gmra.mrb[0].mxu0 %v588
      %v1377 = vpop.f32.mrb[0].mxu0
      %v1378 = vadd.f32 %v1313, %v1377
      %v1379 = vpop.f32.mrb[0].mxu0
      %v1380 = vpop.f32.mrb[0].mxu0
      %v1381 = vadd.f32 %v1316, %v1380
      %v1382 = vpop.f32.mrb[0].mxu0
      %1383 = vmatprep.mubr.bf16.mxu0 0
      %1384 = vmatmul.mubr.bf16.gmra.mrb[0].mxu0 %v597
      %v1385 = vpop.f32.mrb[0].mxu0
      %v1386 = vadd.f32 %v1321, %v1385
      %v1387 = vpop.f32.mrb[0].mxu0
      %v1388 = vpop.f32.mrb[0].mxu0
      %v1389 = vadd.f32 %v1324, %v1388
      %v1390 = vpop.f32.mrb[0].mxu0
      %1391 = vmatprep.mubr.bf16.mxu0 0
      %1392 = vmatmul.mubr.bf16.gmra.mrb[0].mxu0 %v606
      %v1393 = vpop.f32.mrb[0].mxu0
      %v1394 = vadd.f32 %v1329, %v1393
      %v1395 = vpop.f32.mrb[0].mxu0
      %v1396 = vpop.f32.mrb[0].mxu0
      %v1397 = vadd.f32 %v1332, %v1396
      %v1398 = vpop.f32.mrb[0].mxu0
      %1399 = vdwg.mxu0
      %v1400 = vadd.f32 %v267, %v1370
      %v1401 = vadd.f32 %v268, %v1373
      %v1402 = vadd.f32 %v269, %v1378
      %v1403 = vadd.f32 %v270, %v1381
      %v1404 = vadd.f32 %v271, %v1386
      %v1405 = vadd.f32 %v272, %v1389
      %v1406 = vadd.f32 %v273, %v1394
      %v1407 = vadd.f32 %v274, %v1397
      %1408 = vst [vmem:[#allocation2] sm:$0xff] %v1400
      %1409 = vst [vmem:[#allocation2 + $0x8] sm:$0xff] %v1401
      %1410 = vst [vmem:[#allocation2 + $0x10] sm:$0xff] %v1402
      %1411 = vst [vmem:[#allocation2 + $0x18] sm:$0xff] %v1403
      %1412 = vst [vmem:[#allocation2 + $0x20] sm:$0xff] %v1404
      %1413 = vst [vmem:[#allocation2 + $0x28] sm:$0xff] %v1405
      %1414 = vst [vmem:[#allocation2 + $0x30] sm:$0xff] %v1406
      %1415 = vst [vmem:[#allocation2 + $0x38] sm:$0xff] %v1407
      // Predicated region
      $region41: #{network_block_apply.6} parent=35 // pred_check
        %p1416 = pneg %p255
      $region42: #{network_block_apply.6} parent=35 // pred_check_branch
        %1418 = sbr.rel (%p1416) target = $region44
      $region43: #{network_block_apply.6} parent=35 // pred_region
        %v1419 = vld [vmem:[#allocation2] sm:$0xff]
        %v1420 = vld [vmem:[#allocation2 + $0x8] sm:$0xff]
        %v1421 = vld [vmem:[#allocation2 + $0x10] sm:$0xff]
        %v1422 = vld [vmem:[#allocation2 + $0x18] sm:$0xff]
        %v1423 = vld [vmem:[#allocation2 + $0x20] sm:$0xff]
        %v1424 = vld [vmem:[#allocation2 + $0x28] sm:$0xff]
        %v1425 = vld [vmem:[#allocation2 + $0x30] sm:$0xff]
        %v1426 = vld [vmem:[#allocation2 + $0x38] sm:$0xff]
        %v1427 = vld [vmem:[%s2] sm:$0x1]
        %v1429 = vlaneseq
        %v1430 = vshrl.u32 %v1429, 7
        %v1431 = vsub.s32 0, %v1430
        %v1432 = vrot.slane %v1427, %v1431
        %v1434 = vmul.f32 %v1419, %v1432
        %v1435 = vmul.f32 %v1420, %v1432
        %v1436 = vmul.f32 %v1421, %v1432
        %v1437 = vmul.f32 %v1422, %v1432
        %v1438 = vmul.f32 %v1423, %v1432
        %v1439 = vmul.f32 %v1424, %v1432
        %v1440 = vmul.f32 %v1425, %v1432
        %v1441 = vmul.f32 %v1426, %v1432
        %v1442 = vld [vmem:[%s3] sm:$0x1]
        %v1444 = vlaneseq
        %v1445 = vshrl.u32 %v1444, 7
        %v1446 = vsub.s32 0, %v1445
        %v1447 = vrot.slane %v1442, %v1446
        %v1449 = vadd.f32 %v1434, %v1447
        %v1450 = vadd.f32 %v1435, %v1447
        %v1451 = vadd.f32 %v1436, %v1447
        %v1452 = vadd.f32 %v1437, %v1447
        %v1453 = vadd.f32 %v1438, %v1447
        %v1454 = vadd.f32 %v1439, %v1447
        %v1455 = vadd.f32 %v1440, %v1447
        %v1456 = vadd.f32 %v1441, %v1447
        %v1457 = vmax.f32 %v1449, 0.0
        %v1458 = vmax.f32 %v1450, 0.0
        %v1459 = vmax.f32 %v1451, 0.0
        %v1460 = vmax.f32 %v1452, 0.0
        %v1461 = vmax.f32 %v1453, 0.0
        %v1462 = vmax.f32 %v1454, 0.0
        %v1463 = vmax.f32 %v1455, 0.0
        %v1464 = vmax.f32 %v1456, 0.0
        %v1465 = vpack.c.bf16 %v1458, %v1457
        %v1466 = vpack.c.bf16 %v1460, %v1459
        %v1467 = vpack.c.bf16 %v1462, %v1461
        %v1468 = vpack.c.bf16 %v1464, %v1463
        %v1473 = vunpack.c.l.b16 %v1465
        %v1474 = vunpack.c.h.b16 %v1465
        %v1475 = vunpack.c.l.b16 %v1466
        %v1476 = vunpack.c.h.b16 %v1466
        %v1477 = vunpack.c.l.b16 %v1467
        %v1478 = vunpack.c.h.b16 %v1467
        %v1479 = vunpack.c.l.b16 %v1468
        %v1480 = vunpack.c.h.b16 %v1468
        %v1481 = vpack.c.b16 %v1473, %v1473
        %v1482 = vpack.c.b16 %v1474, %v1474
        %v1483 = vpack.c.b16 %v1475, %v1475
        %v1484 = vpack.c.b16 %v1476, %v1476
        %v1485 = vpack.c.b16 %v1477, %v1477
        %v1486 = vpack.c.b16 %v1478, %v1478
        %v1487 = vpack.c.b16 %v1479, %v1479
        %v1488 = vpack.c.b16 %v1480, %v1480
        %1497 = vst [vmem:[%s252] sm:$0xf] %v1481
        %1498 = vst [vmem:[%s252 + $0x4] sm:$0xf] %v1482
        %1499 = vst [vmem:[%s252 + $0x8] sm:$0xf] %v1483
        %1500 = vst [vmem:[%s252 + $0xc] sm:$0xf] %v1484
        %1501 = vst [vmem:[%s252 + $0x10] sm:$0xf] %v1485
        %1502 = vst [vmem:[%s252 + $0x14] sm:$0xf] %v1486
        %1503 = vst [vmem:[%s252 + $0x18] sm:$0xf] %v1487
        %1504 = vst [vmem:[%s252 + $0x1c] sm:$0xf] %v1488
      $region44: #{network_block_apply.6} parent=35 // pred_fallthru
        _
      %s1505 = smul.u32 8, %s19
      %p1506 = scmp.lt.s32.totalorder %s1505, 15
      %s1507 = scalar_select %p1506, %s1505, 15
      %s1508 = smul.addr %s1507, 4
      %s1509 = scalar_lea.vmem %s4, %s1508
      // Predicated region
      $region45: #{network_block_apply.6} parent=35 // pred_check
        %p1510 = pneg %p141
      $region46: #{network_block_apply.6} parent=35 // pred_check_branch
        %1512 = sbr.rel (%p1510) target = $region48
      $region47: #{network_block_apply.6} parent=35 // pred_region
        %s1513 = smul.u32 8, %s19
      $region48: #{network_block_apply.6} parent=35 // pred_fallthru
        _
    $region36: #{network_block_apply.6} parent=5 // pred_fallthru
      _
    %p1514 = scmp.le.s32.totalorder 2, %s10
    // Predicated region
    $region49: #{network_block_apply.6} parent=5 // pred_check
      %p1515 = pneg %p1514
    $region50: #{network_block_apply.6} parent=5 // pred_check_branch
      %1517 = sbr.rel (%p1515) target = $region52
    $region51: #{network_block_apply.6} parent=5 // pred_region
      %s1518 = ssub.s32 %s10, 2
      // Predicated region
      $region53: #{network_block_apply.6} parent=51 // pred_check
        %p1519 = pneg %p147
      $region54: #{network_block_apply.6} parent=51 // pred_check_branch
        %1521 = sbr.rel (%p1519) target = $region56
      $region55: #{network_block_apply.6} parent=51 // pred_region
        %s1522 = smul.u32 8, %s21
        %p1523 = scmp.lt.s32.totalorder %s1522, 15
        %s1524 = scalar_select %p1523, %s1522, 15
        %s1525 = smul.addr %s1524, 4
        %s1526 = scalar_lea.vmem %s4, %s1525
      $region56: #{network_block_apply.6} parent=51 // pred_fallthru
        _
    $region52: #{network_block_apply.6} parent=5 // pred_fallthru
      _
  $region6: #{network_block_apply.6} parent=0 // loop_footer
    %s14 = sadd.s32 1, %s10
  $region7: #{network_block_apply.6} parent=0 // loop_footer_branch
    %9 = sbr.rel target = $region3
  $region8: #{network_block_apply.6} parent=0 // loop_exit
    _

</llo_original>
